<compile_context>
chip_gen: v5e
topology: v5e:2x2
jax: 0.10.0
libtpu: 0.0.40
codegen_flags: <defaults>
</compile_context>

<pallas_src>
import functools

import jax
import jax.numpy as jnp
from jax.experimental import pallas as pl
from jax.experimental.pallas import tpu as pltpu

PERSON_IDX = 15            # sem_class_to_idx['person']
NUM_SEM_CLASSES = 21
FEAT_DIM = 2048
NUM_CLASSES = 62           # classifier head (unused in eval forward, kept for fidelity)

# composed conv geometry:  (k3 s2 p1) ∘ (k7 s2 p3)  ->  k11 s4 p5, Cin=4
COMP_K = 11
COMP_S = 4
COMP_P = 5
K_RAW = COMP_K * COMP_K * 4                 # 484
KP = ((K_RAW + 127) // 128) * 128           # 512 (lane-aligned contraction dim)


# ----------------------------------------------------------------------------
# Generation-aware knobs (static, resolved at trace time)
# ----------------------------------------------------------------------------
def _device_kind():
    try:
        return jax.devices()[0].device_kind.lower()
    except Exception:
        return ""

_KIND = _device_kind()
_HAS_BF16_EUP = ("v6" in _KIND) or ("v7" in _KIND) or ("7x" in _KIND)
_BIG_VMEM = ("v5" in _KIND) or ("v6" in _KIND)        # 128 MiB VMEM parts; v7x = 64 MiB
_EXP_DTYPE = jnp.bfloat16 if _HAS_BF16_EUP else jnp.float32
_CONV_MAX_ROWS = 1024 if _BIG_VMEM else 512
_CONV_VMEM_LIMIT = (64 if _BIG_VMEM else 32) * 1024 * 1024


# ----------------------------------------------------------------------------
# Pallas kernels
# ----------------------------------------------------------------------------
def _person_mask_kernel(exp_dtype, x_ref, w_ref, b_ref, m_ref):
    """Per-pixel 21-class softmax -> 'person' probability (lane-dense).

    Single accumulating pass: softmax[person] = 1 / sum_c exp(l_c - l_person);
    each class logit is rebuilt from 3 SMEM-scalar broadcast-MACs, so only a
    handful of tile-sized temporaries are live (no spill traffic).

    x_ref: (3, TR, 128) VMEM f32   input channel planes, pixels flattened
    w_ref: (3, 21)      SMEM f32   segmentation-head weight (scalar reads)
    b_ref: (21,)        SMEM f32   segmentation-head bias
    m_ref: (TR, 128)    VMEM bf16  person-mask output
    """
    r = x_ref[0]
    g = x_ref[1]
    b = x_ref[2]
    l_person = (w_ref[0, PERSON_IDX] * r + w_ref[1, PERSON_IDX] * g
                + w_ref[2, PERSON_IDX] * b + b_ref[PERSON_IDX])
    s = jnp.zeros_like(l_person)
    for c in range(NUM_SEM_CLASSES):
        d = (w_ref[0, c] * r + w_ref[1, c] * g + w_ref[2, c] * b
             + b_ref[c]) - l_person
        d = jnp.minimum(d, 80.0)          # overflow guard; exact elsewhere
        # bf16 exp on v6e/v7x (bf16 EUP), f32 accumulation.
        s = s + jnp.exp(d.astype(exp_dtype)).astype(jnp.float32)
    m_ref[...] = (1.0 / s).astype(m_ref.dtype)


def _fused_conv_pool_kernel(wo, inv_hw, p_ref, w_ref, f_ref, lf_ref):
    """Composed conv (im2col matmul, bf16 -> f32) + ReLU + pooling epilogues.

    p_ref : (TM, KP)          bf16  patch tile (one row tile of one image b)
    w_ref : (KP, 2048)        bf16  composed conv weight (replicated block)
    f_ref : (1, 1, 2048)      f32   global-avg-pool accumulator (resident
                                    across the t axis; finalized on last t)
    lf_ref: (1, H_BLK, 2048)  f32   horizontal max pool + channel-wise L2 norm
    """
    t = pl.program_id(1)

    acc = jnp.dot(p_ref[...], w_ref[...], preferred_element_type=jnp.float32)
    feat = jnp.maximum(acc, 0.0)                       # (TM, 2048) f32, VMEM only

    # Horizontal max pool: rows within the tile are (ho, wo) row-major.
    # (VPU/XLU epilogue hides under MXU slack at these tile sizes.)
    tm, c = feat.shape
    rows = feat.reshape(tm // wo, wo, c)
    lf = jnp.max(rows, axis=1)                         # (H_BLK, 2048)
    sq = jnp.sum(lf * lf, axis=-1, keepdims=True)      # clamp(sum(lf^2), 1e-12)
    lf_ref[0] = lf * jax.lax.rsqrt(jnp.maximum(sq, 1e-12))

    # Global average pool, accumulated in the resident output block over t.
    @pl.when(t == 0)
    def _():
        f_ref[...] = jnp.zeros_like(f_ref)

    f_ref[0] += jnp.sum(feat, axis=0, keepdims=True)

    @pl.when(t == pl.num_programs(1) - 1)
    def _():
        f_ref[...] *= inv_hw


# ----------------------------------------------------------------------------
# Mask wrapper (lane-dense tiling over flattened pixels)
# ----------------------------------------------------------------------------
def _person_mask(x_nchw, seg_w, seg_b):
    """Person-probability mask, returned as (B, H, W, 1) bf16."""
    B, _, H, W = x_nchw.shape
    n = B * H * W
    xs = jnp.transpose(x_nchw, (1, 0, 2, 3)).reshape(3, n)

    rows = -(-n // 128)
    row_tile = 512                      # 512-1024 rows keeps near HBM roofline
    if rows <= row_tile:
        rows_pad = -(-rows // 8) * 8    # align sublanes; single grid step
        tr = rows_pad
    else:
        tr = row_tile                   # multiple of 8
        rows_pad = -(-rows // tr) * tr

    xs = jnp.pad(xs, ((0, 0), (0, rows_pad * 128 - n)))
    xs = xs.reshape(3, rows_pad, 128)

    mask = pl.pallas_call(
        functools.partial(_person_mask_kernel, _EXP_DTYPE),
        out_shape=jax.ShapeDtypeStruct((rows_pad, 128), jnp.bfloat16),
        grid=(rows_pad // tr,),
        in_specs=[
            pl.BlockSpec((3, tr, 128), lambda i: (0, i, 0)),
            pl.BlockSpec(memory_space=pltpu.MemorySpace.SMEM),
            pl.BlockSpec(memory_space=pltpu.MemorySpace.SMEM),
        ],
        out_specs=pl.BlockSpec((tr, 128), lambda i: (i, 0)),
        compiler_params=pltpu.CompilerParams(
            dimension_semantics=("parallel",)),
    )(xs, seg_w, seg_b)
    return mask.reshape(-1)[:n].reshape(B, H, W, 1)


# ----------------------------------------------------------------------------
# Glue: im2col, weight reshuffle / composition, tile picker (plain JAX)
# ----------------------------------------------------------------------------
def _extract_patches(x, kh, kw, stride, pad):
    """x: (B, H, W, C) NHWC -> (B*Ho*Wo, kh*kw*C) with column order (ki, kj, c)."""
    B, H, W, C = x.shape
    xp = jnp.pad(x, ((0, 0), (pad, pad), (pad, pad), (0, 0)))
    Ho = (H + 2 * pad - kh) // stride + 1
    Wo = (W + 2 * pad - kw) // stride + 1
    cols = []
    for i in range(kh):
        for j in range(kw):
            cols.append(xp[:, i:i + Ho * stride:stride,
                           j:j + Wo * stride:stride, :])
    patches = jnp.concatenate(cols, axis=-1)           # (B, Ho, Wo, kh*kw*C)
    return patches.reshape(B * Ho * Wo, kh * kw * C), (B, Ho, Wo)


def _conv_weight_to_matmul(w_oihw):
    """(Cout, Cin, kh, kw) -> (kh*kw*Cin, Cout), matching _extract_patches."""
    cout, cin, kh, kw = w_oihw.shape
    return jnp.transpose(w_oihw, (2, 3, 1, 0)).reshape(kh * kw * cin, cout)


def _compose_conv_weights(merge_w, base_w):
    """Compose conv(4->3, k7 s2 p3) with conv(3->2048, k3 s2 p1) into a single
    conv(4->2048, k11 s4 p5).  Exact in the interior; border-pixel padding
    semantics differ slightly from two sequential zero-padded convs (both convs
    are synthetic trunk stand-ins, see TODOs in init_params)."""
    cout, _, k2, _ = base_w.shape
    _, cin, k1, _ = merge_w.shape
    keff = k1 + (k2 - 1) * 2
    w = jnp.zeros((cout, cin, keff, keff), jnp.float32)
    for mi in range(k2):
        for mj in range(k2):
            contrib = jnp.einsum("oc,cixy->oixy", base_w[:, :, mi, mj], merge_w)
            w = w.at[:, :, 2 * mi:2 * mi + k1, 2 * mj:2 * mj + k1].add(contrib)
    return w


def _pick_h_block(ho, wo, max_rows):
    """How many output rows (ho) one matmul tile covers.

    Constraints: h | ho, h*wo (patch-matrix row tile) is a multiple of 8, and
    h is a multiple of 8 or equals ho (so the lf output block is (8,128)-legal).
    Prefer the largest tile with h*wo <= max_rows; the fallback is clamped so
    an awkward Ho/Wo cannot silently blow past VMEM (v7x: 64 MiB physical)."""
    cands = [h for h in range(1, ho + 1)
             if ho % h == 0 and (h * wo) % 8 == 0 and (h % 8 == 0 or h == ho)]
    assert cands, f"no legal row tiling for Ho={ho}, Wo={wo}"
    fitting = [h for h in cands if h * wo <= max_rows]
    if fitting:
        return max(fitting)
    h = min(cands)
    assert h * wo <= 2048, (
        f"conv row tile {h}*{wo}={h * wo} rows exceeds the VMEM-safe bound; "
        f"no tiling <= {max_rows} rows exists for Ho={ho}, Wo={wo}")
    return h


# ----------------------------------------------------------------------------
# Parameters (deterministic synthetic init; no checkpoint loading)
# ----------------------------------------------------------------------------
def init_params(key):
    ks = jax.random.split(key, 5)
    # TODO(synk): full FCN-ResNet50 segmentation backbone not replicated;
    # stand-in is a 1x1 conv (3 -> 21 classes) at input resolution.
    seg_w = jax.random.normal(ks[0], (3, NUM_SEM_CLASSES), jnp.float32) * 0.1
    seg_b = jax.random.normal(ks[1], (NUM_SEM_CLASSES,), jnp.float32) * 0.1
    # merge_conv: Conv2d(4, 3, kernel_size=7, stride=2, padding=3, bias=False)
    merge_w = jax.random.normal(ks[2], (3, 4, 7, 7), jnp.float32) * 0.05
    # TODO(synk): torchvision ResNet-50 trunk (children[:-2]) not replicated;
    # stand-in is a single strided conv (3 -> 2048, k3 s2 p1) + ReLU.
    base_w = jax.random.normal(ks[3], (FEAT_DIM, 3, 3, 3), jnp.float32) * 0.05
    # merge_conv and the trunk stand-in are linear back-to-back -> compose them
    # offline into one k11 s4 p5 conv (4 -> 2048); pad K to 512, cast to bf16.
    comp_w = _compose_conv_weights(merge_w, base_w)          # (2048, 4, 11, 11)
    w_mat = _conv_weight_to_matmul(comp_w)                   # (484, 2048)
    w_mat = jnp.pad(w_mat, ((0, KP - K_RAW), (0, 0))).astype(jnp.bfloat16)
    # classifier Linear(2048, 62): present in __init__ but unused in forward.
    cls_w = jax.random.normal(ks[4], (NUM_CLASSES, FEAT_DIM), jnp.float32) * 0.02
    return {"seg_w": seg_w, "seg_b": seg_b, "conv_w": w_mat, "cls_w": cls_w}


# ----------------------------------------------------------------------------
# Forward (inference mode: training=False, aligned=False)
# ----------------------------------------------------------------------------
def mask_aligned_reid_forward(params, x_nchw):
    B, _, H, W = x_nchw.shape
    x_nchw = x_nchw.astype(jnp.float32)

    # 1) segmentation -> softmax over 21 classes -> person mask (bf16, lane-dense).
    person_mask = _person_mask(x_nchw, params["seg_w"], params["seg_b"])

    # 2) concat(x, mask) and im2col for the composed conv, bf16 end-to-end
    #    (halves the dominant HBM stream of the patch expansion).
    xh = jnp.transpose(x_nchw, (0, 2, 3, 1)).astype(jnp.bfloat16)   # NHWC
    x4 = jnp.concatenate([xh, person_mask], axis=-1)                # (B,H,W,4) bf16
    # TODO(synk): form patches inside the conv kernel (halo row tile + shifted
    # pl.ds reads into a VMEM scratch) to remove the ~30x im2col HBM expansion.
    patches, (_, Ho, Wo) = _extract_patches(x4, COMP_K, COMP_K, COMP_S, COMP_P)
    patches = jnp.pad(patches, ((0, 0), (0, KP - K_RAW)))           # bf16 (N, 512)

    # 3) composed conv + ReLU + both pooling epilogues in one fused kernel;
    #    feat (N, 2048) stays in VMEM and never round-trips HBM.
    h_blk = _pick_h_block(Ho, Wo, max_rows=_CONV_MAX_ROWS)
    tm = h_blk * Wo
    tiles = Ho // h_blk
    # NOTE: with B >= 2 the leading "parallel" axis already feeds both v7x
    # TensorCores; for B == 1 one would split Ho into 2 parallel chunks.
    f_out, lf_out = pl.pallas_call(
        functools.partial(_fused_conv_pool_kernel, Wo, 1.0 / float(Ho * Wo)),
        out_shape=(
            jax.ShapeDtypeStruct((B, 1, FEAT_DIM), jnp.float32),
            jax.ShapeDtypeStruct((B, Ho, FEAT_DIM), jnp.float32),
        ),
        grid=(B, tiles),
        in_specs=[
            pl.BlockSpec((tm, KP), lambda b, t: (b * tiles + t, 0)),
            pl.BlockSpec((KP, FEAT_DIM), lambda b, t: (0, 0)),
        ],
        out_specs=(
            pl.BlockSpec((1, 1, FEAT_DIM), lambda b, t: (b, 0, 0)),
            pl.BlockSpec((1, h_blk, FEAT_DIM), lambda b, t: (b, t, 0)),
        ),
        compiler_params=pltpu.CompilerParams(
            dimension_semantics=("parallel", "arbitrary"),
            vmem_limit_bytes=_CONV_VMEM_LIMIT),
    )(patches, params["conv_w"])

    # f: F.avg_pool2d + view -> (1, B, 2048)   (what PyTorch returns)
    f = f_out.reshape(1, B, FEAT_DIM)
    # lf: HorizontalMaxPool + channel L2 norm, (B, H', 2048); computed (as the
    # PyTorch eval path does) but not returned by the PyTorch module.
    lf = lf_out
    return f, lf


if __name__ == "__main__":
    key = jax.random.PRNGKey(0)
    k_x, k_p = jax.random.split(key)
    x = jax.random.normal(k_x, (2, 3, 16, 16), jnp.float32)   # NCHW like PyTorch
    params = init_params(k_p)

    fwd = jax.jit(mask_aligned_reid_forward)
    f, lf = fwd(params, x)
    jax.block_until_ready((f, lf))

    assert f.shape == (1, 2, FEAT_DIM), f.shape
    assert lf.shape == (2, 4, FEAT_DIM), lf.shape
    assert bool(jnp.all(jnp.isfinite(f))) and bool(jnp.all(jnp.isfinite(lf)))
    print("KERNEL_OK")
</pallas_src>

<mosaic_0001>
module attributes {stable_mosaic.version = 11 : i64} {
  func.func @_person_mask_kernel(%arg0: i32, %arg1: memref<3x8x128xf32, #tpu.memory_space<vmem>>, %arg2: memref<3x21xf32, #tpu.memory_space<smem>>, %arg3: memref<21xf32, #tpu.memory_space<smem>>, %arg4: memref<8x128xbf16, #tpu.memory_space<vmem>>) attributes {dimension_semantics = [#tpu.dimension_semantics<parallel>], iteration_bounds = array<i64: 1>, scalar_prefetch = 0 : i64, scratch_operands = 0 : i64, tpu.core_type = #tpu.core_type<tc>, window_params = [{transform_indices = @transform_0, window_bounds = array<i64: 3, 8, 128>}, {transform_indices = @transform_1, window_bounds = array<i64: 3, 21>}, {transform_indices = @transform_2, window_bounds = array<i64: 21>}, {transform_indices = @transform_3, window_bounds = array<i64: 8, 128>}]} {
    %c0 = arith.constant 0 : index
    %c0_0 = arith.constant 0 : index
    %c0_1 = arith.constant 0 : index
    %0 = vector.load %arg1[%c0, %c0_0, %c0_1] : memref<3x8x128xf32, #tpu.memory_space<vmem>>, vector<1x8x128xf32>
    %1 = vector.shape_cast %0 : vector<1x8x128xf32> to vector<8x128xf32>
    %c1 = arith.constant 1 : index
    %c0_2 = arith.constant 0 : index
    %c0_3 = arith.constant 0 : index
    %2 = vector.load %arg1[%c1, %c0_2, %c0_3] : memref<3x8x128xf32, #tpu.memory_space<vmem>>, vector<1x8x128xf32>
    %3 = vector.shape_cast %2 : vector<1x8x128xf32> to vector<8x128xf32>
    %c2 = arith.constant 2 : index
    %c0_4 = arith.constant 0 : index
    %c0_5 = arith.constant 0 : index
    %4 = vector.load %arg1[%c2, %c0_4, %c0_5] : memref<3x8x128xf32, #tpu.memory_space<vmem>>, vector<1x8x128xf32>
    %5 = vector.shape_cast %4 : vector<1x8x128xf32> to vector<8x128xf32>
    %c0_6 = arith.constant 0 : index
    %c15 = arith.constant 15 : index
    %6 = memref.load %arg2[%c0_6, %c15] : memref<3x21xf32, #tpu.memory_space<smem>>
    %7 = vector.broadcast %6 : f32 to vector<8x128xf32>
    %8 = arith.mulf %7, %1 : vector<8x128xf32>
    %c1_7 = arith.constant 1 : index
    %c15_8 = arith.constant 15 : index
    %9 = memref.load %arg2[%c1_7, %c15_8] : memref<3x21xf32, #tpu.memory_space<smem>>
    %10 = vector.broadcast %9 : f32 to vector<8x128xf32>
    %11 = arith.mulf %10, %3 : vector<8x128xf32>
    %12 = arith.addf %8, %11 : vector<8x128xf32>
    %c2_9 = arith.constant 2 : index
    %c15_10 = arith.constant 15 : index
    %13 = memref.load %arg2[%c2_9, %c15_10] : memref<3x21xf32, #tpu.memory_space<smem>>
    %14 = vector.broadcast %13 : f32 to vector<8x128xf32>
    %15 = arith.mulf %14, %5 : vector<8x128xf32>
    %16 = arith.addf %12, %15 : vector<8x128xf32>
    %c15_11 = arith.constant 15 : index
    %17 = memref.load %arg3[%c15_11] : memref<21xf32, #tpu.memory_space<smem>>
    %18 = vector.broadcast %17 : f32 to vector<8x128xf32>
    %19 = arith.addf %16, %18 : vector<8x128xf32>
    %cst = arith.constant 0.000000e+00 : f32
    %20 = vector.broadcast %cst : f32 to vector<8x128xf32>
    %c0_12 = arith.constant 0 : index
    %c0_13 = arith.constant 0 : index
    %21 = memref.load %arg2[%c0_12, %c0_13] : memref<3x21xf32, #tpu.memory_space<smem>>
    %22 = vector.broadcast %21 : f32 to vector<8x128xf32>
    %23 = arith.mulf %22, %1 : vector<8x128xf32>
    %c1_14 = arith.constant 1 : index
    %c0_15 = arith.constant 0 : index
    %24 = memref.load %arg2[%c1_14, %c0_15] : memref<3x21xf32, #tpu.memory_space<smem>>
    %25 = vector.broadcast %24 : f32 to vector<8x128xf32>
    %26 = arith.mulf %25, %3 : vector<8x128xf32>
    %27 = arith.addf %23, %26 : vector<8x128xf32>
    %c2_16 = arith.constant 2 : index
    %c0_17 = arith.constant 0 : index
    %28 = memref.load %arg2[%c2_16, %c0_17] : memref<3x21xf32, #tpu.memory_space<smem>>
    %29 = vector.broadcast %28 : f32 to vector<8x128xf32>
    %30 = arith.mulf %29, %5 : vector<8x128xf32>
    %31 = arith.addf %27, %30 : vector<8x128xf32>
    %c0_18 = arith.constant 0 : index
    %32 = memref.load %arg3[%c0_18] : memref<21xf32, #tpu.memory_space<smem>>
    %33 = vector.broadcast %32 : f32 to vector<8x128xf32>
    %34 = arith.addf %31, %33 : vector<8x128xf32>
    %35 = arith.subf %34, %19 : vector<8x128xf32>
    %cst_19 = arith.constant 8.000000e+01 : f32
    %36 = vector.broadcast %cst_19 : f32 to vector<8x128xf32>
    %37 = arith.minimumf %35, %36 : vector<8x128xf32>
    %38 = math.exp %37 : vector<8x128xf32>
    %39 = arith.addf %20, %38 : vector<8x128xf32>
    %c0_20 = arith.constant 0 : index
    %c1_21 = arith.constant 1 : index
    %40 = memref.load %arg2[%c0_20, %c1_21] : memref<3x21xf32, #tpu.memory_space<smem>>
    %41 = vector.broadcast %40 : f32 to vector<8x128xf32>
    %42 = arith.mulf %41, %1 : vector<8x128xf32>
    %c1_22 = arith.constant 1 : index
    %c1_23 = arith.constant 1 : index
    %43 = memref.load %arg2[%c1_22, %c1_23] : memref<3x21xf32, #tpu.memory_space<smem>>
    %44 = vector.broadcast %43 : f32 to vector<8x128xf32>
    %45 = arith.mulf %44, %3 : vector<8x128xf32>
    %46 = arith.addf %42, %45 : vector<8x128xf32>
    %c2_24 = arith.constant 2 : index
    %c1_25 = arith.constant 1 : index
    %47 = memref.load %arg2[%c2_24, %c1_25] : memref<3x21xf32, #tpu.memory_space<smem>>
    %48 = vector.broadcast %47 : f32 to vector<8x128xf32>
    %49 = arith.mulf %48, %5 : vector<8x128xf32>
    %50 = arith.addf %46, %49 : vector<8x128xf32>
    %c1_26 = arith.constant 1 : index
    %51 = memref.load %arg3[%c1_26] : memref<21xf32, #tpu.memory_space<smem>>
    %52 = vector.broadcast %51 : f32 to vector<8x128xf32>
    %53 = arith.addf %50, %52 : vector<8x128xf32>
    %54 = arith.subf %53, %19 : vector<8x128xf32>
    %cst_27 = arith.constant 8.000000e+01 : f32
    %55 = vector.broadcast %cst_27 : f32 to vector<8x128xf32>
    %56 = arith.minimumf %54, %55 : vector<8x128xf32>
    %57 = math.exp %56 : vector<8x128xf32>
    %58 = arith.addf %39, %57 : vector<8x128xf32>
    %c0_28 = arith.constant 0 : index
    %c2_29 = arith.constant 2 : index
    %59 = memref.load %arg2[%c0_28, %c2_29] : memref<3x21xf32, #tpu.memory_space<smem>>
    %60 = vector.broadcast %59 : f32 to vector<8x128xf32>
    %61 = arith.mulf %60, %1 : vector<8x128xf32>
    %c1_30 = arith.constant 1 : index
    %c2_31 = arith.constant 2 : index
    %62 = memref.load %arg2[%c1_30, %c2_31] : memref<3x21xf32, #tpu.memory_space<smem>>
    %63 = vector.broadcast %62 : f32 to vector<8x128xf32>
    %64 = arith.mulf %63, %3 : vector<8x128xf32>
    %65 = arith.addf %61, %64 : vector<8x128xf32>
    %c2_32 = arith.constant 2 : index
    %c2_33 = arith.constant 2 : index
    %66 = memref.load %arg2[%c2_32, %c2_33] : memref<3x21xf32, #tpu.memory_space<smem>>
    %67 = vector.broadcast %66 : f32 to vector<8x128xf32>
    %68 = arith.mulf %67, %5 : vector<8x128xf32>
    %69 = arith.addf %65, %68 : vector<8x128xf32>
    %c2_34 = arith.constant 2 : index
    %70 = memref.load %arg3[%c2_34] : memref<21xf32, #tpu.memory_space<smem>>
    %71 = vector.broadcast %70 : f32 to vector<8x128xf32>
    %72 = arith.addf %69, %71 : vector<8x128xf32>
    %73 = arith.subf %72, %19 : vector<8x128xf32>
    %cst_35 = arith.constant 8.000000e+01 : f32
    %74 = vector.broadcast %cst_35 : f32 to vector<8x128xf32>
    %75 = arith.minimumf %73, %74 : vector<8x128xf32>
    %76 = math.exp %75 : vector<8x128xf32>
    %77 = arith.addf %58, %76 : vector<8x128xf32>
    %c0_36 = arith.constant 0 : index
    %c3 = arith.constant 3 : index
    %78 = memref.load %arg2[%c0_36, %c3] : memref<3x21xf32, #tpu.memory_space<smem>>
    %79 = vector.broadcast %78 : f32 to vector<8x128xf32>
    %80 = arith.mulf %79, %1 : vector<8x128xf32>
    %c1_37 = arith.constant 1 : index
    %c3_38 = arith.constant 3 : index
    %81 = memref.load %arg2[%c1_37, %c3_38] : memref<3x21xf32, #tpu.memory_space<smem>>
    %82 = vector.broadcast %81 : f32 to vector<8x128xf32>
    %83 = arith.mulf %82, %3 : vector<8x128xf32>
    %84 = arith.addf %80, %83 : vector<8x128xf32>
    %c2_39 = arith.constant 2 : index
    %c3_40 = arith.constant 3 : index
    %85 = memref.load %arg2[%c2_39, %c3_40] : memref<3x21xf32, #tpu.memory_space<smem>>
    %86 = vector.broadcast %85 : f32 to vector<8x128xf32>
    %87 = arith.mulf %86, %5 : vector<8x128xf32>
    %88 = arith.addf %84, %87 : vector<8x128xf32>
    %c3_41 = arith.constant 3 : index
    %89 = memref.load %arg3[%c3_41] : memref<21xf32, #tpu.memory_space<smem>>
    %90 = vector.broadcast %89 : f32 to vector<8x128xf32>
    %91 = arith.addf %88, %90 : vector<8x128xf32>
    %92 = arith.subf %91, %19 : vector<8x128xf32>
    %cst_42 = arith.constant 8.000000e+01 : f32
    %93 = vector.broadcast %cst_42 : f32 to vector<8x128xf32>
    %94 = arith.minimumf %92, %93 : vector<8x128xf32>
    %95 = math.exp %94 : vector<8x128xf32>
    %96 = arith.addf %77, %95 : vector<8x128xf32>
    %c0_43 = arith.constant 0 : index
    %c4 = arith.constant 4 : index
    %97 = memref.load %arg2[%c0_43, %c4] : memref<3x21xf32, #tpu.memory_space<smem>>
    %98 = vector.broadcast %97 : f32 to vector<8x128xf32>
    %99 = arith.mulf %98, %1 : vector<8x128xf32>
    %c1_44 = arith.constant 1 : index
    %c4_45 = arith.constant 4 : index
    %100 = memref.load %arg2[%c1_44, %c4_45] : memref<3x21xf32, #tpu.memory_space<smem>>
    %101 = vector.broadcast %100 : f32 to vector<8x128xf32>
    %102 = arith.mulf %101, %3 : vector<8x128xf32>
    %103 = arith.addf %99, %102 : vector<8x128xf32>
    %c2_46 = arith.constant 2 : index
    %c4_47 = arith.constant 4 : index
    %104 = memref.load %arg2[%c2_46, %c4_47] : memref<3x21xf32, #tpu.memory_space<smem>>
    %105 = vector.broadcast %104 : f32 to vector<8x128xf32>
    %106 = arith.mulf %105, %5 : vector<8x128xf32>
    %107 = arith.addf %103, %106 : vector<8x128xf32>
    %c4_48 = arith.constant 4 : index
    %108 = memref.load %arg3[%c4_48] : memref<21xf32, #tpu.memory_space<smem>>
    %109 = vector.broadcast %108 : f32 to vector<8x128xf32>
    %110 = arith.addf %107, %109 : vector<8x128xf32>
    %111 = arith.subf %110, %19 : vector<8x128xf32>
    %cst_49 = arith.constant 8.000000e+01 : f32
    %112 = vector.broadcast %cst_49 : f32 to vector<8x128xf32>
    %113 = arith.minimumf %111, %112 : vector<8x128xf32>
    %114 = math.exp %113 : vector<8x128xf32>
    %115 = arith.addf %96, %114 : vector<8x128xf32>
    %c0_50 = arith.constant 0 : index
    %c5 = arith.constant 5 : index
    %116 = memref.load %arg2[%c0_50, %c5] : memref<3x21xf32, #tpu.memory_space<smem>>
    %117 = vector.broadcast %116 : f32 to vector<8x128xf32>
    %118 = arith.mulf %117, %1 : vector<8x128xf32>
    %c1_51 = arith.constant 1 : index
    %c5_52 = arith.constant 5 : index
    %119 = memref.load %arg2[%c1_51, %c5_52] : memref<3x21xf32, #tpu.memory_space<smem>>
    %120 = vector.broadcast %119 : f32 to vector<8x128xf32>
    %121 = arith.mulf %120, %3 : vector<8x128xf32>
    %122 = arith.addf %118, %121 : vector<8x128xf32>
    %c2_53 = arith.constant 2 : index
    %c5_54 = arith.constant 5 : index
    %123 = memref.load %arg2[%c2_53, %c5_54] : memref<3x21xf32, #tpu.memory_space<smem>>
    %124 = vector.broadcast %123 : f32 to vector<8x128xf32>
    %125 = arith.mulf %124, %5 : vector<8x128xf32>
    %126 = arith.addf %122, %125 : vector<8x128xf32>
    %c5_55 = arith.constant 5 : index
    %127 = memref.load %arg3[%c5_55] : memref<21xf32, #tpu.memory_space<smem>>
    %128 = vector.broadcast %127 : f32 to vector<8x128xf32>
    %129 = arith.addf %126, %128 : vector<8x128xf32>
    %130 = arith.subf %129, %19 : vector<8x128xf32>
    %cst_56 = arith.constant 8.000000e+01 : f32
    %131 = vector.broadcast %cst_56 : f32 to vector<8x128xf32>
    %132 = arith.minimumf %130, %131 : vector<8x128xf32>
    %133 = math.exp %132 : vector<8x128xf32>
    %134 = arith.addf %115, %133 : vector<8x128xf32>
    %c0_57 = arith.constant 0 : index
    %c6 = arith.constant 6 : index
    %135 = memref.load %arg2[%c0_57, %c6] : memref<3x21xf32, #tpu.memory_space<smem>>
    %136 = vector.broadcast %135 : f32 to vector<8x128xf32>
    %137 = arith.mulf %136, %1 : vector<8x128xf32>
    %c1_58 = arith.constant 1 : index
    %c6_59 = arith.constant 6 : index
    %138 = memref.load %arg2[%c1_58, %c6_59] : memref<3x21xf32, #tpu.memory_space<smem>>
    %139 = vector.broadcast %138 : f32 to vector<8x128xf32>
    %140 = arith.mulf %139, %3 : vector<8x128xf32>
    %141 = arith.addf %137, %140 : vector<8x128xf32>
    %c2_60 = arith.constant 2 : index
    %c6_61 = arith.constant 6 : index
    %142 = memref.load %arg2[%c2_60, %c6_61] : memref<3x21xf32, #tpu.memory_space<smem>>
    %143 = vector.broadcast %142 : f32 to vector<8x128xf32>
    %144 = arith.mulf %143, %5 : vector<8x128xf32>
    %145 = arith.addf %141, %144 : vector<8x128xf32>
    %c6_62 = arith.constant 6 : index
    %146 = memref.load %arg3[%c6_62] : memref<21xf32, #tpu.memory_space<smem>>
    %147 = vector.broadcast %146 : f32 to vector<8x128xf32>
    %148 = arith.addf %145, %147 : vector<8x128xf32>
    %149 = arith.subf %148, %19 : vector<8x128xf32>
    %cst_63 = arith.constant 8.000000e+01 : f32
    %150 = vector.broadcast %cst_63 : f32 to vector<8x128xf32>
    %151 = arith.minimumf %149, %150 : vector<8x128xf32>
    %152 = math.exp %151 : vector<8x128xf32>
    %153 = arith.addf %134, %152 : vector<8x128xf32>
    %c0_64 = arith.constant 0 : index
    %c7 = arith.constant 7 : index
    %154 = memref.load %arg2[%c0_64, %c7] : memref<3x21xf32, #tpu.memory_space<smem>>
    %155 = vector.broadcast %154 : f32 to vector<8x128xf32>
    %156 = arith.mulf %155, %1 : vector<8x128xf32>
    %c1_65 = arith.constant 1 : index
    %c7_66 = arith.constant 7 : index
    %157 = memref.load %arg2[%c1_65, %c7_66] : memref<3x21xf32, #tpu.memory_space<smem>>
    %158 = vector.broadcast %157 : f32 to vector<8x128xf32>
    %159 = arith.mulf %158, %3 : vector<8x128xf32>
    %160 = arith.addf %156, %159 : vector<8x128xf32>
    %c2_67 = arith.constant 2 : index
    %c7_68 = arith.constant 7 : index
    %161 = memref.load %arg2[%c2_67, %c7_68] : memref<3x21xf32, #tpu.memory_space<smem>>
    %162 = vector.broadcast %161 : f32 to vector<8x128xf32>
    %163 = arith.mulf %162, %5 : vector<8x128xf32>
    %164 = arith.addf %160, %163 : vector<8x128xf32>
    %c7_69 = arith.constant 7 : index
    %165 = memref.load %arg3[%c7_69] : memref<21xf32, #tpu.memory_space<smem>>
    %166 = vector.broadcast %165 : f32 to vector<8x128xf32>
    %167 = arith.addf %164, %166 : vector<8x128xf32>
    %168 = arith.subf %167, %19 : vector<8x128xf32>
    %cst_70 = arith.constant 8.000000e+01 : f32
    %169 = vector.broadcast %cst_70 : f32 to vector<8x128xf32>
    %170 = arith.minimumf %168, %169 : vector<8x128xf32>
    %171 = math.exp %170 : vector<8x128xf32>
    %172 = arith.addf %153, %171 : vector<8x128xf32>
    %c0_71 = arith.constant 0 : index
    %c8 = arith.constant 8 : index
    %173 = memref.load %arg2[%c0_71, %c8] : memref<3x21xf32, #tpu.memory_space<smem>>
    %174 = vector.broadcast %173 : f32 to vector<8x128xf32>
    %175 = arith.mulf %174, %1 : vector<8x128xf32>
    %c1_72 = arith.constant 1 : index
    %c8_73 = arith.constant 8 : index
    %176 = memref.load %arg2[%c1_72, %c8_73] : memref<3x21xf32, #tpu.memory_space<smem>>
    %177 = vector.broadcast %176 : f32 to vector<8x128xf32>
    %178 = arith.mulf %177, %3 : vector<8x128xf32>
    %179 = arith.addf %175, %178 : vector<8x128xf32>
    %c2_74 = arith.constant 2 : index
    %c8_75 = arith.constant 8 : index
    %180 = memref.load %arg2[%c2_74, %c8_75] : memref<3x21xf32, #tpu.memory_space<smem>>
    %181 = vector.broadcast %180 : f32 to vector<8x128xf32>
    %182 = arith.mulf %181, %5 : vector<8x128xf32>
    %183 = arith.addf %179, %182 : vector<8x128xf32>
    %c8_76 = arith.constant 8 : index
    %184 = memref.load %arg3[%c8_76] : memref<21xf32, #tpu.memory_space<smem>>
    %185 = vector.broadcast %184 : f32 to vector<8x128xf32>
    %186 = arith.addf %183, %185 : vector<8x128xf32>
    %187 = arith.subf %186, %19 : vector<8x128xf32>
    %cst_77 = arith.constant 8.000000e+01 : f32
    %188 = vector.broadcast %cst_77 : f32 to vector<8x128xf32>
    %189 = arith.minimumf %187, %188 : vector<8x128xf32>
    %190 = math.exp %189 : vector<8x128xf32>
    %191 = arith.addf %172, %190 : vector<8x128xf32>
    %c0_78 = arith.constant 0 : index
    %c9 = arith.constant 9 : index
    %192 = memref.load %arg2[%c0_78, %c9] : memref<3x21xf32, #tpu.memory_space<smem>>
    %193 = vector.broadcast %192 : f32 to vector<8x128xf32>
    %194 = arith.mulf %193, %1 : vector<8x128xf32>
    %c1_79 = arith.constant 1 : index
    %c9_80 = arith.constant 9 : index
    %195 = memref.load %arg2[%c1_79, %c9_80] : memref<3x21xf32, #tpu.memory_space<smem>>
    %196 = vector.broadcast %195 : f32 to vector<8x128xf32>
    %197 = arith.mulf %196, %3 : vector<8x128xf32>
    %198 = arith.addf %194, %197 : vector<8x128xf32>
    %c2_81 = arith.constant 2 : index
    %c9_82 = arith.constant 9 : index
    %199 = memref.load %arg2[%c2_81, %c9_82] : memref<3x21xf32, #tpu.memory_space<smem>>
    %200 = vector.broadcast %199 : f32 to vector<8x128xf32>
    %201 = arith.mulf %200, %5 : vector<8x128xf32>
    %202 = arith.addf %198, %201 : vector<8x128xf32>
    %c9_83 = arith.constant 9 : index
    %203 = memref.load %arg3[%c9_83] : memref<21xf32, #tpu.memory_space<smem>>
    %204 = vector.broadcast %203 : f32 to vector<8x128xf32>
    %205 = arith.addf %202, %204 : vector<8x128xf32>
    %206 = arith.subf %205, %19 : vector<8x128xf32>
    %cst_84 = arith.constant 8.000000e+01 : f32
    %207 = vector.broadcast %cst_84 : f32 to vector<8x128xf32>
    %208 = arith.minimumf %206, %207 : vector<8x128xf32>
    %209 = math.exp %208 : vector<8x128xf32>
    %210 = arith.addf %191, %209 : vector<8x128xf32>
    %c0_85 = arith.constant 0 : index
    %c10 = arith.constant 10 : index
    %211 = memref.load %arg2[%c0_85, %c10] : memref<3x21xf32, #tpu.memory_space<smem>>
    %212 = vector.broadcast %211 : f32 to vector<8x128xf32>
    %213 = arith.mulf %212, %1 : vector<8x128xf32>
    %c1_86 = arith.constant 1 : index
    %c10_87 = arith.constant 10 : index
    %214 = memref.load %arg2[%c1_86, %c10_87] : memref<3x21xf32, #tpu.memory_space<smem>>
    %215 = vector.broadcast %214 : f32 to vector<8x128xf32>
    %216 = arith.mulf %215, %3 : vector<8x128xf32>
    %217 = arith.addf %213, %216 : vector<8x128xf32>
    %c2_88 = arith.constant 2 : index
    %c10_89 = arith.constant 10 : index
    %218 = memref.load %arg2[%c2_88, %c10_89] : memref<3x21xf32, #tpu.memory_space<smem>>
    %219 = vector.broadcast %218 : f32 to vector<8x128xf32>
    %220 = arith.mulf %219, %5 : vector<8x128xf32>
    %221 = arith.addf %217, %220 : vector<8x128xf32>
    %c10_90 = arith.constant 10 : index
    %222 = memref.load %arg3[%c10_90] : memref<21xf32, #tpu.memory_space<smem>>
    %223 = vector.broadcast %222 : f32 to vector<8x128xf32>
    %224 = arith.addf %221, %223 : vector<8x128xf32>
    %225 = arith.subf %224, %19 : vector<8x128xf32>
    %cst_91 = arith.constant 8.000000e+01 : f32
    %226 = vector.broadcast %cst_91 : f32 to vector<8x128xf32>
    %227 = arith.minimumf %225, %226 : vector<8x128xf32>
    %228 = math.exp %227 : vector<8x128xf32>
    %229 = arith.addf %210, %228 : vector<8x128xf32>
    %c0_92 = arith.constant 0 : index
    %c11 = arith.constant 11 : index
    %230 = memref.load %arg2[%c0_92, %c11] : memref<3x21xf32, #tpu.memory_space<smem>>
    %231 = vector.broadcast %230 : f32 to vector<8x128xf32>
    %232 = arith.mulf %231, %1 : vector<8x128xf32>
    %c1_93 = arith.constant 1 : index
    %c11_94 = arith.constant 11 : index
    %233 = memref.load %arg2[%c1_93, %c11_94] : memref<3x21xf32, #tpu.memory_space<smem>>
    %234 = vector.broadcast %233 : f32 to vector<8x128xf32>
    %235 = arith.mulf %234, %3 : vector<8x128xf32>
    %236 = arith.addf %232, %235 : vector<8x128xf32>
    %c2_95 = arith.constant 2 : index
    %c11_96 = arith.constant 11 : index
    %237 = memref.load %arg2[%c2_95, %c11_96] : memref<3x21xf32, #tpu.memory_space<smem>>
    %238 = vector.broadcast %237 : f32 to vector<8x128xf32>
    %239 = arith.mulf %238, %5 : vector<8x128xf32>
    %240 = arith.addf %236, %239 : vector<8x128xf32>
    %c11_97 = arith.constant 11 : index
    %241 = memref.load %arg3[%c11_97] : memref<21xf32, #tpu.memory_space<smem>>
    %242 = vector.broadcast %241 : f32 to vector<8x128xf32>
    %243 = arith.addf %240, %242 : vector<8x128xf32>
    %244 = arith.subf %243, %19 : vector<8x128xf32>
    %cst_98 = arith.constant 8.000000e+01 : f32
    %245 = vector.broadcast %cst_98 : f32 to vector<8x128xf32>
    %246 = arith.minimumf %244, %245 : vector<8x128xf32>
    %247 = math.exp %246 : vector<8x128xf32>
    %248 = arith.addf %229, %247 : vector<8x128xf32>
    %c0_99 = arith.constant 0 : index
    %c12 = arith.constant 12 : index
    %249 = memref.load %arg2[%c0_99, %c12] : memref<3x21xf32, #tpu.memory_space<smem>>
    %250 = vector.broadcast %249 : f32 to vector<8x128xf32>
    %251 = arith.mulf %250, %1 : vector<8x128xf32>
    %c1_100 = arith.constant 1 : index
    %c12_101 = arith.constant 12 : index
    %252 = memref.load %arg2[%c1_100, %c12_101] : memref<3x21xf32, #tpu.memory_space<smem>>
    %253 = vector.broadcast %252 : f32 to vector<8x128xf32>
    %254 = arith.mulf %253, %3 : vector<8x128xf32>
    %255 = arith.addf %251, %254 : vector<8x128xf32>
    %c2_102 = arith.constant 2 : index
    %c12_103 = arith.constant 12 : index
    %256 = memref.load %arg2[%c2_102, %c12_103] : memref<3x21xf32, #tpu.memory_space<smem>>
    %257 = vector.broadcast %256 : f32 to vector<8x128xf32>
    %258 = arith.mulf %257, %5 : vector<8x128xf32>
    %259 = arith.addf %255, %258 : vector<8x128xf32>
    %c12_104 = arith.constant 12 : index
    %260 = memref.load %arg3[%c12_104] : memref<21xf32, #tpu.memory_space<smem>>
    %261 = vector.broadcast %260 : f32 to vector<8x128xf32>
    %262 = arith.addf %259, %261 : vector<8x128xf32>
    %263 = arith.subf %262, %19 : vector<8x128xf32>
    %cst_105 = arith.constant 8.000000e+01 : f32
    %264 = vector.broadcast %cst_105 : f32 to vector<8x128xf32>
    %265 = arith.minimumf %263, %264 : vector<8x128xf32>
    %266 = math.exp %265 : vector<8x128xf32>
    %267 = arith.addf %248, %266 : vector<8x128xf32>
    %c0_106 = arith.constant 0 : index
    %c13 = arith.constant 13 : index
    %268 = memref.load %arg2[%c0_106, %c13] : memref<3x21xf32, #tpu.memory_space<smem>>
    %269 = vector.broadcast %268 : f32 to vector<8x128xf32>
    %270 = arith.mulf %269, %1 : vector<8x128xf32>
    %c1_107 = arith.constant 1 : index
    %c13_108 = arith.constant 13 : index
    %271 = memref.load %arg2[%c1_107, %c13_108] : memref<3x21xf32, #tpu.memory_space<smem>>
    %272 = vector.broadcast %271 : f32 to vector<8x128xf32>
    %273 = arith.mulf %272, %3 : vector<8x128xf32>
    %274 = arith.addf %270, %273 : vector<8x128xf32>
    %c2_109 = arith.constant 2 : index
    %c13_110 = arith.constant 13 : index
    %275 = memref.load %arg2[%c2_109, %c13_110] : memref<3x21xf32, #tpu.memory_space<smem>>
    %276 = vector.broadcast %275 : f32 to vector<8x128xf32>
    %277 = arith.mulf %276, %5 : vector<8x128xf32>
    %278 = arith.addf %274, %277 : vector<8x128xf32>
    %c13_111 = arith.constant 13 : index
    %279 = memref.load %arg3[%c13_111] : memref<21xf32, #tpu.memory_space<smem>>
    %280 = vector.broadcast %279 : f32 to vector<8x128xf32>
    %281 = arith.addf %278, %280 : vector<8x128xf32>
    %282 = arith.subf %281, %19 : vector<8x128xf32>
    %cst_112 = arith.constant 8.000000e+01 : f32
    %283 = vector.broadcast %cst_112 : f32 to vector<8x128xf32>
    %284 = arith.minimumf %282, %283 : vector<8x128xf32>
    %285 = math.exp %284 : vector<8x128xf32>
    %286 = arith.addf %267, %285 : vector<8x128xf32>
    %c0_113 = arith.constant 0 : index
    %c14 = arith.constant 14 : index
    %287 = memref.load %arg2[%c0_113, %c14] : memref<3x21xf32, #tpu.memory_space<smem>>
    %288 = vector.broadcast %287 : f32 to vector<8x128xf32>
    %289 = arith.mulf %288, %1 : vector<8x128xf32>
    %c1_114 = arith.constant 1 : index
    %c14_115 = arith.constant 14 : index
    %290 = memref.load %arg2[%c1_114, %c14_115] : memref<3x21xf32, #tpu.memory_space<smem>>
    %291 = vector.broadcast %290 : f32 to vector<8x128xf32>
    %292 = arith.mulf %291, %3 : vector<8x128xf32>
    %293 = arith.addf %289, %292 : vector<8x128xf32>
    %c2_116 = arith.constant 2 : index
    %c14_117 = arith.constant 14 : index
    %294 = memref.load %arg2[%c2_116, %c14_117] : memref<3x21xf32, #tpu.memory_space<smem>>
    %295 = vector.broadcast %294 : f32 to vector<8x128xf32>
    %296 = arith.mulf %295, %5 : vector<8x128xf32>
    %297 = arith.addf %293, %296 : vector<8x128xf32>
    %c14_118 = arith.constant 14 : index
    %298 = memref.load %arg3[%c14_118] : memref<21xf32, #tpu.memory_space<smem>>
    %299 = vector.broadcast %298 : f32 to vector<8x128xf32>
    %300 = arith.addf %297, %299 : vector<8x128xf32>
    %301 = arith.subf %300, %19 : vector<8x128xf32>
    %cst_119 = arith.constant 8.000000e+01 : f32
    %302 = vector.broadcast %cst_119 : f32 to vector<8x128xf32>
    %303 = arith.minimumf %301, %302 : vector<8x128xf32>
    %304 = math.exp %303 : vector<8x128xf32>
    %305 = arith.addf %286, %304 : vector<8x128xf32>
    %c0_120 = arith.constant 0 : index
    %c15_121 = arith.constant 15 : index
    %306 = memref.load %arg2[%c0_120, %c15_121] : memref<3x21xf32, #tpu.memory_space<smem>>
    %307 = vector.broadcast %306 : f32 to vector<8x128xf32>
    %308 = arith.mulf %307, %1 : vector<8x128xf32>
    %c1_122 = arith.constant 1 : index
    %c15_123 = arith.constant 15 : index
    %309 = memref.load %arg2[%c1_122, %c15_123] : memref<3x21xf32, #tpu.memory_space<smem>>
    %310 = vector.broadcast %309 : f32 to vector<8x128xf32>
    %311 = arith.mulf %310, %3 : vector<8x128xf32>
    %312 = arith.addf %308, %311 : vector<8x128xf32>
    %c2_124 = arith.constant 2 : index
    %c15_125 = arith.constant 15 : index
    %313 = memref.load %arg2[%c2_124, %c15_125] : memref<3x21xf32, #tpu.memory_space<smem>>
    %314 = vector.broadcast %313 : f32 to vector<8x128xf32>
    %315 = arith.mulf %314, %5 : vector<8x128xf32>
    %316 = arith.addf %312, %315 : vector<8x128xf32>
    %c15_126 = arith.constant 15 : index
    %317 = memref.load %arg3[%c15_126] : memref<21xf32, #tpu.memory_space<smem>>
    %318 = vector.broadcast %317 : f32 to vector<8x128xf32>
    %319 = arith.addf %316, %318 : vector<8x128xf32>
    %320 = arith.subf %319, %19 : vector<8x128xf32>
    %cst_127 = arith.constant 8.000000e+01 : f32
    %321 = vector.broadcast %cst_127 : f32 to vector<8x128xf32>
    %322 = arith.minimumf %320, %321 : vector<8x128xf32>
    %323 = math.exp %322 : vector<8x128xf32>
    %324 = arith.addf %305, %323 : vector<8x128xf32>
    %c0_128 = arith.constant 0 : index
    %c16 = arith.constant 16 : index
    %325 = memref.load %arg2[%c0_128, %c16] : memref<3x21xf32, #tpu.memory_space<smem>>
    %326 = vector.broadcast %325 : f32 to vector<8x128xf32>
    %327 = arith.mulf %326, %1 : vector<8x128xf32>
    %c1_129 = arith.constant 1 : index
    %c16_130 = arith.constant 16 : index
    %328 = memref.load %arg2[%c1_129, %c16_130] : memref<3x21xf32, #tpu.memory_space<smem>>
    %329 = vector.broadcast %328 : f32 to vector<8x128xf32>
    %330 = arith.mulf %329, %3 : vector<8x128xf32>
    %331 = arith.addf %327, %330 : vector<8x128xf32>
    %c2_131 = arith.constant 2 : index
    %c16_132 = arith.constant 16 : index
    %332 = memref.load %arg2[%c2_131, %c16_132] : memref<3x21xf32, #tpu.memory_space<smem>>
    %333 = vector.broadcast %332 : f32 to vector<8x128xf32>
    %334 = arith.mulf %333, %5 : vector<8x128xf32>
    %335 = arith.addf %331, %334 : vector<8x128xf32>
    %c16_133 = arith.constant 16 : index
    %336 = memref.load %arg3[%c16_133] : memref<21xf32, #tpu.memory_space<smem>>
    %337 = vector.broadcast %336 : f32 to vector<8x128xf32>
    %338 = arith.addf %335, %337 : vector<8x128xf32>
    %339 = arith.subf %338, %19 : vector<8x128xf32>
    %cst_134 = arith.constant 8.000000e+01 : f32
    %340 = vector.broadcast %cst_134 : f32 to vector<8x128xf32>
    %341 = arith.minimumf %339, %340 : vector<8x128xf32>
    %342 = math.exp %341 : vector<8x128xf32>
    %343 = arith.addf %324, %342 : vector<8x128xf32>
    %c0_135 = arith.constant 0 : index
    %c17 = arith.constant 17 : index
    %344 = memref.load %arg2[%c0_135, %c17] : memref<3x21xf32, #tpu.memory_space<smem>>
    %345 = vector.broadcast %344 : f32 to vector<8x128xf32>
    %346 = arith.mulf %345, %1 : vector<8x128xf32>
    %c1_136 = arith.constant 1 : index
    %c17_137 = arith.constant 17 : index
    %347 = memref.load %arg2[%c1_136, %c17_137] : memref<3x21xf32, #tpu.memory_space<smem>>
    %348 = vector.broadcast %347 : f32 to vector<8x128xf32>
    %349 = arith.mulf %348, %3 : vector<8x128xf32>
    %350 = arith.addf %346, %349 : vector<8x128xf32>
    %c2_138 = arith.constant 2 : index
    %c17_139 = arith.constant 17 : index
    %351 = memref.load %arg2[%c2_138, %c17_139] : memref<3x21xf32, #tpu.memory_space<smem>>
    %352 = vector.broadcast %351 : f32 to vector<8x128xf32>
    %353 = arith.mulf %352, %5 : vector<8x128xf32>
    %354 = arith.addf %350, %353 : vector<8x128xf32>
    %c17_140 = arith.constant 17 : index
    %355 = memref.load %arg3[%c17_140] : memref<21xf32, #tpu.memory_space<smem>>
    %356 = vector.broadcast %355 : f32 to vector<8x128xf32>
    %357 = arith.addf %354, %356 : vector<8x128xf32>
    %358 = arith.subf %357, %19 : vector<8x128xf32>
    %cst_141 = arith.constant 8.000000e+01 : f32
    %359 = vector.broadcast %cst_141 : f32 to vector<8x128xf32>
    %360 = arith.minimumf %358, %359 : vector<8x128xf32>
    %361 = math.exp %360 : vector<8x128xf32>
    %362 = arith.addf %343, %361 : vector<8x128xf32>
    %c0_142 = arith.constant 0 : index
    %c18 = arith.constant 18 : index
    %363 = memref.load %arg2[%c0_142, %c18] : memref<3x21xf32, #tpu.memory_space<smem>>
    %364 = vector.broadcast %363 : f32 to vector<8x128xf32>
    %365 = arith.mulf %364, %1 : vector<8x128xf32>
    %c1_143 = arith.constant 1 : index
    %c18_144 = arith.constant 18 : index
    %366 = memref.load %arg2[%c1_143, %c18_144] : memref<3x21xf32, #tpu.memory_space<smem>>
    %367 = vector.broadcast %366 : f32 to vector<8x128xf32>
    %368 = arith.mulf %367, %3 : vector<8x128xf32>
    %369 = arith.addf %365, %368 : vector<8x128xf32>
    %c2_145 = arith.constant 2 : index
    %c18_146 = arith.constant 18 : index
    %370 = memref.load %arg2[%c2_145, %c18_146] : memref<3x21xf32, #tpu.memory_space<smem>>
    %371 = vector.broadcast %370 : f32 to vector<8x128xf32>
    %372 = arith.mulf %371, %5 : vector<8x128xf32>
    %373 = arith.addf %369, %372 : vector<8x128xf32>
    %c18_147 = arith.constant 18 : index
    %374 = memref.load %arg3[%c18_147] : memref<21xf32, #tpu.memory_space<smem>>
    %375 = vector.broadcast %374 : f32 to vector<8x128xf32>
    %376 = arith.addf %373, %375 : vector<8x128xf32>
    %377 = arith.subf %376, %19 : vector<8x128xf32>
    %cst_148 = arith.constant 8.000000e+01 : f32
    %378 = vector.broadcast %cst_148 : f32 to vector<8x128xf32>
    %379 = arith.minimumf %377, %378 : vector<8x128xf32>
    %380 = math.exp %379 : vector<8x128xf32>
    %381 = arith.addf %362, %380 : vector<8x128xf32>
    %c0_149 = arith.constant 0 : index
    %c19 = arith.constant 19 : index
    %382 = memref.load %arg2[%c0_149, %c19] : memref<3x21xf32, #tpu.memory_space<smem>>
    %383 = vector.broadcast %382 : f32 to vector<8x128xf32>
    %384 = arith.mulf %383, %1 : vector<8x128xf32>
    %c1_150 = arith.constant 1 : index
    %c19_151 = arith.constant 19 : index
    %385 = memref.load %arg2[%c1_150, %c19_151] : memref<3x21xf32, #tpu.memory_space<smem>>
    %386 = vector.broadcast %385 : f32 to vector<8x128xf32>
    %387 = arith.mulf %386, %3 : vector<8x128xf32>
    %388 = arith.addf %384, %387 : vector<8x128xf32>
    %c2_152 = arith.constant 2 : index
    %c19_153 = arith.constant 19 : index
    %389 = memref.load %arg2[%c2_152, %c19_153] : memref<3x21xf32, #tpu.memory_space<smem>>
    %390 = vector.broadcast %389 : f32 to vector<8x128xf32>
    %391 = arith.mulf %390, %5 : vector<8x128xf32>
    %392 = arith.addf %388, %391 : vector<8x128xf32>
    %c19_154 = arith.constant 19 : index
    %393 = memref.load %arg3[%c19_154] : memref<21xf32, #tpu.memory_space<smem>>
    %394 = vector.broadcast %393 : f32 to vector<8x128xf32>
    %395 = arith.addf %392, %394 : vector<8x128xf32>
    %396 = arith.subf %395, %19 : vector<8x128xf32>
    %cst_155 = arith.constant 8.000000e+01 : f32
    %397 = vector.broadcast %cst_155 : f32 to vector<8x128xf32>
    %398 = arith.minimumf %396, %397 : vector<8x128xf32>
    %399 = math.exp %398 : vector<8x128xf32>
    %400 = arith.addf %381, %399 : vector<8x128xf32>
    %c0_156 = arith.constant 0 : index
    %c20 = arith.constant 20 : index
    %401 = memref.load %arg2[%c0_156, %c20] : memref<3x21xf32, #tpu.memory_space<smem>>
    %402 = vector.broadcast %401 : f32 to vector<8x128xf32>
    %403 = arith.mulf %402, %1 : vector<8x128xf32>
    %c1_157 = arith.constant 1 : index
    %c20_158 = arith.constant 20 : index
    %404 = memref.load %arg2[%c1_157, %c20_158] : memref<3x21xf32, #tpu.memory_space<smem>>
    %405 = vector.broadcast %404 : f32 to vector<8x128xf32>
    %406 = arith.mulf %405, %3 : vector<8x128xf32>
    %407 = arith.addf %403, %406 : vector<8x128xf32>
    %c2_159 = arith.constant 2 : index
    %c20_160 = arith.constant 20 : index
    %408 = memref.load %arg2[%c2_159, %c20_160] : memref<3x21xf32, #tpu.memory_space<smem>>
    %409 = vector.broadcast %408 : f32 to vector<8x128xf32>
    %410 = arith.mulf %409, %5 : vector<8x128xf32>
    %411 = arith.addf %407, %410 : vector<8x128xf32>
    %c20_161 = arith.constant 20 : index
    %412 = memref.load %arg3[%c20_161] : memref<21xf32, #tpu.memory_space<smem>>
    %413 = vector.broadcast %412 : f32 to vector<8x128xf32>
    %414 = arith.addf %411, %413 : vector<8x128xf32>
    %415 = arith.subf %414, %19 : vector<8x128xf32>
    %cst_162 = arith.constant 8.000000e+01 : f32
    %416 = vector.broadcast %cst_162 : f32 to vector<8x128xf32>
    %417 = arith.minimumf %415, %416 : vector<8x128xf32>
    %418 = math.exp %417 : vector<8x128xf32>
    %419 = arith.addf %400, %418 : vector<8x128xf32>
    %cst_163 = arith.constant 1.000000e+00 : f32
    %420 = vector.broadcast %cst_163 : f32 to vector<8x128xf32>
    %421 = arith.divf %420, %419 : vector<8x128xf32>
    %422 = arith.truncf %421 : vector<8x128xf32> to vector<8x128xbf16>
    %c0_164 = arith.constant 0 : index
    %c0_165 = arith.constant 0 : index
    %423 = vector.load %arg4[%c0_164, %c0_165] : memref<8x128xbf16, #tpu.memory_space<vmem>>, vector<8x128xbf16>
    tpu.vector_store %arg4[%c0_164, %c0_165], %422 {strides = array<i32>} : memref<8x128xbf16, #tpu.memory_space<vmem>>, vector<8x128xbf16>,
    return
  }
  func.func @transform_0(%arg0: i32) -> (i32, i32, i32) {
    %c0_i32 = arith.constant 0 : i32
    %c0_i32_0 = arith.constant 0 : i32
    %c0_i32_1 = arith.constant 0 : i32
    return %c0_i32, %arg0, %c0_i32_0 : i32, i32, i32
  }
  func.func @transform_1(%arg0: i32) -> (i32, i32) {
    %c0_i32 = arith.constant 0 : i32
    %c0_i32_0 = arith.constant 0 : i32
    %c0_i32_1 = arith.constant 0 : i32
    return %c0_i32, %c0_i32_0 : i32, i32
  }
  func.func @transform_2(%arg0: i32) -> i32 {
    %c0_i32 = arith.constant 0 : i32
    %c0_i32_0 = arith.constant 0 : i32
    return %c0_i32 : i32
  }
  func.func @transform_3(%arg0: i32) -> (i32, i32) {
    %c0_i32 = arith.constant 0 : i32
    %c0_i32_0 = arith.constant 0 : i32
    return %arg0, %c0_i32 : i32, i32
  }
}

module attributes {stable_mosaic.version = 11 : i64} {
  func.func @_fused_conv_pool_kernel(%arg0: i32, %arg1: i32, %arg2: memref<16x512xbf16, #tpu.memory_space<vmem>>, %arg3: memref<512x2048xbf16, #tpu.memory_space<vmem>>, %arg4: memref<1x1x2048xf32, #tpu.memory_space<vmem>>, %arg5: memref<1x4x2048xf32, #tpu.memory_space<vmem>>) attributes {dimension_semantics = [#tpu.dimension_semantics<parallel>, #tpu.dimension_semantics<arbitrary>], iteration_bounds = array<i64: 2, 1>, scalar_prefetch = 0 : i64, scratch_operands = 0 : i64, tpu.core_type = #tpu.core_type<tc>, window_params = [{transform_indices = @transform_0, window_bounds = array<i64: 16, 512>}, {pipeline_mode = #tpu.pipeline_mode<synchronous>, transform_indices = @transform_1, window_bounds = array<i64: 512, 2048>}, {transform_indices = @transform_2, window_bounds = array<i64: 1, 1, 2048>}, {transform_indices = @transform_3, window_bounds = array<i64: 1, 4, 2048>}]} {
    %c0 = arith.constant 0 : index
    %c0_0 = arith.constant 0 : index
    %0 = vector.load %arg2[%c0, %c0_0] : memref<16x512xbf16, #tpu.memory_space<vmem>>, vector<16x512xbf16>
    %c0_1 = arith.constant 0 : index
    %c0_2 = arith.constant 0 : index
    %1 = vector.load %arg3[%c0_1, %c0_2] : memref<512x2048xbf16, #tpu.memory_space<vmem>>, vector<512x2048xbf16>
    %cst = arith.constant dense<0.000000e+00> : vector<16x2048xf32>
    %2 = tpu.matmul %0, %1, %cst {dimension_numbers = #tpu.dot_dimension_numbers<[1], [0], [0], [1], [0, 0, 1, 1], [], []>} : vector<16x512xbf16>, vector<512x2048xbf16>, vector<16x2048xf32> -> vector<16x2048xf32>
    %cst_3 = arith.constant 0.000000e+00 : f32
    %3 = vector.broadcast %cst_3 : f32 to vector<16x2048xf32>
    %4 = arith.maximumf %2, %3 : vector<16x2048xf32>
    %5 = vector.shape_cast %4 : vector<16x2048xf32> to vector<4x4x2048xf32>
    %cst_4 = arith.constant dense<0xFF800000> : vector<4x2048xf32>
    %6 = vector.multi_reduction <maximumf>, %5, %cst_4 [1] : vector<4x4x2048xf32> to vector<4x2048xf32>
    %7 = arith.mulf %6, %6 : vector<4x2048xf32>
    %cst_5 = arith.constant dense<0.000000e+00> : vector<4xf32>
    %8 = vector.multi_reduction <add>, %7, %cst_5 [1] : vector<4x2048xf32> to vector<4xf32>
    %9 = vector.shape_cast %8 : vector<4xf32> to vector<4x1xf32>
    %cst_6 = arith.constant 9.99999996E-13 : f32
    %10 = vector.broadcast %cst_6 : f32 to vector<4x1xf32>
    %11 = arith.maximumf %9, %10 : vector<4x1xf32>
    %12 = math.rsqrt %11 : vector<4x1xf32>
    %13 = vector.broadcast %12 : vector<4x1xf32> to vector<4x2048xf32>
    %14 = arith.mulf %6, %13 : vector<4x2048xf32>
    %c0_7 = arith.constant 0 : index
    %c0_8 = arith.constant 0 : index
    %c0_9 = arith.constant 0 : index
    %15 = vector.load %arg5[%c0_7, %c0_8, %c0_9] : memref<1x4x2048xf32, #tpu.memory_space<vmem>>, vector<1x4x2048xf32>
    %16 = vector.shape_cast %15 : vector<1x4x2048xf32> to vector<4x2048xf32>
    %17 = vector.shape_cast %14 : vector<4x2048xf32> to vector<1x4x2048xf32>
    tpu.vector_store %arg5[%c0_7, %c0_8, %c0_9], %17 {strides = array<i32>} : memref<1x4x2048xf32, #tpu.memory_space<vmem>>, vector<1x4x2048xf32>,
    %c0_i32 = arith.constant 0 : i32
    %18 = arith.cmpi eq, %arg1, %c0_i32 : i32
    %19 = arith.extui %18 : i1 to i32
    %c0_i32_10 = arith.constant 0 : i32
    %20 = arith.cmpi ne, %19, %c0_i32_10 : i32
    scf.if %20 {
      %cst_20 = arith.constant 0.000000e+00 : f32
      %32 = vector.broadcast %cst_20 : f32 to vector<1x1x2048xf32>
      %c0_21 = arith.constant 0 : index
      %c0_22 = arith.constant 0 : index
      %c0_23 = arith.constant 0 : index
      %33 = vector.load %arg4[%c0_21, %c0_22, %c0_23] : memref<1x1x2048xf32, #tpu.memory_space<vmem>>, vector<1x1x2048xf32>
      tpu.vector_store %arg4[%c0_21, %c0_22, %c0_23], %32 {strides = array<i32>} : memref<1x1x2048xf32, #tpu.memory_space<vmem>>, vector<1x1x2048xf32>,
    } else {
    }
    %c0_11 = arith.constant 0 : index
    %c0_12 = arith.constant 0 : index
    %c0_13 = arith.constant 0 : index
    %21 = vector.load %arg4[%c0_11, %c0_12, %c0_13] : memref<1x1x2048xf32, #tpu.memory_space<vmem>>, vector<1x1x2048xf32>
    %22 = vector.shape_cast %21 : vector<1x1x2048xf32> to vector<1x2048xf32>
    %cst_14 = arith.constant dense<0.000000e+00> : vector<2048xf32>
    %23 = vector.multi_reduction <add>, %4, %cst_14 [0] : vector<16x2048xf32> to vector<2048xf32>
    %24 = vector.shape_cast %23 : vector<2048xf32> to vector<1x2048xf32>
    %25 = arith.addf %22, %24 : vector<1x2048xf32>
    %c0_15 = arith.constant 0 : index
    %c0_16 = arith.constant 0 : index
    %c0_17 = arith.constant 0 : index
    %26 = vector.load %arg4[%c0_15, %c0_16, %c0_17] : memref<1x1x2048xf32, #tpu.memory_space<vmem>>, vector<1x1x2048xf32>
    %27 = vector.shape_cast %26 : vector<1x1x2048xf32> to vector<1x2048xf32>
    %28 = vector.shape_cast %25 : vector<1x2048xf32> to vector<1x1x2048xf32>
    tpu.vector_store %arg4[%c0_15, %c0_16, %c0_17], %28 {strides = array<i32>} : memref<1x1x2048xf32, #tpu.memory_space<vmem>>, vector<1x1x2048xf32>,
    %c0_i32_18 = arith.constant 0 : i32
    %29 = arith.cmpi eq, %arg1, %c0_i32_18 : i32
    %30 = arith.extui %29 : i1 to i32
    %c0_i32_19 = arith.constant 0 : i32
    %31 = arith.cmpi ne, %30, %c0_i32_19 : i32
    scf.if %31 {
      %c0_20 = arith.constant 0 : index
      %c0_21 = arith.constant 0 : index
      %c0_22 = arith.constant 0 : index
      %32 = vector.load %arg4[%c0_20, %c0_21, %c0_22] : memref<1x1x2048xf32, #tpu.memory_space<vmem>>, vector<1x1x2048xf32>
      %cst_23 = arith.constant 6.250000e-02 : f32
      %33 = vector.broadcast %cst_23 : f32 to vector<1x1x2048xf32>
      %34 = arith.mulf %32, %33 : vector<1x1x2048xf32>
      %c0_24 = arith.constant 0 : index
      %c0_25 = arith.constant 0 : index
      %c0_26 = arith.constant 0 : index
      %35 = vector.load %arg4[%c0_24, %c0_25, %c0_26] : memref<1x1x2048xf32, #tpu.memory_space<vmem>>, vector<1x1x2048xf32>
      tpu.vector_store %arg4[%c0_24, %c0_25, %c0_26], %34 {strides = array<i32>} : memref<1x1x2048xf32, #tpu.memory_space<vmem>>, vector<1x1x2048xf32>,
    } else {
    }
    return
  }
  func.func @transform_0(%arg0: i32, %arg1: i32) -> (i32, i32) {
    %c1_i32 = arith.constant 1 : i32
    %0 = arith.muli %arg0, %c1_i32 : i32
    %1 = arith.addi %0, %arg1 : i32
    %c0_i32 = arith.constant 0 : i32
    %c0_i32_0 = arith.constant 0 : i32
    return %1, %c0_i32 : i32, i32
  }
  func.func @transform_1(%arg0: i32, %arg1: i32) -> (i32, i32) {
    %c0_i32 = arith.constant 0 : i32
    %c0_i32_0 = arith.constant 0 : i32
    %c0_i32_1 = arith.constant 0 : i32
    return %c0_i32, %c0_i32_0 : i32, i32
  }
  func.func @transform_2(%arg0: i32, %arg1: i32) -> (i32, i32, i32) {
    %c0_i32 = arith.constant 0 : i32
    %c0_i32_0 = arith.constant 0 : i32
    %c0_i32_1 = arith.constant 0 : i32
    return %arg0, %c0_i32, %c0_i32_0 : i32, i32, i32
  }
  func.func @transform_3(%arg0: i32, %arg1: i32) -> (i32, i32, i32) {
    %c0_i32 = arith.constant 0 : i32
    %c0_i32_0 = arith.constant 0 : i32
    return %arg0, %arg1, %c0_i32 : i32, i32, i32
  }
}

</mosaic_0001>

<llo_original>
// kernel: mask_aligned_reid_forward.2
$region0: #{mask_aligned_reid_forward.2}
  #allocation0 [shape = 'u32[]', space=smem, size = 0x4, offset = 0x4, fixed_abs, tag = 'smem constant byte address 0x4 - core index']
  #allocation1 [shape = 'u32[72,128]{1,0:T(1,128)}', space=vmem, size = 0x9000, scoped, tag = 'internal scratch']
  %s0 = inlined_call_operand.vmem [shape: f32[3,8,128], index: 0, kind: input, shape index: {}]
  %s1 = inlined_call_operand.hbm [shape: f32[3,21], index: 1, kind: input, shape index: {}]
  %s2 = inlined_call_operand.hbm [shape: f32[21], index: 2, kind: input, shape index: {}]
  %s3 = inlined_call_operand.vmem [shape: bf16[8,128], index: 3, kind: output, shape index: {}]
  %s4 = sld [smem:[#allocation0]]
  $region30: #{mask_aligned_reid_forward.2} parent=0
    _
  %s6 = ssub.s32 1, %s4
  %s7 = scalar_select 0, %s6, %s4
  $region1: #{mask_aligned_reid_forward.2} parent=0
    #allocation2 [shape = 'u8[2048]{0}', space=smem, size = 0x800, scoped, tag = 'input window, operand 1, single buffered']
    #allocation3 [shape = 's32[1]{0}', space=sflag, size = 0x4, scoped, tag = 'scoped memory for mask_aligned_reid_forward.2']
    #allocation4 [shape = 'u8[512]{0}', space=smem, size = 0x200, scoped, tag = 'input window, operand 2, single buffered']
    #allocation5 [shape = 's32[1]{0}', space=sflag, size = 0x4, scoped, tag = 'scoped memory for mask_aligned_reid_forward.2']
    %8 = vsyncpa [#allocation3], 0
    %9 = vsyncpa [#allocation5], 0
    // Predicated region
    $region2: #{mask_aligned_reid_forward.2} parent=1 // pred_check
      _
    $region3: #{mask_aligned_reid_forward.2} parent=1 // pred_check_branch
      %11 = sbr.rel (0) target = $region5
    $region4: #{mask_aligned_reid_forward.2} parent=1 // pred_region
      _
    $region5: #{mask_aligned_reid_forward.2} parent=1 // pred_fallthru
      _
    // Predicated region
    $region6: #{mask_aligned_reid_forward.2} parent=1 // pred_check
      _
    $region7: #{mask_aligned_reid_forward.2} parent=1 // pred_check_branch
      %13 = sbr.rel (0) target = $region9
    $region8: #{mask_aligned_reid_forward.2} parent=1 // pred_region
      %15 = vsyncadd [#allocation3], 0
      %s17 = sshll.u32 %s1, 4
      %s18 = int_to_ptr.hbm [resolvable:$true] %s17
      %20 = dma.hbm_to_smem %s18, 64, [#allocation2], [#allocation3]
    $region9: #{mask_aligned_reid_forward.2} parent=1 // pred_fallthru
      _
    // Predicated region
    $region10: #{mask_aligned_reid_forward.2} parent=1 // pred_check
      _
    $region11: #{mask_aligned_reid_forward.2} parent=1 // pred_check_branch
      %22 = sbr.rel (0) target = $region13
    $region12: #{mask_aligned_reid_forward.2} parent=1 // pred_region
      %24 = vsyncadd [#allocation5], 0
      %s26 = sshll.u32 %s2, 4
      %s27 = int_to_ptr.hbm [resolvable:$true] %s26
      %29 = dma.hbm_to_smem %s27, 16, [#allocation4], [#allocation5]
    $region13: #{mask_aligned_reid_forward.2} parent=1 // pred_fallthru
      _
    // Predicated region
    $region14: #{mask_aligned_reid_forward.2} parent=1 // pred_check
      _
    $region15: #{mask_aligned_reid_forward.2} parent=1 // pred_check_branch
      %31 = sbr.rel (0) target = $region17
    $region16: #{mask_aligned_reid_forward.2} parent=1 // pred_region
      %33 = dma.done [#allocation3], 64
    $region17: #{mask_aligned_reid_forward.2} parent=1 // pred_fallthru
      _
    // Predicated region
    $region18: #{mask_aligned_reid_forward.2} parent=1 // pred_check
      _
    $region19: #{mask_aligned_reid_forward.2} parent=1 // pred_check_branch
      %35 = sbr.rel (0) target = $region21
    $region20: #{mask_aligned_reid_forward.2} parent=1 // pred_region
      %37 = dma.done [#allocation5], 16
    $region21: #{mask_aligned_reid_forward.2} parent=1 // pred_fallthru
      _
    %38 = sfence
    %v39 = vld [vmem:[%s0] sm:$0xff]
    %s40 = scalar_lea.vmem %s0, 8
    %v41 = vld [vmem:[%s40] sm:$0xff]
    %s42 = scalar_lea.vmem %s0, 16
    %v43 = vld [vmem:[%s42] sm:$0xff]
    %s44 = sld [smem:[#allocation2 + $0xf]]
    %v45 = vstv %s44
    %v46 = vmul.f32 %v45, %v39
    %s47 = sld [smem:[#allocation2 + $0x8f]]
    %v48 = vstv %s47
    %v49 = vmul.f32 %v48, %v41
    %v50 = vadd.f32 %v46, %v49
    %s51 = sld [smem:[#allocation2 + $0x10f]]
    %v52 = vstv %s51
    %v53 = vmul.f32 %v52, %v43
    %v54 = vadd.f32 %v50, %v53
    %s55 = sld [smem:[#allocation4 + $0xf]]
    %v56 = vstv %s55
    %v57 = vadd.f32 %v54, %v56
    %s58 = sld [smem:[#allocation2]]
    %v59 = vstv %s58
    %v60 = vmul.f32 %v59, %v39
    %s61 = sld [smem:[#allocation2 + $0x80]]
    %v62 = vstv %s61
    %v63 = vmul.f32 %v62, %v41
    %v64 = vadd.f32 %v60, %v63
    %s65 = sld [smem:[#allocation2 + $0x100]]
    %v66 = vstv %s65
    %v67 = vmul.f32 %v66, %v43
    %v68 = vadd.f32 %v64, %v67
    %s69 = sld [smem:[#allocation4]]
    %v70 = vstv %s69
    %v71 = vadd.f32 %v68, %v70
    %v72 = vsub.f32 %v71, %v57
    %v73 = vmin.f32 %v72, 80.0
    %v74 = vmul.f32 %v73, 1.442695
    %v75 = vpow.pop %v74
    %v76 = vadd.f32 %v75, 0.0
    %s77 = sld [smem:[#allocation2 + $0x1]]
    %v78 = vstv %s77
    %v79 = vmul.f32 %v78, %v39
    %s80 = sld [smem:[#allocation2 + $0x81]]
    %v81 = vstv %s80
    %v82 = vmul.f32 %v81, %v41
    %v83 = vadd.f32 %v79, %v82
    %s84 = sld [smem:[#allocation2 + $0x101]]
    %v85 = vstv %s84
    %v86 = vmul.f32 %v85, %v43
    %v87 = vadd.f32 %v83, %v86
    %s88 = sld [smem:[#allocation4 + $0x1]]
    %v89 = vstv %s88
    %v90 = vadd.f32 %v87, %v89
    %v91 = vsub.f32 %v90, %v57
    %v92 = vmin.f32 %v91, 80.0
    %v93 = vmul.f32 %v92, 1.442695
    %v94 = vpow.pop %v93
    %v95 = vadd.f32 %v76, %v94
    %s96 = sld [smem:[#allocation2 + $0x2]]
    %v97 = vstv %s96
    %v98 = vmul.f32 %v97, %v39
    %s99 = sld [smem:[#allocation2 + $0x82]]
    %v100 = vstv %s99
    %v101 = vmul.f32 %v100, %v41
    %v102 = vadd.f32 %v98, %v101
    %s103 = sld [smem:[#allocation2 + $0x102]]
    %v104 = vstv %s103
    %v105 = vmul.f32 %v104, %v43
    %v106 = vadd.f32 %v102, %v105
    %s107 = sld [smem:[#allocation4 + $0x2]]
    %v108 = vstv %s107
    %v109 = vadd.f32 %v106, %v108
    %v110 = vsub.f32 %v109, %v57
    %v111 = vmin.f32 %v110, 80.0
    %v112 = vmul.f32 %v111, 1.442695
    %v113 = vpow.pop %v112
    %v114 = vadd.f32 %v95, %v113
    %s115 = sld [smem:[#allocation2 + $0x3]]
    %v116 = vstv %s115
    %v117 = vmul.f32 %v116, %v39
    %s118 = sld [smem:[#allocation2 + $0x83]]
    %v119 = vstv %s118
    %v120 = vmul.f32 %v119, %v41
    %v121 = vadd.f32 %v117, %v120
    %s122 = sld [smem:[#allocation2 + $0x103]]
    %v123 = vstv %s122
    %v124 = vmul.f32 %v123, %v43
    %v125 = vadd.f32 %v121, %v124
    %s126 = sld [smem:[#allocation4 + $0x3]]
    %v127 = vstv %s126
    %v128 = vadd.f32 %v125, %v127
    %v129 = vsub.f32 %v128, %v57
    %v130 = vmin.f32 %v129, 80.0
    %v131 = vmul.f32 %v130, 1.442695
    %v132 = vpow.pop %v131
    %v133 = vadd.f32 %v114, %v132
    %s134 = sld [smem:[#allocation2 + $0x4]]
    %v135 = vstv %s134
    %v136 = vmul.f32 %v135, %v39
    %s137 = sld [smem:[#allocation2 + $0x84]]
    %v138 = vstv %s137
    %v139 = vmul.f32 %v138, %v41
    %v140 = vadd.f32 %v136, %v139
    %s141 = sld [smem:[#allocation2 + $0x104]]
    %v142 = vstv %s141
    %v143 = vmul.f32 %v142, %v43
    %v144 = vadd.f32 %v140, %v143
    %s145 = sld [smem:[#allocation4 + $0x4]]
    %v146 = vstv %s145
    %v147 = vadd.f32 %v144, %v146
    %v148 = vsub.f32 %v147, %v57
    %v149 = vmin.f32 %v148, 80.0
    %v150 = vmul.f32 %v149, 1.442695
    %v151 = vpow.pop %v150
    %v152 = vadd.f32 %v133, %v151
    %s153 = sld [smem:[#allocation2 + $0x5]]
    %v154 = vstv %s153
    %v155 = vmul.f32 %v154, %v39
    %s156 = sld [smem:[#allocation2 + $0x85]]
    %v157 = vstv %s156
    %v158 = vmul.f32 %v157, %v41
    %v159 = vadd.f32 %v155, %v158
    %s160 = sld [smem:[#allocation2 + $0x105]]
    %v161 = vstv %s160
    %v162 = vmul.f32 %v161, %v43
    %v163 = vadd.f32 %v159, %v162
    %s164 = sld [smem:[#allocation4 + $0x5]]
    %v165 = vstv %s164
    %v166 = vadd.f32 %v163, %v165
    %v167 = vsub.f32 %v166, %v57
    %v168 = vmin.f32 %v167, 80.0
    %v169 = vmul.f32 %v168, 1.442695
    %v170 = vpow.pop %v169
    %v171 = vadd.f32 %v152, %v170
    %s172 = sld [smem:[#allocation2 + $0x6]]
    %v173 = vstv %s172
    %v174 = vmul.f32 %v173, %v39
    %s175 = sld [smem:[#allocation2 + $0x86]]
    %v176 = vstv %s175
    %v177 = vmul.f32 %v176, %v41
    %v178 = vadd.f32 %v174, %v177
    %s179 = sld [smem:[#allocation2 + $0x106]]
    %v180 = vstv %s179
    %v181 = vmul.f32 %v180, %v43
    %v182 = vadd.f32 %v178, %v181
    %s183 = sld [smem:[#allocation4 + $0x6]]
    %v184 = vstv %s183
    %v185 = vadd.f32 %v182, %v184
    %v186 = vsub.f32 %v185, %v57
    %v187 = vmin.f32 %v186, 80.0
    %v188 = vmul.f32 %v187, 1.442695
    %v189 = vpow.pop %v188
    %v190 = vadd.f32 %v171, %v189
    %s191 = sld [smem:[#allocation2 + $0x7]]
    %v192 = vstv %s191
    %v193 = vmul.f32 %v192, %v39
    %s194 = sld [smem:[#allocation2 + $0x87]]
    %v195 = vstv %s194
    %v196 = vmul.f32 %v195, %v41
    %v197 = vadd.f32 %v193, %v196
    %s198 = sld [smem:[#allocation2 + $0x107]]
    %v199 = vstv %s198
    %v200 = vmul.f32 %v199, %v43
    %v201 = vadd.f32 %v197, %v200
    %s202 = sld [smem:[#allocation4 + $0x7]]
    %v203 = vstv %s202
    %v204 = vadd.f32 %v201, %v203
    %v205 = vsub.f32 %v204, %v57
    %v206 = vmin.f32 %v205, 80.0
    %v207 = vmul.f32 %v206, 1.442695
    %v208 = vpow.pop %v207
    %v209 = vadd.f32 %v190, %v208
    %s210 = sld [smem:[#allocation2 + $0x8]]
    %v211 = vstv %s210
    %v212 = vmul.f32 %v211, %v39
    %s213 = sld [smem:[#allocation2 + $0x88]]
    %v214 = vstv %s213
    %v215 = vmul.f32 %v214, %v41
    %v216 = vadd.f32 %v212, %v215
    %s217 = sld [smem:[#allocation2 + $0x108]]
    %v218 = vstv %s217
    %v219 = vmul.f32 %v218, %v43
    %v220 = vadd.f32 %v216, %v219
    %s221 = sld [smem:[#allocation4 + $0x8]]
    %v222 = vstv %s221
    %v223 = vadd.f32 %v220, %v222
    %v224 = vsub.f32 %v223, %v57
    %v225 = vmin.f32 %v224, 80.0
    %v226 = vmul.f32 %v225, 1.442695
    %v227 = vpow.pop %v226
    %v228 = vadd.f32 %v209, %v227
    %s229 = sld [smem:[#allocation2 + $0x9]]
    %v230 = vstv %s229
    %v231 = vmul.f32 %v230, %v39
    %s232 = sld [smem:[#allocation2 + $0x89]]
    %v233 = vstv %s232
    %v234 = vmul.f32 %v233, %v41
    %v235 = vadd.f32 %v231, %v234
    %s236 = sld [smem:[#allocation2 + $0x109]]
    %v237 = vstv %s236
    %v238 = vmul.f32 %v237, %v43
    %v239 = vadd.f32 %v235, %v238
    %s240 = sld [smem:[#allocation4 + $0x9]]
    %v241 = vstv %s240
    %v242 = vadd.f32 %v239, %v241
    %v243 = vsub.f32 %v242, %v57
    %v244 = vmin.f32 %v243, 80.0
    %v245 = vmul.f32 %v244, 1.442695
    %v246 = vpow.pop %v245
    %v247 = vadd.f32 %v228, %v246
    %s248 = sld [smem:[#allocation2 + $0xa]]
    %v249 = vstv %s248
    %v250 = vmul.f32 %v249, %v39
    %s251 = sld [smem:[#allocation2 + $0x8a]]
    %v252 = vstv %s251
    %v253 = vmul.f32 %v252, %v41
    %v254 = vadd.f32 %v250, %v253
    %s255 = sld [smem:[#allocation2 + $0x10a]]
    %v256 = vstv %s255
    %v257 = vmul.f32 %v256, %v43
    %v258 = vadd.f32 %v254, %v257
    %s259 = sld [smem:[#allocation4 + $0xa]]
    %v260 = vstv %s259
    %v261 = vadd.f32 %v258, %v260
    %v262 = vsub.f32 %v261, %v57
    %v263 = vmin.f32 %v262, 80.0
    %v264 = vmul.f32 %v263, 1.442695
    %v265 = vpow.pop %v264
    %v266 = vadd.f32 %v247, %v265
    %s267 = sld [smem:[#allocation2 + $0xb]]
    %v268 = vstv %s267
    %v269 = vmul.f32 %v268, %v39
    %s270 = sld [smem:[#allocation2 + $0x8b]]
    %v271 = vstv %s270
    %v272 = vmul.f32 %v271, %v41
    %v273 = vadd.f32 %v269, %v272
    %s274 = sld [smem:[#allocation2 + $0x10b]]
    %v275 = vstv %s274
    %v276 = vmul.f32 %v275, %v43
    %v277 = vadd.f32 %v273, %v276
    %s278 = sld [smem:[#allocation4 + $0xb]]
    %v279 = vstv %s278
    %v280 = vadd.f32 %v277, %v279
    %v281 = vsub.f32 %v280, %v57
    %v282 = vmin.f32 %v281, 80.0
    %v283 = vmul.f32 %v282, 1.442695
    %v284 = vpow.pop %v283
    %v285 = vadd.f32 %v266, %v284
    %s286 = sld [smem:[#allocation2 + $0xc]]
    %v287 = vstv %s286
    %v288 = vmul.f32 %v287, %v39
    %s289 = sld [smem:[#allocation2 + $0x8c]]
    %v290 = vstv %s289
    %v291 = vmul.f32 %v290, %v41
    %v292 = vadd.f32 %v288, %v291
    %s293 = sld [smem:[#allocation2 + $0x10c]]
    %v294 = vstv %s293
    %v295 = vmul.f32 %v294, %v43
    %v296 = vadd.f32 %v292, %v295
    %s297 = sld [smem:[#allocation4 + $0xc]]
    %v298 = vstv %s297
    %v299 = vadd.f32 %v296, %v298
    %v300 = vsub.f32 %v299, %v57
    %v301 = vmin.f32 %v300, 80.0
    %v302 = vmul.f32 %v301, 1.442695
    %v303 = vpow.pop %v302
    %v304 = vadd.f32 %v285, %v303
    %s305 = sld [smem:[#allocation2 + $0xd]]
    %v306 = vstv %s305
    %v307 = vmul.f32 %v306, %v39
    %s308 = sld [smem:[#allocation2 + $0x8d]]
    %v309 = vstv %s308
    %v310 = vmul.f32 %v309, %v41
    %v311 = vadd.f32 %v307, %v310
    %s312 = sld [smem:[#allocation2 + $0x10d]]
    %v313 = vstv %s312
    %v314 = vmul.f32 %v313, %v43
    %v315 = vadd.f32 %v311, %v314
    %s316 = sld [smem:[#allocation4 + $0xd]]
    %v317 = vstv %s316
    %v318 = vadd.f32 %v315, %v317
    %v319 = vsub.f32 %v318, %v57
    %v320 = vmin.f32 %v319, 80.0
    %v321 = vmul.f32 %v320, 1.442695
    %v322 = vpow.pop %v321
    %v323 = vadd.f32 %v304, %v322
    %s324 = sld [smem:[#allocation2 + $0xe]]
    %v325 = vstv %s324
    %v326 = vmul.f32 %v325, %v39
    %s327 = sld [smem:[#allocation2 + $0x8e]]
    %v328 = vstv %s327
    %v329 = vmul.f32 %v328, %v41
    %v330 = vadd.f32 %v326, %v329
    %s331 = sld [smem:[#allocation2 + $0x10e]]
    %v332 = vstv %s331
    %v333 = vmul.f32 %v332, %v43
    %v334 = vadd.f32 %v330, %v333
    %s335 = sld [smem:[#allocation4 + $0xe]]
    %v336 = vstv %s335
    %v337 = vadd.f32 %v334, %v336
    %v338 = vsub.f32 %v337, %v57
    %v339 = vmin.f32 %v338, 80.0
    %v340 = vmul.f32 %v339, 1.442695
    %v341 = vpow.pop %v340
    %v342 = vadd.f32 %v323, %v341
    %v343 = vsub.f32 %v57, %v57
    %v344 = vmin.f32 %v343, 80.0
    %v345 = vmul.f32 %v344, 1.442695
    %v346 = vpow.pop %v345
    %v347 = vadd.f32 %v342, %v346
    %s348 = sld [smem:[#allocation2 + $0x10]]
    %v349 = vstv %s348
    %v350 = vmul.f32 %v349, %v39
    %s351 = sld [smem:[#allocation2 + $0x90]]
    %v352 = vstv %s351
    %v353 = vmul.f32 %v352, %v41
    %v354 = vadd.f32 %v350, %v353
    %s355 = sld [smem:[#allocation2 + $0x110]]
    %v356 = vstv %s355
    %v357 = vmul.f32 %v356, %v43
    %v358 = vadd.f32 %v354, %v357
    %s359 = sld [smem:[#allocation4 + $0x10]]
    %v360 = vstv %s359
    %v361 = vadd.f32 %v358, %v360
    %v362 = vsub.f32 %v361, %v57
    %v363 = vmin.f32 %v362, 80.0
    %v364 = vmul.f32 %v363, 1.442695
    %v365 = vpow.pop %v364
    %v366 = vadd.f32 %v347, %v365
    %s367 = sld [smem:[#allocation2 + $0x11]]
    %v368 = vstv %s367
    %v369 = vmul.f32 %v368, %v39
    %s370 = sld [smem:[#allocation2 + $0x91]]
    %v371 = vstv %s370
    %v372 = vmul.f32 %v371, %v41
    %v373 = vadd.f32 %v369, %v372
    %s374 = sld [smem:[#allocation2 + $0x111]]
    %v375 = vstv %s374
    %v376 = vmul.f32 %v375, %v43
    %v377 = vadd.f32 %v373, %v376
    %s378 = sld [smem:[#allocation4 + $0x11]]
    %v379 = vstv %s378
    %v380 = vadd.f32 %v377, %v379
    %v381 = vsub.f32 %v380, %v57
    %v382 = vmin.f32 %v381, 80.0
    %v383 = vmul.f32 %v382, 1.442695
    %v384 = vpow.pop %v383
    %v385 = vadd.f32 %v366, %v384
    %s386 = sld [smem:[#allocation2 + $0x12]]
    %v387 = vstv %s386
    %v388 = vmul.f32 %v387, %v39
    %s389 = sld [smem:[#allocation2 + $0x92]]
    %v390 = vstv %s389
    %v391 = vmul.f32 %v390, %v41
    %v392 = vadd.f32 %v388, %v391
    %s393 = sld [smem:[#allocation2 + $0x112]]
    %v394 = vstv %s393
    %v395 = vmul.f32 %v394, %v43
    %v396 = vadd.f32 %v392, %v395
    %s397 = sld [smem:[#allocation4 + $0x12]]
    %v398 = vstv %s397
    %v399 = vadd.f32 %v396, %v398
    %v400 = vsub.f32 %v399, %v57
    %v401 = vmin.f32 %v400, 80.0
    %v402 = vmul.f32 %v401, 1.442695
    %v403 = vpow.pop %v402
    %v404 = vadd.f32 %v385, %v403
    %s405 = sld [smem:[#allocation2 + $0x13]]
    %v406 = vstv %s405
    %v407 = vmul.f32 %v406, %v39
    %s408 = sld [smem:[#allocation2 + $0x93]]
    %v409 = vstv %s408
    %v410 = vmul.f32 %v409, %v41
    %v411 = vadd.f32 %v407, %v410
    %s412 = sld [smem:[#allocation2 + $0x113]]
    %v413 = vstv %s412
    %v414 = vmul.f32 %v413, %v43
    %v415 = vadd.f32 %v411, %v414
    %s416 = sld [smem:[#allocation4 + $0x13]]
    %v417 = vstv %s416
    %v418 = vadd.f32 %v415, %v417
    %v419 = vsub.f32 %v418, %v57
    %v420 = vmin.f32 %v419, 80.0
    %v421 = vmul.f32 %v420, 1.442695
    %v422 = vpow.pop %v421
    %v423 = vadd.f32 %v404, %v422
    %s424 = sld [smem:[#allocation2 + $0x14]]
    %v425 = vstv %s424
    %v426 = vmul.f32 %v425, %v39
    %s427 = sld [smem:[#allocation2 + $0x94]]
    %v428 = vstv %s427
    %v429 = vmul.f32 %v428, %v41
    %v430 = vadd.f32 %v426, %v429
    %s431 = sld [smem:[#allocation2 + $0x114]]
    %v432 = vstv %s431
    %v433 = vmul.f32 %v432, %v43
    %v434 = vadd.f32 %v430, %v433
    %s435 = sld [smem:[#allocation4 + $0x14]]
    %v436 = vstv %s435
    %v437 = vadd.f32 %v434, %v436
    %v438 = vsub.f32 %v437, %v57
    %v439 = vmin.f32 %v438, 80.0
    %v440 = vmul.f32 %v439, 1.442695
    %v441 = vpow.pop %v440
    %v442 = vadd.f32 %v423, %v441
    %v443 = vrcp.pop %v442
    %v444 = vmul.f32 %v442, %v443
    %v445 = vsub.f32 1.0, %v444
    %v446 = vmul.f32 %v443, %v445
    %v447 = vadd.f32 %v443, %v446
    %vm448 = vweird.f32 %v442
    %vm449 = vweird.f32 %v443
    %vm450 = vmor %vm448, %vm449
    %v451 = vsel %vm450, %v443, %v447
    %v452 = vand.u32 2147483647, %v442
    %vm453 = vcmp.eq.f32.partialorder %v452, 8.507059e+37
    %v454 = vand.u32 %v442, 2147483648
    %v455 = vor.u32 1.1754944e-38, %v454
    %v456 = vsel %vm453, %v455, %v451
    %v457 = vmul.f32 1.0, %v456
    %v458 = vpack.c.bf16 %v457, %v457
    %459 = vst [vmem:[%s3] sm:$0xf] %v458
    // Predicated region
    $region22: #{mask_aligned_reid_forward.2} parent=1 // pred_check
      _
    $region23: #{mask_aligned_reid_forward.2} parent=1 // pred_check_branch
      %461 = sbr.rel (0) target = $region25
    $region24: #{mask_aligned_reid_forward.2} parent=1 // pred_region
      _
    $region25: #{mask_aligned_reid_forward.2} parent=1 // pred_fallthru
      _
    // Predicated region
    $region26: #{mask_aligned_reid_forward.2} parent=1 // pred_check
      _
    $region27: #{mask_aligned_reid_forward.2} parent=1 // pred_check_branch
      %463 = sbr.rel (0) target = $region29
    $region28: #{mask_aligned_reid_forward.2} parent=1 // pred_region
      _
    $region29: #{mask_aligned_reid_forward.2} parent=1 // pred_fallthru
      _
    %464 = vsyncpa [#allocation3], 1
    %465 = vsyncpa [#allocation5], 1

// kernel: mask_aligned_reid_forward.3
$region0: #{mask_aligned_reid_forward.3}
  #allocation0 [shape = 'u32[]', space=smem, size = 0x4, offset = 0x4, fixed_abs, tag = 'smem constant byte address 0x4 - core index']
  #allocation1 [shape = 'u32[72,128]{1,0:T(1,128)}', space=vmem, size = 0x9000, scoped, tag = 'internal scratch']
  %s0 = inlined_call_operand.vmem [shape: bf16[32,512], index: 0, kind: input, shape index: {}]
  %s1 = inlined_call_operand.vmem [shape: bf16[512,2048], index: 1, kind: input, shape index: {}]
  %s2 = inlined_call_operand.vmem [shape: f32[2,1,2048], index: 2, kind: output, shape index: {0}]
  %s3 = inlined_call_operand.hbm [shape: f32[2,4,2048], index: 3, kind: output, shape index: {1}]
  %4 = xla_tuple %s2, %s3
  %s5 = sld [smem:[#allocation0]]
  $region57: #{mask_aligned_reid_forward.3} parent=0
    _
  %s7 = ssub.s32 1, %s5
  %s8 = scalar_select 0, %s7, %s5
  $region1: #{mask_aligned_reid_forward.3} parent=0
    #allocation2 [shape = 'u8[65536]{0}', space=vmem, size = 0x10000, scoped, tag = 'output window, operand 1']
    #allocation3 [shape = 's32[2]{0}', space=sflag, size = 0x8, scoped, tag = 'scoped memory for mask_aligned_reid_forward.3']
    %9 = vsyncpa [#allocation3], 0
    %s10 = scalar_lea.sflag [#allocation3], 1
    %11 = vsyncpa %s10, 0
    loop: start=0, step=1, limit=4
    $region2: #{mask_aligned_reid_forward.3} parent=1 // loop_pre_header
      _
    $region3: #{mask_aligned_reid_forward.3} parent=1 // loop_header
      %s13 = sphi 0, %s17
      %p14 = scmp.ge.s32.totalorder %s13, 4
      %s20 = sphi 0, %s32
      %s21 = sphi 0, %s28
      %s22 = sphi 0, %s20
      %s23 = sphi 0, %s21
      %s24 = sphi 0, %s22
      %s25 = sphi 0, %s23
      %s37 = sphi 0, %s39
      %s40 = sphi 0, %s37
      %s41 = sphi 0, %s40
      %s57 = sphi 0, %s41
      %s61 = sphi 0, %s61
      %s63 = sphi 0, %s61
      %s64 = sphi 0, %s63
      %s78 = sphi 0, %s64
      %s84 = sphi 0, %s86
      %s87 = sphi 0, %s84
      %s88 = sphi 0, %s87
      %s104 = sphi 0, %s88
      %s112 = sphi 0, %s114
      %s115 = sphi 0, %s112
      %s116 = sphi 0, %s115
      %s132 = sphi 0, %s116
    $region4: #{mask_aligned_reid_forward.3} parent=1 // loop_header_branch
      %16 = sbr.rel (%p14) target = $region8
    $region5: #{mask_aligned_reid_forward.3} parent=1 // loop_body
      %s18 = ssub.s32 %s13, 1
      %s19 = ssub.s32 %s13, 2
      %s26 = sadd.s32 1, %s21
      %p27 = scmp.ge.s32.totalorder %s26, 1
      %s28 = scalar_select %p27, 0, %s26
      %s29 = sadd.s32 1, %s20
      %s30 = scalar_select %p27, %s29, %s20
      %p31 = scmp.ge.s32.totalorder %s30, 2
      %s32 = scalar_select %p31, 0, %s30
      %s33 = sadd.s32 %s20, %s21
      %s34 = sadd.s32 %s32, %s28
      %s35 = ssub.s32 %s33, %s34
      %p36 = scmp.eq.s32.totalorder %s35, 0
      %s38 = sadd.s32 %s37, 1
      %s39 = scalar_select %p36, %s37, %s38
      %p42 = pneg %p36
      %p43 = scmp.eq.s32.totalorder %s13, 1
      %p44 = por %p42, %p43
      %p45 = scmp.ne.s32.totalorder %s37, %s40
      %p46 = scmp.eq.s32.totalorder %s13, 0
      %p47 = por %p45, %p46
      %p48 = scmp.ne.s32.totalorder %s37, %s40
      %p49 = scmp.eq.s32.totalorder %s18, 1
      %p50 = por %p48, %p49
      %p51 = scmp.ne.s32.totalorder %s40, %s41
      %p52 = scmp.eq.s32.totalorder %s18, 0
      %p53 = por %p51, %p52
      %p54 = scmp.ne.s32.totalorder %s40, %s41
      %p55 = scmp.eq.s32.totalorder %s19, 1
      %p56 = por %p54, %p55
      %p58 = scmp.ne.s32.totalorder %s41, %s57
      %p59 = scmp.eq.s32.totalorder %s19, 0
      %p60 = por %p58, %p59
      %s62 = sadd.s32 %s61, 1
      %p65 = scmp.eq.s32.totalorder %s13, 1
      %p66 = scmp.ne.s32.totalorder %s61, %s63
      %p67 = scmp.eq.s32.totalorder %s13, 0
      %p68 = por %p66, %p67
      %p69 = scmp.ne.s32.totalorder %s61, %s63
      %p70 = scmp.eq.s32.totalorder %s18, 1
      %p71 = por %p69, %p70
      %p72 = scmp.ne.s32.totalorder %s63, %s64
      %p73 = scmp.eq.s32.totalorder %s18, 0
      %p74 = por %p72, %p73
      %p75 = scmp.ne.s32.totalorder %s63, %s64
      %p76 = scmp.eq.s32.totalorder %s19, 1
      %p77 = por %p75, %p76
      %p79 = scmp.ne.s32.totalorder %s64, %s78
      %p80 = scmp.eq.s32.totalorder %s19, 0
      %p81 = por %p79, %p80
      %s82 = ssub.s32 %s20, %s32
      %p83 = scmp.eq.s32.totalorder %s82, 0
      %s85 = sadd.s32 %s84, 1
      %s86 = scalar_select %p83, %s84, %s85
      %p89 = pneg %p83
      %p90 = scmp.eq.s32.totalorder %s13, 1
      %p91 = por %p89, %p90
      %p92 = scmp.ne.s32.totalorder %s84, %s87
      %p93 = scmp.eq.s32.totalorder %s13, 0
      %p94 = por %p92, %p93
      %p95 = scmp.ne.s32.totalorder %s84, %s87
      %p96 = scmp.eq.s32.totalorder %s18, 1
      %p97 = por %p95, %p96
      %p98 = scmp.ne.s32.totalorder %s87, %s88
      %p99 = scmp.eq.s32.totalorder %s18, 0
      %p100 = por %p98, %p99
      %p101 = scmp.ne.s32.totalorder %s87, %s88
      %p102 = scmp.eq.s32.totalorder %s19, 1
      %p103 = por %p101, %p102
      %p105 = scmp.ne.s32.totalorder %s88, %s104
      %p106 = scmp.eq.s32.totalorder %s19, 0
      %p107 = por %p105, %p106
      %s108 = ssub.s32 %s20, %s32
      %s109 = ssub.s32 %s21, %s28
      %s110 = sor.u32 %s108, %s109
      %p111 = scmp.eq.s32.totalorder %s110, 0
      %s113 = sadd.s32 %s112, 1
      %s114 = scalar_select %p111, %s112, %s113
      %p117 = pneg %p111
      %p118 = scmp.eq.s32.totalorder %s13, 1
      %p119 = por %p117, %p118
      %p120 = scmp.ne.s32.totalorder %s112, %s115
      %p121 = scmp.eq.s32.totalorder %s13, 0
      %p122 = por %p120, %p121
      %p123 = scmp.ne.s32.totalorder %s112, %s115
      %p124 = scmp.eq.s32.totalorder %s18, 1
      %p125 = por %p123, %p124
      %p126 = scmp.ne.s32.totalorder %s115, %s116
      %p127 = scmp.eq.s32.totalorder %s18, 0
      %p128 = por %p126, %p127
      %p129 = scmp.ne.s32.totalorder %s115, %s116
      %p130 = scmp.eq.s32.totalorder %s19, 1
      %p131 = por %p129, %p130
      %p133 = scmp.ne.s32.totalorder %s116, %s132
      %p134 = scmp.eq.s32.totalorder %s19, 0
      %p135 = por %p133, %p134
      %p136 = scmp.le.s32.totalorder 1, %s13
      %p137 = scmp.lt.s32.totalorder %s13, 3
      %p138 = pnand %p136, %p137
      %p139 = pneg %p138
      // Predicated region
      $region9: #{mask_aligned_reid_forward.3} parent=5 // pred_check
        _
      $region10: #{mask_aligned_reid_forward.3} parent=5 // pred_check_branch
        %141 = sbr.rel (%p138) target = $region12
      $region11: #{mask_aligned_reid_forward.3} parent=5 // pred_region
        %s142 = ssub.s32 %s13, 1
        // Predicated region
        $region13: #{mask_aligned_reid_forward.3} parent=11 // pred_check
          %p143 = pneg %p74
        $region14: #{mask_aligned_reid_forward.3} parent=11 // pred_check_branch
          %145 = sbr.rel (%p143) target = $region16
        $region15: #{mask_aligned_reid_forward.3} parent=11 // pred_region
          _
        $region16: #{mask_aligned_reid_forward.3} parent=11 // pred_fallthru
          _
      $region12: #{mask_aligned_reid_forward.3} parent=5 // pred_fallthru
        _
      %p146 = scmp.lt.s32.totalorder %s13, 2
      // Predicated region
      $region17: #{mask_aligned_reid_forward.3} parent=5 // pred_check
        %p147 = pneg %p146
      $region18: #{mask_aligned_reid_forward.3} parent=5 // pred_check_branch
        %149 = sbr.rel (%p147) target = $region20
      $region19: #{mask_aligned_reid_forward.3} parent=5 // pred_region
        // Predicated region
        $region21: #{mask_aligned_reid_forward.3} parent=19 // pred_check
          %p150 = pneg %p47
        $region22: #{mask_aligned_reid_forward.3} parent=19 // pred_check_branch
          %152 = sbr.rel (%p150) target = $region24
        $region23: #{mask_aligned_reid_forward.3} parent=19 // pred_region
          %s153 = sadd.s32 %s20, %s21
          %s154 = smul.u32 2, %s153
          %p155 = scmp.lt.s32.totalorder %s154, 3
          %s156 = scalar_select %p155, %s154, 3
          %s157 = smul.addr %s156, 4
          %s158 = smul.addr %s157, 4
          %s159 = scalar_lea.vmem %s0, %s158
          %s160 = sadd.s32 %s20, %s21
          %s161 = smul.u32 2, %s160
        $region24: #{mask_aligned_reid_forward.3} parent=19 // pred_fallthru
          _
      $region20: #{mask_aligned_reid_forward.3} parent=5 // pred_fallthru
        _
      %p162 = scmp.le.s32.totalorder 1, %s13
      %p163 = scmp.lt.s32.totalorder %s13, 3
      %p164 = pnand %p162, %p163
      %p165 = pneg %p164
      // Predicated region
      $region25: #{mask_aligned_reid_forward.3} parent=5 // pred_check
        _
      $region26: #{mask_aligned_reid_forward.3} parent=5 // pred_check_branch
        %167 = sbr.rel (%p164) target = $region28
      $region27: #{mask_aligned_reid_forward.3} parent=5 // pred_region
        %s168 = ssub.s32 %s13, 1
        %s169 = sadd.s32 %s22, %s23
        %s170 = smul.u32 2, %s169
        %p171 = scmp.lt.s32.totalorder %s170, 3
        %s172 = scalar_select %p171, %s170, 3
        %s173 = smul.addr %s172, 4
        %s174 = smul.addr %s173, 4
        %s175 = scalar_lea.vmem %s0, %s174
        %p176 = pneg %p53
        %p177 = pneg %p50
        %p178 = pneg %p74
        %p179 = pneg %p71
        %p180 = pneg %p100
        %p181 = pneg %p97
        %p182 = scmp.lt.s32.totalorder %s22, 1
        %s183 = scalar_select %p182, %s22, 1
        %s184 = smul.addr %s183, 16
        %s185 = scalar_lea.vmem %s2, %s184
        %p186 = pneg %p128
        %p187 = pneg %p125
        %s188 = sand.u32 %s115, 1
        %s189 = scalar_lea.sflag [#allocation3], %s188
        %s190 = sand.u32 %s115, 1
        %s191 = smul.addr %s190, 64
        %s192 = scalar_lea.vmem [#allocation2], %s191
        %s193 = sadd.s32 %s22, %s23
        %s194 = smul.u32 2, %s193
        %p195 = scmp.lt.s32.totalorder %s194, 3
        %s196 = scalar_select %p195, %s194, 3
        %s197 = smul.addr %s196, 4
        %s198 = smul.addr %s197, 4
        %s199 = scalar_lea.vmem %s0, %s198
        %s200 = sadd.s32 %s22, %s23
        %s201 = smul.u32 2, %s200
        %p202 = scmp.lt.s32.totalorder %s22, 1
        %s203 = scalar_select %p202, %s22, 1
        %s204 = smul.addr %s203, 16
        %s205 = scalar_lea.vmem %s2, %s204
        %v206 = vld [vmem:[%s199] sm:$0xff]
        %v207 = vld [vmem:[%s199 + $0x8] sm:$0xff]
        %v208 = vld [vmem:[%s199 + $0x10] sm:$0xff]
        %v209 = vld [vmem:[%s199 + $0x18] sm:$0xff]
        %v210 = vld [vmem:[%s1] sm:$0xff]
        %v211 = vld [vmem:[%s1 + $0x8] sm:$0xff]
        %v212 = vld [vmem:[%s1 + $0x10] sm:$0xff]
        %v213 = vld [vmem:[%s1 + $0x18] sm:$0xff]
        %v214 = vld [vmem:[%s1 + $0x20] sm:$0xff]
        %v215 = vld [vmem:[%s1 + $0x28] sm:$0xff]
        %v216 = vld [vmem:[%s1 + $0x30] sm:$0xff]
        %v217 = vld [vmem:[%s1 + $0x38] sm:$0xff]
        %v218 = vld [vmem:[%s1 + $0x40] sm:$0xff]
        %v219 = vld [vmem:[%s1 + $0x48] sm:$0xff]
        %v220 = vld [vmem:[%s1 + $0x50] sm:$0xff]
        %v221 = vld [vmem:[%s1 + $0x58] sm:$0xff]
        %v222 = vld [vmem:[%s1 + $0x60] sm:$0xff]
        %v223 = vld [vmem:[%s1 + $0x68] sm:$0xff]
        %v224 = vld [vmem:[%s1 + $0x70] sm:$0xff]
        %v225 = vld [vmem:[%s1 + $0x78] sm:$0xff]
        %v226 = vld [vmem:[%s1 + $0x80] sm:$0xff]
        %v227 = vld [vmem:[%s1 + $0x88] sm:$0xff]
        %v228 = vld [vmem:[%s1 + $0x90] sm:$0xff]
        %v229 = vld [vmem:[%s1 + $0x98] sm:$0xff]
        %v230 = vld [vmem:[%s1 + $0xa0] sm:$0xff]
        %v231 = vld [vmem:[%s1 + $0xa8] sm:$0xff]
        %v232 = vld [vmem:[%s1 + $0xb0] sm:$0xff]
        %v233 = vld [vmem:[%s1 + $0xb8] sm:$0xff]
        %v234 = vld [vmem:[%s1 + $0xc0] sm:$0xff]
        %v235 = vld [vmem:[%s1 + $0xc8] sm:$0xff]
        %v236 = vld [vmem:[%s1 + $0xd0] sm:$0xff]
        %v237 = vld [vmem:[%s1 + $0xd8] sm:$0xff]
        %v238 = vld [vmem:[%s1 + $0xe0] sm:$0xff]
        %v239 = vld [vmem:[%s1 + $0xe8] sm:$0xff]
        %v240 = vld [vmem:[%s1 + $0xf0] sm:$0xff]
        %v241 = vld [vmem:[%s1 + $0xf8] sm:$0xff]
        %v242 = vld [vmem:[%s1 + $0x100] sm:$0xff]
        %v243 = vld [vmem:[%s1 + $0x108] sm:$0xff]
        %v244 = vld [vmem:[%s1 + $0x110] sm:$0xff]
        %v245 = vld [vmem:[%s1 + $0x118] sm:$0xff]
        %v246 = vld [vmem:[%s1 + $0x120] sm:$0xff]
        %v247 = vld [vmem:[%s1 + $0x128] sm:$0xff]
        %v248 = vld [vmem:[%s1 + $0x130] sm:$0xff]
        %v249 = vld [vmem:[%s1 + $0x138] sm:$0xff]
        %v250 = vld [vmem:[%s1 + $0x140] sm:$0xff]
        %v251 = vld [vmem:[%s1 + $0x148] sm:$0xff]
        %v252 = vld [vmem:[%s1 + $0x150] sm:$0xff]
        %v253 = vld [vmem:[%s1 + $0x158] sm:$0xff]
        %v254 = vld [vmem:[%s1 + $0x160] sm:$0xff]
        %v255 = vld [vmem:[%s1 + $0x168] sm:$0xff]
        %v256 = vld [vmem:[%s1 + $0x170] sm:$0xff]
        %v257 = vld [vmem:[%s1 + $0x178] sm:$0xff]
        %v258 = vld [vmem:[%s1 + $0x180] sm:$0xff]
        %v259 = vld [vmem:[%s1 + $0x188] sm:$0xff]
        %v260 = vld [vmem:[%s1 + $0x190] sm:$0xff]
        %v261 = vld [vmem:[%s1 + $0x198] sm:$0xff]
        %v262 = vld [vmem:[%s1 + $0x1a0] sm:$0xff]
        %v263 = vld [vmem:[%s1 + $0x1a8] sm:$0xff]
        %v264 = vld [vmem:[%s1 + $0x1b0] sm:$0xff]
        %v265 = vld [vmem:[%s1 + $0x1b8] sm:$0xff]
        %v266 = vld [vmem:[%s1 + $0x1c0] sm:$0xff]
        %v267 = vld [vmem:[%s1 + $0x1c8] sm:$0xff]
        %v268 = vld [vmem:[%s1 + $0x1d0] sm:$0xff]
        %v269 = vld [vmem:[%s1 + $0x1d8] sm:$0xff]
        %v270 = vld [vmem:[%s1 + $0x1e0] sm:$0xff]
        %v271 = vld [vmem:[%s1 + $0x1e8] sm:$0xff]
        %v272 = vld [vmem:[%s1 + $0x1f0] sm:$0xff]
        %v273 = vld [vmem:[%s1 + $0x1f8] sm:$0xff]
        %v274 = vld [vmem:[%s1 + $0x200] sm:$0xff]
        %v275 = vld [vmem:[%s1 + $0x208] sm:$0xff]
        %v276 = vld [vmem:[%s1 + $0x210] sm:$0xff]
        %v277 = vld [vmem:[%s1 + $0x218] sm:$0xff]
        %v278 = vld [vmem:[%s1 + $0x220] sm:$0xff]
        %v279 = vld [vmem:[%s1 + $0x228] sm:$0xff]
        %v280 = vld [vmem:[%s1 + $0x230] sm:$0xff]
        %v281 = vld [vmem:[%s1 + $0x238] sm:$0xff]
        %v282 = vld [vmem:[%s1 + $0x240] sm:$0xff]
        %v283 = vld [vmem:[%s1 + $0x248] sm:$0xff]
        %v284 = vld [vmem:[%s1 + $0x250] sm:$0xff]
        %v285 = vld [vmem:[%s1 + $0x258] sm:$0xff]
        %v286 = vld [vmem:[%s1 + $0x260] sm:$0xff]
        %v287 = vld [vmem:[%s1 + $0x268] sm:$0xff]
        %v288 = vld [vmem:[%s1 + $0x270] sm:$0xff]
        %v289 = vld [vmem:[%s1 + $0x278] sm:$0xff]
        %v290 = vld [vmem:[%s1 + $0x280] sm:$0xff]
        %v291 = vld [vmem:[%s1 + $0x288] sm:$0xff]
        %v292 = vld [vmem:[%s1 + $0x290] sm:$0xff]
        %v293 = vld [vmem:[%s1 + $0x298] sm:$0xff]
        %v294 = vld [vmem:[%s1 + $0x2a0] sm:$0xff]
        %v295 = vld [vmem:[%s1 + $0x2a8] sm:$0xff]
        %v296 = vld [vmem:[%s1 + $0x2b0] sm:$0xff]
        %v297 = vld [vmem:[%s1 + $0x2b8] sm:$0xff]
        %v298 = vld [vmem:[%s1 + $0x2c0] sm:$0xff]
        %v299 = vld [vmem:[%s1 + $0x2c8] sm:$0xff]
        %v300 = vld [vmem:[%s1 + $0x2d0] sm:$0xff]
        %v301 = vld [vmem:[%s1 + $0x2d8] sm:$0xff]
        %v302 = vld [vmem:[%s1 + $0x2e0] sm:$0xff]
        %v303 = vld [vmem:[%s1 + $0x2e8] sm:$0xff]
        %v304 = vld [vmem:[%s1 + $0x2f0] sm:$0xff]
        %v305 = vld [vmem:[%s1 + $0x2f8] sm:$0xff]
        %v306 = vld [vmem:[%s1 + $0x300] sm:$0xff]
        %v307 = vld [vmem:[%s1 + $0x308] sm:$0xff]
        %v308 = vld [vmem:[%s1 + $0x310] sm:$0xff]
        %v309 = vld [vmem:[%s1 + $0x318] sm:$0xff]
        %v310 = vld [vmem:[%s1 + $0x320] sm:$0xff]
        %v311 = vld [vmem:[%s1 + $0x328] sm:$0xff]
        %v312 = vld [vmem:[%s1 + $0x330] sm:$0xff]
        %v313 = vld [vmem:[%s1 + $0x338] sm:$0xff]
        %v314 = vld [vmem:[%s1 + $0x340] sm:$0xff]
        %v315 = vld [vmem:[%s1 + $0x348] sm:$0xff]
        %v316 = vld [vmem:[%s1 + $0x350] sm:$0xff]
        %v317 = vld [vmem:[%s1 + $0x358] sm:$0xff]
        %v318 = vld [vmem:[%s1 + $0x360] sm:$0xff]
        %v319 = vld [vmem:[%s1 + $0x368] sm:$0xff]
        %v320 = vld [vmem:[%s1 + $0x370] sm:$0xff]
        %v321 = vld [vmem:[%s1 + $0x378] sm:$0xff]
        %v322 = vld [vmem:[%s1 + $0x380] sm:$0xff]
        %v323 = vld [vmem:[%s1 + $0x388] sm:$0xff]
        %v324 = vld [vmem:[%s1 + $0x390] sm:$0xff]
        %v325 = vld [vmem:[%s1 + $0x398] sm:$0xff]
        %v326 = vld [vmem:[%s1 + $0x3a0] sm:$0xff]
        %v327 = vld [vmem:[%s1 + $0x3a8] sm:$0xff]
        %v328 = vld [vmem:[%s1 + $0x3b0] sm:$0xff]
        %v329 = vld [vmem:[%s1 + $0x3b8] sm:$0xff]
        %v330 = vld [vmem:[%s1 + $0x3c0] sm:$0xff]
        %v331 = vld [vmem:[%s1 + $0x3c8] sm:$0xff]
        %v332 = vld [vmem:[%s1 + $0x3d0] sm:$0xff]
        %v333 = vld [vmem:[%s1 + $0x3d8] sm:$0xff]
        %v334 = vld [vmem:[%s1 + $0x3e0] sm:$0xff]
        %v335 = vld [vmem:[%s1 + $0x3e8] sm:$0xff]
        %v336 = vld [vmem:[%s1 + $0x3f0] sm:$0xff]
        %v337 = vld [vmem:[%s1 + $0x3f8] sm:$0xff]
        %v338 = vld [vmem:[%s1 + $0x400] sm:$0xff]
        %v339 = vld [vmem:[%s1 + $0x408] sm:$0xff]
        %v340 = vld [vmem:[%s1 + $0x410] sm:$0xff]
        %v341 = vld [vmem:[%s1 + $0x418] sm:$0xff]
        %v342 = vld [vmem:[%s1 + $0x420] sm:$0xff]
        %v343 = vld [vmem:[%s1 + $0x428] sm:$0xff]
        %v344 = vld [vmem:[%s1 + $0x430] sm:$0xff]
        %v345 = vld [vmem:[%s1 + $0x438] sm:$0xff]
        %v346 = vld [vmem:[%s1 + $0x440] sm:$0xff]
        %v347 = vld [vmem:[%s1 + $0x448] sm:$0xff]
        %v348 = vld [vmem:[%s1 + $0x450] sm:$0xff]
        %v349 = vld [vmem:[%s1 + $0x458] sm:$0xff]
        %v350 = vld [vmem:[%s1 + $0x460] sm:$0xff]
        %v351 = vld [vmem:[%s1 + $0x468] sm:$0xff]
        %v352 = vld [vmem:[%s1 + $0x470] sm:$0xff]
        %v353 = vld [vmem:[%s1 + $0x478] sm:$0xff]
        %v354 = vld [vmem:[%s1 + $0x480] sm:$0xff]
        %v355 = vld [vmem:[%s1 + $0x488] sm:$0xff]
        %v356 = vld [vmem:[%s1 + $0x490] sm:$0xff]
        %v357 = vld [vmem:[%s1 + $0x498] sm:$0xff]
        %v358 = vld [vmem:[%s1 + $0x4a0] sm:$0xff]
        %v359 = vld [vmem:[%s1 + $0x4a8] sm:$0xff]
        %v360 = vld [vmem:[%s1 + $0x4b0] sm:$0xff]
        %v361 = vld [vmem:[%s1 + $0x4b8] sm:$0xff]
        %v362 = vld [vmem:[%s1 + $0x4c0] sm:$0xff]
        %v363 = vld [vmem:[%s1 + $0x4c8] sm:$0xff]
        %v364 = vld [vmem:[%s1 + $0x4d0] sm:$0xff]
        %v365 = vld [vmem:[%s1 + $0x4d8] sm:$0xff]
        %v366 = vld [vmem:[%s1 + $0x4e0] sm:$0xff]
        %v367 = vld [vmem:[%s1 + $0x4e8] sm:$0xff]
        %v368 = vld [vmem:[%s1 + $0x4f0] sm:$0xff]
        %v369 = vld [vmem:[%s1 + $0x4f8] sm:$0xff]
        %v370 = vld [vmem:[%s1 + $0x500] sm:$0xff]
        %v371 = vld [vmem:[%s1 + $0x508] sm:$0xff]
        %v372 = vld [vmem:[%s1 + $0x510] sm:$0xff]
        %v373 = vld [vmem:[%s1 + $0x518] sm:$0xff]
        %v374 = vld [vmem:[%s1 + $0x520] sm:$0xff]
        %v375 = vld [vmem:[%s1 + $0x528] sm:$0xff]
        %v376 = vld [vmem:[%s1 + $0x530] sm:$0xff]
        %v377 = vld [vmem:[%s1 + $0x538] sm:$0xff]
        %v378 = vld [vmem:[%s1 + $0x540] sm:$0xff]
        %v379 = vld [vmem:[%s1 + $0x548] sm:$0xff]
        %v380 = vld [vmem:[%s1 + $0x550] sm:$0xff]
        %v381 = vld [vmem:[%s1 + $0x558] sm:$0xff]
        %v382 = vld [vmem:[%s1 + $0x560] sm:$0xff]
        %v383 = vld [vmem:[%s1 + $0x568] sm:$0xff]
        %v384 = vld [vmem:[%s1 + $0x570] sm:$0xff]
        %v385 = vld [vmem:[%s1 + $0x578] sm:$0xff]
        %v386 = vld [vmem:[%s1 + $0x580] sm:$0xff]
        %v387 = vld [vmem:[%s1 + $0x588] sm:$0xff]
        %v388 = vld [vmem:[%s1 + $0x590] sm:$0xff]
        %v389 = vld [vmem:[%s1 + $0x598] sm:$0xff]
        %v390 = vld [vmem:[%s1 + $0x5a0] sm:$0xff]
        %v391 = vld [vmem:[%s1 + $0x5a8] sm:$0xff]
        %v392 = vld [vmem:[%s1 + $0x5b0] sm:$0xff]
        %v393 = vld [vmem:[%s1 + $0x5b8] sm:$0xff]
        %v394 = vld [vmem:[%s1 + $0x5c0] sm:$0xff]
        %v395 = vld [vmem:[%s1 + $0x5c8] sm:$0xff]
        %v396 = vld [vmem:[%s1 + $0x5d0] sm:$0xff]
        %v397 = vld [vmem:[%s1 + $0x5d8] sm:$0xff]
        %v398 = vld [vmem:[%s1 + $0x5e0] sm:$0xff]
        %v399 = vld [vmem:[%s1 + $0x5e8] sm:$0xff]
        %v400 = vld [vmem:[%s1 + $0x5f0] sm:$0xff]
        %v401 = vld [vmem:[%s1 + $0x5f8] sm:$0xff]
        %v402 = vld [vmem:[%s1 + $0x600] sm:$0xff]
        %v403 = vld [vmem:[%s1 + $0x608] sm:$0xff]
        %v404 = vld [vmem:[%s1 + $0x610] sm:$0xff]
        %v405 = vld [vmem:[%s1 + $0x618] sm:$0xff]
        %v406 = vld [vmem:[%s1 + $0x620] sm:$0xff]
        %v407 = vld [vmem:[%s1 + $0x628] sm:$0xff]
        %v408 = vld [vmem:[%s1 + $0x630] sm:$0xff]
        %v409 = vld [vmem:[%s1 + $0x638] sm:$0xff]
        %v410 = vld [vmem:[%s1 + $0x640] sm:$0xff]
        %v411 = vld [vmem:[%s1 + $0x648] sm:$0xff]
        %v412 = vld [vmem:[%s1 + $0x650] sm:$0xff]
        %v413 = vld [vmem:[%s1 + $0x658] sm:$0xff]
        %v414 = vld [vmem:[%s1 + $0x660] sm:$0xff]
        %v415 = vld [vmem:[%s1 + $0x668] sm:$0xff]
        %v416 = vld [vmem:[%s1 + $0x670] sm:$0xff]
        %v417 = vld [vmem:[%s1 + $0x678] sm:$0xff]
        %v418 = vld [vmem:[%s1 + $0x680] sm:$0xff]
        %v419 = vld [vmem:[%s1 + $0x688] sm:$0xff]
        %v420 = vld [vmem:[%s1 + $0x690] sm:$0xff]
        %v421 = vld [vmem:[%s1 + $0x698] sm:$0xff]
        %v422 = vld [vmem:[%s1 + $0x6a0] sm:$0xff]
        %v423 = vld [vmem:[%s1 + $0x6a8] sm:$0xff]
        %v424 = vld [vmem:[%s1 + $0x6b0] sm:$0xff]
        %v425 = vld [vmem:[%s1 + $0x6b8] sm:$0xff]
        %v426 = vld [vmem:[%s1 + $0x6c0] sm:$0xff]
        %v427 = vld [vmem:[%s1 + $0x6c8] sm:$0xff]
        %v428 = vld [vmem:[%s1 + $0x6d0] sm:$0xff]
        %v429 = vld [vmem:[%s1 + $0x6d8] sm:$0xff]
        %v430 = vld [vmem:[%s1 + $0x6e0] sm:$0xff]
        %v431 = vld [vmem:[%s1 + $0x6e8] sm:$0xff]
        %v432 = vld [vmem:[%s1 + $0x6f0] sm:$0xff]
        %v433 = vld [vmem:[%s1 + $0x6f8] sm:$0xff]
        %v434 = vld [vmem:[%s1 + $0x700] sm:$0xff]
        %v435 = vld [vmem:[%s1 + $0x708] sm:$0xff]
        %v436 = vld [vmem:[%s1 + $0x710] sm:$0xff]
        %v437 = vld [vmem:[%s1 + $0x718] sm:$0xff]
        %v438 = vld [vmem:[%s1 + $0x720] sm:$0xff]
        %v439 = vld [vmem:[%s1 + $0x728] sm:$0xff]
        %v440 = vld [vmem:[%s1 + $0x730] sm:$0xff]
        %v441 = vld [vmem:[%s1 + $0x738] sm:$0xff]
        %v442 = vld [vmem:[%s1 + $0x740] sm:$0xff]
        %v443 = vld [vmem:[%s1 + $0x748] sm:$0xff]
        %v444 = vld [vmem:[%s1 + $0x750] sm:$0xff]
        %v445 = vld [vmem:[%s1 + $0x758] sm:$0xff]
        %v446 = vld [vmem:[%s1 + $0x760] sm:$0xff]
        %v447 = vld [vmem:[%s1 + $0x768] sm:$0xff]
        %v448 = vld [vmem:[%s1 + $0x770] sm:$0xff]
        %v449 = vld [vmem:[%s1 + $0x778] sm:$0xff]
        %v450 = vld [vmem:[%s1 + $0x780] sm:$0xff]
        %v451 = vld [vmem:[%s1 + $0x788] sm:$0xff]
        %v452 = vld [vmem:[%s1 + $0x790] sm:$0xff]
        %v453 = vld [vmem:[%s1 + $0x798] sm:$0xff]
        %v454 = vld [vmem:[%s1 + $0x7a0] sm:$0xff]
        %v455 = vld [vmem:[%s1 + $0x7a8] sm:$0xff]
        %v456 = vld [vmem:[%s1 + $0x7b0] sm:$0xff]
        %v457 = vld [vmem:[%s1 + $0x7b8] sm:$0xff]
        %v458 = vld [vmem:[%s1 + $0x7c0] sm:$0xff]
        %v459 = vld [vmem:[%s1 + $0x7c8] sm:$0xff]
        %v460 = vld [vmem:[%s1 + $0x7d0] sm:$0xff]
        %v461 = vld [vmem:[%s1 + $0x7d8] sm:$0xff]
        %v462 = vld [vmem:[%s1 + $0x7e0] sm:$0xff]
        %v463 = vld [vmem:[%s1 + $0x7e8] sm:$0xff]
        %v464 = vld [vmem:[%s1 + $0x7f0] sm:$0xff]
        %v465 = vld [vmem:[%s1 + $0x7f8] sm:$0xff]
        %v466 = vld [vmem:[%s1 + $0x800] sm:$0xff]
        %v467 = vld [vmem:[%s1 + $0x808] sm:$0xff]
        %v468 = vld [vmem:[%s1 + $0x810] sm:$0xff]
        %v469 = vld [vmem:[%s1 + $0x818] sm:$0xff]
        %v470 = vld [vmem:[%s1 + $0x820] sm:$0xff]
        %v471 = vld [vmem:[%s1 + $0x828] sm:$0xff]
        %v472 = vld [vmem:[%s1 + $0x830] sm:$0xff]
        %v473 = vld [vmem:[%s1 + $0x838] sm:$0xff]
        %v474 = vld [vmem:[%s1 + $0x840] sm:$0xff]
        %v475 = vld [vmem:[%s1 + $0x848] sm:$0xff]
        %v476 = vld [vmem:[%s1 + $0x850] sm:$0xff]
        %v477 = vld [vmem:[%s1 + $0x858] sm:$0xff]
        %v478 = vld [vmem:[%s1 + $0x860] sm:$0xff]
        %v479 = vld [vmem:[%s1 + $0x868] sm:$0xff]
        %v480 = vld [vmem:[%s1 + $0x870] sm:$0xff]
        %v481 = vld [vmem:[%s1 + $0x878] sm:$0xff]
        %v482 = vld [vmem:[%s1 + $0x880] sm:$0xff]
        %v483 = vld [vmem:[%s1 + $0x888] sm:$0xff]
        %v484 = vld [vmem:[%s1 + $0x890] sm:$0xff]
        %v485 = vld [vmem:[%s1 + $0x898] sm:$0xff]
        %v486 = vld [vmem:[%s1 + $0x8a0] sm:$0xff]
        %v487 = vld [vmem:[%s1 + $0x8a8] sm:$0xff]
        %v488 = vld [vmem:[%s1 + $0x8b0] sm:$0xff]
        %v489 = vld [vmem:[%s1 + $0x8b8] sm:$0xff]
        %v490 = vld [vmem:[%s1 + $0x8c0] sm:$0xff]
        %v491 = vld [vmem:[%s1 + $0x8c8] sm:$0xff]
        %v492 = vld [vmem:[%s1 + $0x8d0] sm:$0xff]
        %v493 = vld [vmem:[%s1 + $0x8d8] sm:$0xff]
        %v494 = vld [vmem:[%s1 + $0x8e0] sm:$0xff]
        %v495 = vld [vmem:[%s1 + $0x8e8] sm:$0xff]
        %v496 = vld [vmem:[%s1 + $0x8f0] sm:$0xff]
        %v497 = vld [vmem:[%s1 + $0x8f8] sm:$0xff]
        %v498 = vld [vmem:[%s1 + $0x900] sm:$0xff]
        %v499 = vld [vmem:[%s1 + $0x908] sm:$0xff]
        %v500 = vld [vmem:[%s1 + $0x910] sm:$0xff]
        %v501 = vld [vmem:[%s1 + $0x918] sm:$0xff]
        %v502 = vld [vmem:[%s1 + $0x920] sm:$0xff]
        %v503 = vld [vmem:[%s1 + $0x928] sm:$0xff]
        %v504 = vld [vmem:[%s1 + $0x930] sm:$0xff]
        %v505 = vld [vmem:[%s1 + $0x938] sm:$0xff]
        %v506 = vld [vmem:[%s1 + $0x940] sm:$0xff]
        %v507 = vld [vmem:[%s1 + $0x948] sm:$0xff]
        %v508 = vld [vmem:[%s1 + $0x950] sm:$0xff]
        %v509 = vld [vmem:[%s1 + $0x958] sm:$0xff]
        %v510 = vld [vmem:[%s1 + $0x960] sm:$0xff]
        %v511 = vld [vmem:[%s1 + $0x968] sm:$0xff]
        %v512 = vld [vmem:[%s1 + $0x970] sm:$0xff]
        %v513 = vld [vmem:[%s1 + $0x978] sm:$0xff]
        %v514 = vld [vmem:[%s1 + $0x980] sm:$0xff]
        %v515 = vld [vmem:[%s1 + $0x988] sm:$0xff]
        %v516 = vld [vmem:[%s1 + $0x990] sm:$0xff]
        %v517 = vld [vmem:[%s1 + $0x998] sm:$0xff]
        %v518 = vld [vmem:[%s1 + $0x9a0] sm:$0xff]
        %v519 = vld [vmem:[%s1 + $0x9a8] sm:$0xff]
        %v520 = vld [vmem:[%s1 + $0x9b0] sm:$0xff]
        %v521 = vld [vmem:[%s1 + $0x9b8] sm:$0xff]
        %v522 = vld [vmem:[%s1 + $0x9c0] sm:$0xff]
        %v523 = vld [vmem:[%s1 + $0x9c8] sm:$0xff]
        %v524 = vld [vmem:[%s1 + $0x9d0] sm:$0xff]
        %v525 = vld [vmem:[%s1 + $0x9d8] sm:$0xff]
        %v526 = vld [vmem:[%s1 + $0x9e0] sm:$0xff]
        %v527 = vld [vmem:[%s1 + $0x9e8] sm:$0xff]
        %v528 = vld [vmem:[%s1 + $0x9f0] sm:$0xff]
        %v529 = vld [vmem:[%s1 + $0x9f8] sm:$0xff]
        %v530 = vld [vmem:[%s1 + $0xa00] sm:$0xff]
        %v531 = vld [vmem:[%s1 + $0xa08] sm:$0xff]
        %v532 = vld [vmem:[%s1 + $0xa10] sm:$0xff]
        %v533 = vld [vmem:[%s1 + $0xa18] sm:$0xff]
        %v534 = vld [vmem:[%s1 + $0xa20] sm:$0xff]
        %v535 = vld [vmem:[%s1 + $0xa28] sm:$0xff]
        %v536 = vld [vmem:[%s1 + $0xa30] sm:$0xff]
        %v537 = vld [vmem:[%s1 + $0xa38] sm:$0xff]
        %v538 = vld [vmem:[%s1 + $0xa40] sm:$0xff]
        %v539 = vld [vmem:[%s1 + $0xa48] sm:$0xff]
        %v540 = vld [vmem:[%s1 + $0xa50] sm:$0xff]
        %v541 = vld [vmem:[%s1 + $0xa58] sm:$0xff]
        %v542 = vld [vmem:[%s1 + $0xa60] sm:$0xff]
        %v543 = vld [vmem:[%s1 + $0xa68] sm:$0xff]
        %v544 = vld [vmem:[%s1 + $0xa70] sm:$0xff]
        %v545 = vld [vmem:[%s1 + $0xa78] sm:$0xff]
        %v546 = vld [vmem:[%s1 + $0xa80] sm:$0xff]
        %v547 = vld [vmem:[%s1 + $0xa88] sm:$0xff]
        %v548 = vld [vmem:[%s1 + $0xa90] sm:$0xff]
        %v549 = vld [vmem:[%s1 + $0xa98] sm:$0xff]
        %v550 = vld [vmem:[%s1 + $0xaa0] sm:$0xff]
        %v551 = vld [vmem:[%s1 + $0xaa8] sm:$0xff]
        %v552 = vld [vmem:[%s1 + $0xab0] sm:$0xff]
        %v553 = vld [vmem:[%s1 + $0xab8] sm:$0xff]
        %v554 = vld [vmem:[%s1 + $0xac0] sm:$0xff]
        %v555 = vld [vmem:[%s1 + $0xac8] sm:$0xff]
        %v556 = vld [vmem:[%s1 + $0xad0] sm:$0xff]
        %v557 = vld [vmem:[%s1 + $0xad8] sm:$0xff]
        %v558 = vld [vmem:[%s1 + $0xae0] sm:$0xff]
        %v559 = vld [vmem:[%s1 + $0xae8] sm:$0xff]
        %v560 = vld [vmem:[%s1 + $0xaf0] sm:$0xff]
        %v561 = vld [vmem:[%s1 + $0xaf8] sm:$0xff]
        %v562 = vld [vmem:[%s1 + $0xb00] sm:$0xff]
        %v563 = vld [vmem:[%s1 + $0xb08] sm:$0xff]
        %v564 = vld [vmem:[%s1 + $0xb10] sm:$0xff]
        %v565 = vld [vmem:[%s1 + $0xb18] sm:$0xff]
        %v566 = vld [vmem:[%s1 + $0xb20] sm:$0xff]
        %v567 = vld [vmem:[%s1 + $0xb28] sm:$0xff]
        %v568 = vld [vmem:[%s1 + $0xb30] sm:$0xff]
        %v569 = vld [vmem:[%s1 + $0xb38] sm:$0xff]
        %v570 = vld [vmem:[%s1 + $0xb40] sm:$0xff]
        %v571 = vld [vmem:[%s1 + $0xb48] sm:$0xff]
        %v572 = vld [vmem:[%s1 + $0xb50] sm:$0xff]
        %v573 = vld [vmem:[%s1 + $0xb58] sm:$0xff]
        %v574 = vld [vmem:[%s1 + $0xb60] sm:$0xff]
        %v575 = vld [vmem:[%s1 + $0xb68] sm:$0xff]
        %v576 = vld [vmem:[%s1 + $0xb70] sm:$0xff]
        %v577 = vld [vmem:[%s1 + $0xb78] sm:$0xff]
        %v578 = vld [vmem:[%s1 + $0xb80] sm:$0xff]
        %v579 = vld [vmem:[%s1 + $0xb88] sm:$0xff]
        %v580 = vld [vmem:[%s1 + $0xb90] sm:$0xff]
        %v581 = vld [vmem:[%s1 + $0xb98] sm:$0xff]
        %v582 = vld [vmem:[%s1 + $0xba0] sm:$0xff]
        %v583 = vld [vmem:[%s1 + $0xba8] sm:$0xff]
        %v584 = vld [vmem:[%s1 + $0xbb0] sm:$0xff]
        %v585 = vld [vmem:[%s1 + $0xbb8] sm:$0xff]
        %v586 = vld [vmem:[%s1 + $0xbc0] sm:$0xff]
        %v587 = vld [vmem:[%s1 + $0xbc8] sm:$0xff]
        %v588 = vld [vmem:[%s1 + $0xbd0] sm:$0xff]
        %v589 = vld [vmem:[%s1 + $0xbd8] sm:$0xff]
        %v590 = vld [vmem:[%s1 + $0xbe0] sm:$0xff]
        %v591 = vld [vmem:[%s1 + $0xbe8] sm:$0xff]
        %v592 = vld [vmem:[%s1 + $0xbf0] sm:$0xff]
        %v593 = vld [vmem:[%s1 + $0xbf8] sm:$0xff]
        %v594 = vld [vmem:[%s1 + $0xc00] sm:$0xff]
        %v595 = vld [vmem:[%s1 + $0xc08] sm:$0xff]
        %v596 = vld [vmem:[%s1 + $0xc10] sm:$0xff]
        %v597 = vld [vmem:[%s1 + $0xc18] sm:$0xff]
        %v598 = vld [vmem:[%s1 + $0xc20] sm:$0xff]
        %v599 = vld [vmem:[%s1 + $0xc28] sm:$0xff]
        %v600 = vld [vmem:[%s1 + $0xc30] sm:$0xff]
        %v601 = vld [vmem:[%s1 + $0xc38] sm:$0xff]
        %v602 = vld [vmem:[%s1 + $0xc40] sm:$0xff]
        %v603 = vld [vmem:[%s1 + $0xc48] sm:$0xff]
        %v604 = vld [vmem:[%s1 + $0xc50] sm:$0xff]
        %v605 = vld [vmem:[%s1 + $0xc58] sm:$0xff]
        %v606 = vld [vmem:[%s1 + $0xc60] sm:$0xff]
        %v607 = vld [vmem:[%s1 + $0xc68] sm:$0xff]
        %v608 = vld [vmem:[%s1 + $0xc70] sm:$0xff]
        %v609 = vld [vmem:[%s1 + $0xc78] sm:$0xff]
        %v610 = vld [vmem:[%s1 + $0xc80] sm:$0xff]
        %v611 = vld [vmem:[%s1 + $0xc88] sm:$0xff]
        %v612 = vld [vmem:[%s1 + $0xc90] sm:$0xff]
        %v613 = vld [vmem:[%s1 + $0xc98] sm:$0xff]
        %v614 = vld [vmem:[%s1 + $0xca0] sm:$0xff]
        %v615 = vld [vmem:[%s1 + $0xca8] sm:$0xff]
        %v616 = vld [vmem:[%s1 + $0xcb0] sm:$0xff]
        %v617 = vld [vmem:[%s1 + $0xcb8] sm:$0xff]
        %v618 = vld [vmem:[%s1 + $0xcc0] sm:$0xff]
        %v619 = vld [vmem:[%s1 + $0xcc8] sm:$0xff]
        %v620 = vld [vmem:[%s1 + $0xcd0] sm:$0xff]
        %v621 = vld [vmem:[%s1 + $0xcd8] sm:$0xff]
        %v622 = vld [vmem:[%s1 + $0xce0] sm:$0xff]
        %v623 = vld [vmem:[%s1 + $0xce8] sm:$0xff]
        %v624 = vld [vmem:[%s1 + $0xcf0] sm:$0xff]
        %v625 = vld [vmem:[%s1 + $0xcf8] sm:$0xff]
        %v626 = vld [vmem:[%s1 + $0xd00] sm:$0xff]
        %v627 = vld [vmem:[%s1 + $0xd08] sm:$0xff]
        %v628 = vld [vmem:[%s1 + $0xd10] sm:$0xff]
        %v629 = vld [vmem:[%s1 + $0xd18] sm:$0xff]
        %v630 = vld [vmem:[%s1 + $0xd20] sm:$0xff]
        %v631 = vld [vmem:[%s1 + $0xd28] sm:$0xff]
        %v632 = vld [vmem:[%s1 + $0xd30] sm:$0xff]
        %v633 = vld [vmem:[%s1 + $0xd38] sm:$0xff]
        %v634 = vld [vmem:[%s1 + $0xd40] sm:$0xff]
        %v635 = vld [vmem:[%s1 + $0xd48] sm:$0xff]
        %v636 = vld [vmem:[%s1 + $0xd50] sm:$0xff]
        %v637 = vld [vmem:[%s1 + $0xd58] sm:$0xff]
        %v638 = vld [vmem:[%s1 + $0xd60] sm:$0xff]
        %v639 = vld [vmem:[%s1 + $0xd68] sm:$0xff]
        %v640 = vld [vmem:[%s1 + $0xd70] sm:$0xff]
        %v641 = vld [vmem:[%s1 + $0xd78] sm:$0xff]
        %v642 = vld [vmem:[%s1 + $0xd80] sm:$0xff]
        %v643 = vld [vmem:[%s1 + $0xd88] sm:$0xff]
        %v644 = vld [vmem:[%s1 + $0xd90] sm:$0xff]
        %v645 = vld [vmem:[%s1 + $0xd98] sm:$0xff]
        %v646 = vld [vmem:[%s1 + $0xda0] sm:$0xff]
        %v647 = vld [vmem:[%s1 + $0xda8] sm:$0xff]
        %v648 = vld [vmem:[%s1 + $0xdb0] sm:$0xff]
        %v649 = vld [vmem:[%s1 + $0xdb8] sm:$0xff]
        %v650 = vld [vmem:[%s1 + $0xdc0] sm:$0xff]
        %v651 = vld [vmem:[%s1 + $0xdc8] sm:$0xff]
        %v652 = vld [vmem:[%s1 + $0xdd0] sm:$0xff]
        %v653 = vld [vmem:[%s1 + $0xdd8] sm:$0xff]
        %v654 = vld [vmem:[%s1 + $0xde0] sm:$0xff]
        %v655 = vld [vmem:[%s1 + $0xde8] sm:$0xff]
        %v656 = vld [vmem:[%s1 + $0xdf0] sm:$0xff]
        %v657 = vld [vmem:[%s1 + $0xdf8] sm:$0xff]
        %v658 = vld [vmem:[%s1 + $0xe00] sm:$0xff]
        %v659 = vld [vmem:[%s1 + $0xe08] sm:$0xff]
        %v660 = vld [vmem:[%s1 + $0xe10] sm:$0xff]
        %v661 = vld [vmem:[%s1 + $0xe18] sm:$0xff]
        %v662 = vld [vmem:[%s1 + $0xe20] sm:$0xff]
        %v663 = vld [vmem:[%s1 + $0xe28] sm:$0xff]
        %v664 = vld [vmem:[%s1 + $0xe30] sm:$0xff]
        %v665 = vld [vmem:[%s1 + $0xe38] sm:$0xff]
        %v666 = vld [vmem:[%s1 + $0xe40] sm:$0xff]
        %v667 = vld [vmem:[%s1 + $0xe48] sm:$0xff]
        %v668 = vld [vmem:[%s1 + $0xe50] sm:$0xff]
        %v669 = vld [vmem:[%s1 + $0xe58] sm:$0xff]
        %v670 = vld [vmem:[%s1 + $0xe60] sm:$0xff]
        %v671 = vld [vmem:[%s1 + $0xe68] sm:$0xff]
        %v672 = vld [vmem:[%s1 + $0xe70] sm:$0xff]
        %v673 = vld [vmem:[%s1 + $0xe78] sm:$0xff]
        %v674 = vld [vmem:[%s1 + $0xe80] sm:$0xff]
        %v675 = vld [vmem:[%s1 + $0xe88] sm:$0xff]
        %v676 = vld [vmem:[%s1 + $0xe90] sm:$0xff]
        %v677 = vld [vmem:[%s1 + $0xe98] sm:$0xff]
        %v678 = vld [vmem:[%s1 + $0xea0] sm:$0xff]
        %v679 = vld [vmem:[%s1 + $0xea8] sm:$0xff]
        %v680 = vld [vmem:[%s1 + $0xeb0] sm:$0xff]
        %v681 = vld [vmem:[%s1 + $0xeb8] sm:$0xff]
        %v682 = vld [vmem:[%s1 + $0xec0] sm:$0xff]
        %v683 = vld [vmem:[%s1 + $0xec8] sm:$0xff]
        %v684 = vld [vmem:[%s1 + $0xed0] sm:$0xff]
        %v685 = vld [vmem:[%s1 + $0xed8] sm:$0xff]
        %v686 = vld [vmem:[%s1 + $0xee0] sm:$0xff]
        %v687 = vld [vmem:[%s1 + $0xee8] sm:$0xff]
        %v688 = vld [vmem:[%s1 + $0xef0] sm:$0xff]
        %v689 = vld [vmem:[%s1 + $0xef8] sm:$0xff]
        %v690 = vld [vmem:[%s1 + $0xf00] sm:$0xff]
        %v691 = vld [vmem:[%s1 + $0xf08] sm:$0xff]
        %v692 = vld [vmem:[%s1 + $0xf10] sm:$0xff]
        %v693 = vld [vmem:[%s1 + $0xf18] sm:$0xff]
        %v694 = vld [vmem:[%s1 + $0xf20] sm:$0xff]
        %v695 = vld [vmem:[%s1 + $0xf28] sm:$0xff]
        %v696 = vld [vmem:[%s1 + $0xf30] sm:$0xff]
        %v697 = vld [vmem:[%s1 + $0xf38] sm:$0xff]
        %v698 = vld [vmem:[%s1 + $0xf40] sm:$0xff]
        %v699 = vld [vmem:[%s1 + $0xf48] sm:$0xff]
        %v700 = vld [vmem:[%s1 + $0xf50] sm:$0xff]
        %v701 = vld [vmem:[%s1 + $0xf58] sm:$0xff]
        %v702 = vld [vmem:[%s1 + $0xf60] sm:$0xff]
        %v703 = vld [vmem:[%s1 + $0xf68] sm:$0xff]
        %v704 = vld [vmem:[%s1 + $0xf70] sm:$0xff]
        %v705 = vld [vmem:[%s1 + $0xf78] sm:$0xff]
        %v706 = vld [vmem:[%s1 + $0xf80] sm:$0xff]
        %v707 = vld [vmem:[%s1 + $0xf88] sm:$0xff]
        %v708 = vld [vmem:[%s1 + $0xf90] sm:$0xff]
        %v709 = vld [vmem:[%s1 + $0xf98] sm:$0xff]
        %v710 = vld [vmem:[%s1 + $0xfa0] sm:$0xff]
        %v711 = vld [vmem:[%s1 + $0xfa8] sm:$0xff]
        %v712 = vld [vmem:[%s1 + $0xfb0] sm:$0xff]
        %v713 = vld [vmem:[%s1 + $0xfb8] sm:$0xff]
        %v714 = vld [vmem:[%s1 + $0xfc0] sm:$0xff]
        %v715 = vld [vmem:[%s1 + $0xfc8] sm:$0xff]
        %v716 = vld [vmem:[%s1 + $0xfd0] sm:$0xff]
        %v717 = vld [vmem:[%s1 + $0xfd8] sm:$0xff]
        %v718 = vld [vmem:[%s1 + $0xfe0] sm:$0xff]
        %v719 = vld [vmem:[%s1 + $0xfe8] sm:$0xff]
        %v720 = vld [vmem:[%s1 + $0xff0] sm:$0xff]
        %v721 = vld [vmem:[%s1 + $0xff8] sm:$0xff]
        %v726 = vunpack.c.l.b16 %v206
        %v727 = vunpack.c.h.b16 %v206
        %v728 = vunpack.c.l.b16 %v207
        %v729 = vunpack.c.h.b16 %v207
        %v730 = vunpack.c.l.b16 %v208
        %v731 = vunpack.c.h.b16 %v208
        %v732 = vunpack.c.l.b16 %v209
        %v733 = vunpack.c.h.b16 %v209
        %v734 = vpack.c.b16 %v730, %v726
        %v735 = vpack.c.b16 %v731, %v727
        %v736 = vpack.c.b16 %v732, %v728
        %v737 = vpack.c.b16 %v733, %v729
        %v1254 = vunpack.c.l.b16 %v210
        %v1255 = vunpack.c.h.b16 %v210
        %v1256 = vunpack.c.l.b16 %v211
        %v1257 = vunpack.c.h.b16 %v211
        %v1258 = vunpack.c.l.b16 %v212
        %v1259 = vunpack.c.h.b16 %v212
        %v1260 = vunpack.c.l.b16 %v213
        %v1261 = vunpack.c.h.b16 %v213
        %v1262 = vunpack.c.l.b16 %v214
        %v1263 = vunpack.c.h.b16 %v214
        %v1264 = vunpack.c.l.b16 %v215
        %v1265 = vunpack.c.h.b16 %v215
        %v1266 = vunpack.c.l.b16 %v216
        %v1267 = vunpack.c.h.b16 %v216
        %v1268 = vunpack.c.l.b16 %v217
        %v1269 = vunpack.c.h.b16 %v217
        %v1270 = vunpack.c.l.b16 %v218
        %v1271 = vunpack.c.h.b16 %v218
        %v1272 = vunpack.c.l.b16 %v219
        %v1273 = vunpack.c.h.b16 %v219
        %v1274 = vunpack.c.l.b16 %v220
        %v1275 = vunpack.c.h.b16 %v220
        %v1276 = vunpack.c.l.b16 %v221
        %v1277 = vunpack.c.h.b16 %v221
        %v1278 = vunpack.c.l.b16 %v222
        %v1279 = vunpack.c.h.b16 %v222
        %v1280 = vunpack.c.l.b16 %v223
        %v1281 = vunpack.c.h.b16 %v223
        %v1282 = vunpack.c.l.b16 %v224
        %v1283 = vunpack.c.h.b16 %v224
        %v1284 = vunpack.c.l.b16 %v225
        %v1285 = vunpack.c.h.b16 %v225
        %v1286 = vunpack.c.l.b16 %v226
        %v1287 = vunpack.c.h.b16 %v226
        %v1288 = vunpack.c.l.b16 %v227
        %v1289 = vunpack.c.h.b16 %v227
        %v1290 = vunpack.c.l.b16 %v228
        %v1291 = vunpack.c.h.b16 %v228
        %v1292 = vunpack.c.l.b16 %v229
        %v1293 = vunpack.c.h.b16 %v229
        %v1294 = vunpack.c.l.b16 %v230
        %v1295 = vunpack.c.h.b16 %v230
        %v1296 = vunpack.c.l.b16 %v231
        %v1297 = vunpack.c.h.b16 %v231
        %v1298 = vunpack.c.l.b16 %v232
        %v1299 = vunpack.c.h.b16 %v232
        %v1300 = vunpack.c.l.b16 %v233
        %v1301 = vunpack.c.h.b16 %v233
        %v1302 = vunpack.c.l.b16 %v234
        %v1303 = vunpack.c.h.b16 %v234
        %v1304 = vunpack.c.l.b16 %v235
        %v1305 = vunpack.c.h.b16 %v235
        %v1306 = vunpack.c.l.b16 %v236
        %v1307 = vunpack.c.h.b16 %v236
        %v1308 = vunpack.c.l.b16 %v237
        %v1309 = vunpack.c.h.b16 %v237
        %v1310 = vunpack.c.l.b16 %v238
        %v1311 = vunpack.c.h.b16 %v238
        %v1312 = vunpack.c.l.b16 %v239
        %v1313 = vunpack.c.h.b16 %v239
        %v1314 = vunpack.c.l.b16 %v240
        %v1315 = vunpack.c.h.b16 %v240
        %v1316 = vunpack.c.l.b16 %v241
        %v1317 = vunpack.c.h.b16 %v241
        %v1318 = vunpack.c.l.b16 %v242
        %v1319 = vunpack.c.h.b16 %v242
        %v1320 = vunpack.c.l.b16 %v243
        %v1321 = vunpack.c.h.b16 %v243
        %v1322 = vunpack.c.l.b16 %v244
        %v1323 = vunpack.c.h.b16 %v244
        %v1324 = vunpack.c.l.b16 %v245
        %v1325 = vunpack.c.h.b16 %v245
        %v1326 = vunpack.c.l.b16 %v246
        %v1327 = vunpack.c.h.b16 %v246
        %v1328 = vunpack.c.l.b16 %v247
        %v1329 = vunpack.c.h.b16 %v247
        %v1330 = vunpack.c.l.b16 %v248
        %v1331 = vunpack.c.h.b16 %v248
        %v1332 = vunpack.c.l.b16 %v249
        %v1333 = vunpack.c.h.b16 %v249
        %v1334 = vunpack.c.l.b16 %v250
        %v1335 = vunpack.c.h.b16 %v250
        %v1336 = vunpack.c.l.b16 %v251
        %v1337 = vunpack.c.h.b16 %v251
        %v1338 = vunpack.c.l.b16 %v252
        %v1339 = vunpack.c.h.b16 %v252
        %v1340 = vunpack.c.l.b16 %v253
        %v1341 = vunpack.c.h.b16 %v253
        %v1342 = vunpack.c.l.b16 %v254
        %v1343 = vunpack.c.h.b16 %v254
        %v1344 = vunpack.c.l.b16 %v255
        %v1345 = vunpack.c.h.b16 %v255
        %v1346 = vunpack.c.l.b16 %v256
        %v1347 = vunpack.c.h.b16 %v256
        %v1348 = vunpack.c.l.b16 %v257
        %v1349 = vunpack.c.h.b16 %v257
        %v1350 = vunpack.c.l.b16 %v258
        %v1351 = vunpack.c.h.b16 %v258
        %v1352 = vunpack.c.l.b16 %v259
        %v1353 = vunpack.c.h.b16 %v259
        %v1354 = vunpack.c.l.b16 %v260
        %v1355 = vunpack.c.h.b16 %v260
        %v1356 = vunpack.c.l.b16 %v261
        %v1357 = vunpack.c.h.b16 %v261
        %v1358 = vunpack.c.l.b16 %v262
        %v1359 = vunpack.c.h.b16 %v262
        %v1360 = vunpack.c.l.b16 %v263
        %v1361 = vunpack.c.h.b16 %v263
        %v1362 = vunpack.c.l.b16 %v264
        %v1363 = vunpack.c.h.b16 %v264
        %v1364 = vunpack.c.l.b16 %v265
        %v1365 = vunpack.c.h.b16 %v265
        %v1366 = vunpack.c.l.b16 %v266
        %v1367 = vunpack.c.h.b16 %v266
        %v1368 = vunpack.c.l.b16 %v267
        %v1369 = vunpack.c.h.b16 %v267
        %v1370 = vunpack.c.l.b16 %v268
        %v1371 = vunpack.c.h.b16 %v268
        %v1372 = vunpack.c.l.b16 %v269
        %v1373 = vunpack.c.h.b16 %v269
        %v1374 = vunpack.c.l.b16 %v270
        %v1375 = vunpack.c.h.b16 %v270
        %v1376 = vunpack.c.l.b16 %v271
        %v1377 = vunpack.c.h.b16 %v271
        %v1378 = vunpack.c.l.b16 %v272
        %v1379 = vunpack.c.h.b16 %v272
        %v1380 = vunpack.c.l.b16 %v273
        %v1381 = vunpack.c.h.b16 %v273
        %v1382 = vunpack.c.l.b16 %v274
        %v1383 = vunpack.c.h.b16 %v274
        %v1384 = vunpack.c.l.b16 %v275
        %v1385 = vunpack.c.h.b16 %v275
        %v1386 = vunpack.c.l.b16 %v276
        %v1387 = vunpack.c.h.b16 %v276
        %v1388 = vunpack.c.l.b16 %v277
        %v1389 = vunpack.c.h.b16 %v277
        %v1390 = vunpack.c.l.b16 %v278
        %v1391 = vunpack.c.h.b16 %v278
        %v1392 = vunpack.c.l.b16 %v279
        %v1393 = vunpack.c.h.b16 %v279
        %v1394 = vunpack.c.l.b16 %v280
        %v1395 = vunpack.c.h.b16 %v280
        %v1396 = vunpack.c.l.b16 %v281
        %v1397 = vunpack.c.h.b16 %v281
        %v1398 = vunpack.c.l.b16 %v282
        %v1399 = vunpack.c.h.b16 %v282
        %v1400 = vunpack.c.l.b16 %v283
        %v1401 = vunpack.c.h.b16 %v283
        %v1402 = vunpack.c.l.b16 %v284
        %v1403 = vunpack.c.h.b16 %v284
        %v1404 = vunpack.c.l.b16 %v285
        %v1405 = vunpack.c.h.b16 %v285
        %v1406 = vunpack.c.l.b16 %v286
        %v1407 = vunpack.c.h.b16 %v286
        %v1408 = vunpack.c.l.b16 %v287
        %v1409 = vunpack.c.h.b16 %v287
        %v1410 = vunpack.c.l.b16 %v288
        %v1411 = vunpack.c.h.b16 %v288
        %v1412 = vunpack.c.l.b16 %v289
        %v1413 = vunpack.c.h.b16 %v289
        %v1414 = vunpack.c.l.b16 %v290
        %v1415 = vunpack.c.h.b16 %v290
        %v1416 = vunpack.c.l.b16 %v291
        %v1417 = vunpack.c.h.b16 %v291
        %v1418 = vunpack.c.l.b16 %v292
        %v1419 = vunpack.c.h.b16 %v292
        %v1420 = vunpack.c.l.b16 %v293
        %v1421 = vunpack.c.h.b16 %v293
        %v1422 = vunpack.c.l.b16 %v294
        %v1423 = vunpack.c.h.b16 %v294
        %v1424 = vunpack.c.l.b16 %v295
        %v1425 = vunpack.c.h.b16 %v295
        %v1426 = vunpack.c.l.b16 %v296
        %v1427 = vunpack.c.h.b16 %v296
        %v1428 = vunpack.c.l.b16 %v297
        %v1429 = vunpack.c.h.b16 %v297
        %v1430 = vunpack.c.l.b16 %v298
        %v1431 = vunpack.c.h.b16 %v298
        %v1432 = vunpack.c.l.b16 %v299
        %v1433 = vunpack.c.h.b16 %v299
        %v1434 = vunpack.c.l.b16 %v300
        %v1435 = vunpack.c.h.b16 %v300
        %v1436 = vunpack.c.l.b16 %v301
        %v1437 = vunpack.c.h.b16 %v301
        %v1438 = vunpack.c.l.b16 %v302
        %v1439 = vunpack.c.h.b16 %v302
        %v1440 = vunpack.c.l.b16 %v303
        %v1441 = vunpack.c.h.b16 %v303
        %v1442 = vunpack.c.l.b16 %v304
        %v1443 = vunpack.c.h.b16 %v304
        %v1444 = vunpack.c.l.b16 %v305
        %v1445 = vunpack.c.h.b16 %v305
        %v1446 = vunpack.c.l.b16 %v306
        %v1447 = vunpack.c.h.b16 %v306
        %v1448 = vunpack.c.l.b16 %v307
        %v1449 = vunpack.c.h.b16 %v307
        %v1450 = vunpack.c.l.b16 %v308
        %v1451 = vunpack.c.h.b16 %v308
        %v1452 = vunpack.c.l.b16 %v309
        %v1453 = vunpack.c.h.b16 %v309
        %v1454 = vunpack.c.l.b16 %v310
        %v1455 = vunpack.c.h.b16 %v310
        %v1456 = vunpack.c.l.b16 %v311
        %v1457 = vunpack.c.h.b16 %v311
        %v1458 = vunpack.c.l.b16 %v312
        %v1459 = vunpack.c.h.b16 %v312
        %v1460 = vunpack.c.l.b16 %v313
        %v1461 = vunpack.c.h.b16 %v313
        %v1462 = vunpack.c.l.b16 %v314
        %v1463 = vunpack.c.h.b16 %v314
        %v1464 = vunpack.c.l.b16 %v315
        %v1465 = vunpack.c.h.b16 %v315
        %v1466 = vunpack.c.l.b16 %v316
        %v1467 = vunpack.c.h.b16 %v316
        %v1468 = vunpack.c.l.b16 %v317
        %v1469 = vunpack.c.h.b16 %v317
        %v1470 = vunpack.c.l.b16 %v318
        %v1471 = vunpack.c.h.b16 %v318
        %v1472 = vunpack.c.l.b16 %v319
        %v1473 = vunpack.c.h.b16 %v319
        %v1474 = vunpack.c.l.b16 %v320
        %v1475 = vunpack.c.h.b16 %v320
        %v1476 = vunpack.c.l.b16 %v321
        %v1477 = vunpack.c.h.b16 %v321
        %v1478 = vunpack.c.l.b16 %v322
        %v1479 = vunpack.c.h.b16 %v322
        %v1480 = vunpack.c.l.b16 %v323
        %v1481 = vunpack.c.h.b16 %v323
        %v1482 = vunpack.c.l.b16 %v324
        %v1483 = vunpack.c.h.b16 %v324
        %v1484 = vunpack.c.l.b16 %v325
        %v1485 = vunpack.c.h.b16 %v325
        %v1486 = vunpack.c.l.b16 %v326
        %v1487 = vunpack.c.h.b16 %v326
        %v1488 = vunpack.c.l.b16 %v327
        %v1489 = vunpack.c.h.b16 %v327
        %v1490 = vunpack.c.l.b16 %v328
        %v1491 = vunpack.c.h.b16 %v328
        %v1492 = vunpack.c.l.b16 %v329
        %v1493 = vunpack.c.h.b16 %v329
        %v1494 = vunpack.c.l.b16 %v330
        %v1495 = vunpack.c.h.b16 %v330
        %v1496 = vunpack.c.l.b16 %v331
        %v1497 = vunpack.c.h.b16 %v331
        %v1498 = vunpack.c.l.b16 %v332
        %v1499 = vunpack.c.h.b16 %v332
        %v1500 = vunpack.c.l.b16 %v333
        %v1501 = vunpack.c.h.b16 %v333
        %v1502 = vunpack.c.l.b16 %v334
        %v1503 = vunpack.c.h.b16 %v334
        %v1504 = vunpack.c.l.b16 %v335
        %v1505 = vunpack.c.h.b16 %v335
        %v1506 = vunpack.c.l.b16 %v336
        %v1507 = vunpack.c.h.b16 %v336
        %v1508 = vunpack.c.l.b16 %v337
        %v1509 = vunpack.c.h.b16 %v337
        %v1510 = vunpack.c.l.b16 %v338
        %v1511 = vunpack.c.h.b16 %v338
        %v1512 = vunpack.c.l.b16 %v339
        %v1513 = vunpack.c.h.b16 %v339
        %v1514 = vunpack.c.l.b16 %v340
        %v1515 = vunpack.c.h.b16 %v340
        %v1516 = vunpack.c.l.b16 %v341
        %v1517 = vunpack.c.h.b16 %v341
        %v1518 = vunpack.c.l.b16 %v342
        %v1519 = vunpack.c.h.b16 %v342
        %v1520 = vunpack.c.l.b16 %v343
        %v1521 = vunpack.c.h.b16 %v343
        %v1522 = vunpack.c.l.b16 %v344
        %v1523 = vunpack.c.h.b16 %v344
        %v1524 = vunpack.c.l.b16 %v345
        %v1525 = vunpack.c.h.b16 %v345
        %v1526 = vunpack.c.l.b16 %v346
        %v1527 = vunpack.c.h.b16 %v346
        %v1528 = vunpack.c.l.b16 %v347
        %v1529 = vunpack.c.h.b16 %v347
        %v1530 = vunpack.c.l.b16 %v348
        %v1531 = vunpack.c.h.b16 %v348
        %v1532 = vunpack.c.l.b16 %v349
        %v1533 = vunpack.c.h.b16 %v349
        %v1534 = vunpack.c.l.b16 %v350
        %v1535 = vunpack.c.h.b16 %v350
        %v1536 = vunpack.c.l.b16 %v351
        %v1537 = vunpack.c.h.b16 %v351
        %v1538 = vunpack.c.l.b16 %v352
        %v1539 = vunpack.c.h.b16 %v352
        %v1540 = vunpack.c.l.b16 %v353
        %v1541 = vunpack.c.h.b16 %v353
        %v1542 = vunpack.c.l.b16 %v354
        %v1543 = vunpack.c.h.b16 %v354
        %v1544 = vunpack.c.l.b16 %v355
        %v1545 = vunpack.c.h.b16 %v355
        %v1546 = vunpack.c.l.b16 %v356
        %v1547 = vunpack.c.h.b16 %v356
        %v1548 = vunpack.c.l.b16 %v357
        %v1549 = vunpack.c.h.b16 %v357
        %v1550 = vunpack.c.l.b16 %v358
        %v1551 = vunpack.c.h.b16 %v358
        %v1552 = vunpack.c.l.b16 %v359
        %v1553 = vunpack.c.h.b16 %v359
        %v1554 = vunpack.c.l.b16 %v360
        %v1555 = vunpack.c.h.b16 %v360
        %v1556 = vunpack.c.l.b16 %v361
        %v1557 = vunpack.c.h.b16 %v361
        %v1558 = vunpack.c.l.b16 %v362
        %v1559 = vunpack.c.h.b16 %v362
        %v1560 = vunpack.c.l.b16 %v363
        %v1561 = vunpack.c.h.b16 %v363
        %v1562 = vunpack.c.l.b16 %v364
        %v1563 = vunpack.c.h.b16 %v364
        %v1564 = vunpack.c.l.b16 %v365
        %v1565 = vunpack.c.h.b16 %v365
        %v1566 = vunpack.c.l.b16 %v366
        %v1567 = vunpack.c.h.b16 %v366
        %v1568 = vunpack.c.l.b16 %v367
        %v1569 = vunpack.c.h.b16 %v367
        %v1570 = vunpack.c.l.b16 %v368
        %v1571 = vunpack.c.h.b16 %v368
        %v1572 = vunpack.c.l.b16 %v369
        %v1573 = vunpack.c.h.b16 %v369
        %v1574 = vunpack.c.l.b16 %v370
        %v1575 = vunpack.c.h.b16 %v370
        %v1576 = vunpack.c.l.b16 %v371
        %v1577 = vunpack.c.h.b16 %v371
        %v1578 = vunpack.c.l.b16 %v372
        %v1579 = vunpack.c.h.b16 %v372
        %v1580 = vunpack.c.l.b16 %v373
        %v1581 = vunpack.c.h.b16 %v373
        %v1582 = vunpack.c.l.b16 %v374
        %v1583 = vunpack.c.h.b16 %v374
        %v1584 = vunpack.c.l.b16 %v375
        %v1585 = vunpack.c.h.b16 %v375
        %v1586 = vunpack.c.l.b16 %v376
        %v1587 = vunpack.c.h.b16 %v376
        %v1588 = vunpack.c.l.b16 %v377
        %v1589 = vunpack.c.h.b16 %v377
        %v1590 = vunpack.c.l.b16 %v378
        %v1591 = vunpack.c.h.b16 %v378
        %v1592 = vunpack.c.l.b16 %v379
        %v1593 = vunpack.c.h.b16 %v379
        %v1594 = vunpack.c.l.b16 %v380
        %v1595 = vunpack.c.h.b16 %v380
        %v1596 = vunpack.c.l.b16 %v381
        %v1597 = vunpack.c.h.b16 %v381
        %v1598 = vunpack.c.l.b16 %v382
        %v1599 = vunpack.c.h.b16 %v382
        %v1600 = vunpack.c.l.b16 %v383
        %v1601 = vunpack.c.h.b16 %v383
        %v1602 = vunpack.c.l.b16 %v384
        %v1603 = vunpack.c.h.b16 %v384
        %v1604 = vunpack.c.l.b16 %v385
        %v1605 = vunpack.c.h.b16 %v385
        %v1606 = vunpack.c.l.b16 %v386
        %v1607 = vunpack.c.h.b16 %v386
        %v1608 = vunpack.c.l.b16 %v387
        %v1609 = vunpack.c.h.b16 %v387
        %v1610 = vunpack.c.l.b16 %v388
        %v1611 = vunpack.c.h.b16 %v388
        %v1612 = vunpack.c.l.b16 %v389
        %v1613 = vunpack.c.h.b16 %v389
        %v1614 = vunpack.c.l.b16 %v390
        %v1615 = vunpack.c.h.b16 %v390
        %v1616 = vunpack.c.l.b16 %v391
        %v1617 = vunpack.c.h.b16 %v391
        %v1618 = vunpack.c.l.b16 %v392
        %v1619 = vunpack.c.h.b16 %v392
        %v1620 = vunpack.c.l.b16 %v393
        %v1621 = vunpack.c.h.b16 %v393
        %v1622 = vunpack.c.l.b16 %v394
        %v1623 = vunpack.c.h.b16 %v394
        %v1624 = vunpack.c.l.b16 %v395
        %v1625 = vunpack.c.h.b16 %v395
        %v1626 = vunpack.c.l.b16 %v396
        %v1627 = vunpack.c.h.b16 %v396
        %v1628 = vunpack.c.l.b16 %v397
        %v1629 = vunpack.c.h.b16 %v397
        %v1630 = vunpack.c.l.b16 %v398
        %v1631 = vunpack.c.h.b16 %v398
        %v1632 = vunpack.c.l.b16 %v399
        %v1633 = vunpack.c.h.b16 %v399
        %v1634 = vunpack.c.l.b16 %v400
        %v1635 = vunpack.c.h.b16 %v400
        %v1636 = vunpack.c.l.b16 %v401
        %v1637 = vunpack.c.h.b16 %v401
        %v1638 = vunpack.c.l.b16 %v402
        %v1639 = vunpack.c.h.b16 %v402
        %v1640 = vunpack.c.l.b16 %v403
        %v1641 = vunpack.c.h.b16 %v403
        %v1642 = vunpack.c.l.b16 %v404
        %v1643 = vunpack.c.h.b16 %v404
        %v1644 = vunpack.c.l.b16 %v405
        %v1645 = vunpack.c.h.b16 %v405
        %v1646 = vunpack.c.l.b16 %v406
        %v1647 = vunpack.c.h.b16 %v406
        %v1648 = vunpack.c.l.b16 %v407
        %v1649 = vunpack.c.h.b16 %v407
        %v1650 = vunpack.c.l.b16 %v408
        %v1651 = vunpack.c.h.b16 %v408
        %v1652 = vunpack.c.l.b16 %v409
        %v1653 = vunpack.c.h.b16 %v409
        %v1654 = vunpack.c.l.b16 %v410
        %v1655 = vunpack.c.h.b16 %v410
        %v1656 = vunpack.c.l.b16 %v411
        %v1657 = vunpack.c.h.b16 %v411
        %v1658 = vunpack.c.l.b16 %v412
        %v1659 = vunpack.c.h.b16 %v412
        %v1660 = vunpack.c.l.b16 %v413
        %v1661 = vunpack.c.h.b16 %v413
        %v1662 = vunpack.c.l.b16 %v414
        %v1663 = vunpack.c.h.b16 %v414
        %v1664 = vunpack.c.l.b16 %v415
        %v1665 = vunpack.c.h.b16 %v415
        %v1666 = vunpack.c.l.b16 %v416
        %v1667 = vunpack.c.h.b16 %v416
        %v1668 = vunpack.c.l.b16 %v417
        %v1669 = vunpack.c.h.b16 %v417
        %v1670 = vunpack.c.l.b16 %v418
        %v1671 = vunpack.c.h.b16 %v418
        %v1672 = vunpack.c.l.b16 %v419
        %v1673 = vunpack.c.h.b16 %v419
        %v1674 = vunpack.c.l.b16 %v420
        %v1675 = vunpack.c.h.b16 %v420
        %v1676 = vunpack.c.l.b16 %v421
        %v1677 = vunpack.c.h.b16 %v421
        %v1678 = vunpack.c.l.b16 %v422
        %v1679 = vunpack.c.h.b16 %v422
        %v1680 = vunpack.c.l.b16 %v423
        %v1681 = vunpack.c.h.b16 %v423
        %v1682 = vunpack.c.l.b16 %v424
        %v1683 = vunpack.c.h.b16 %v424
        %v1684 = vunpack.c.l.b16 %v425
        %v1685 = vunpack.c.h.b16 %v425
        %v1686 = vunpack.c.l.b16 %v426
        %v1687 = vunpack.c.h.b16 %v426
        %v1688 = vunpack.c.l.b16 %v427
        %v1689 = vunpack.c.h.b16 %v427
        %v1690 = vunpack.c.l.b16 %v428
        %v1691 = vunpack.c.h.b16 %v428
        %v1692 = vunpack.c.l.b16 %v429
        %v1693 = vunpack.c.h.b16 %v429
        %v1694 = vunpack.c.l.b16 %v430
        %v1695 = vunpack.c.h.b16 %v430
        %v1696 = vunpack.c.l.b16 %v431
        %v1697 = vunpack.c.h.b16 %v431
        %v1698 = vunpack.c.l.b16 %v432
        %v1699 = vunpack.c.h.b16 %v432
        %v1700 = vunpack.c.l.b16 %v433
        %v1701 = vunpack.c.h.b16 %v433
        %v1702 = vunpack.c.l.b16 %v434
        %v1703 = vunpack.c.h.b16 %v434
        %v1704 = vunpack.c.l.b16 %v435
        %v1705 = vunpack.c.h.b16 %v435
        %v1706 = vunpack.c.l.b16 %v436
        %v1707 = vunpack.c.h.b16 %v436
        %v1708 = vunpack.c.l.b16 %v437
        %v1709 = vunpack.c.h.b16 %v437
        %v1710 = vunpack.c.l.b16 %v438
        %v1711 = vunpack.c.h.b16 %v438
        %v1712 = vunpack.c.l.b16 %v439
        %v1713 = vunpack.c.h.b16 %v439
        %v1714 = vunpack.c.l.b16 %v440
        %v1715 = vunpack.c.h.b16 %v440
        %v1716 = vunpack.c.l.b16 %v441
        %v1717 = vunpack.c.h.b16 %v441
        %v1718 = vunpack.c.l.b16 %v442
        %v1719 = vunpack.c.h.b16 %v442
        %v1720 = vunpack.c.l.b16 %v443
        %v1721 = vunpack.c.h.b16 %v443
        %v1722 = vunpack.c.l.b16 %v444
        %v1723 = vunpack.c.h.b16 %v444
        %v1724 = vunpack.c.l.b16 %v445
        %v1725 = vunpack.c.h.b16 %v445
        %v1726 = vunpack.c.l.b16 %v446
        %v1727 = vunpack.c.h.b16 %v446
        %v1728 = vunpack.c.l.b16 %v447
        %v1729 = vunpack.c.h.b16 %v447
        %v1730 = vunpack.c.l.b16 %v448
        %v1731 = vunpack.c.h.b16 %v448
        %v1732 = vunpack.c.l.b16 %v449
        %v1733 = vunpack.c.h.b16 %v449
        %v1734 = vunpack.c.l.b16 %v450
        %v1735 = vunpack.c.h.b16 %v450
        %v1736 = vunpack.c.l.b16 %v451
        %v1737 = vunpack.c.h.b16 %v451
        %v1738 = vunpack.c.l.b16 %v452
        %v1739 = vunpack.c.h.b16 %v452
        %v1740 = vunpack.c.l.b16 %v453
        %v1741 = vunpack.c.h.b16 %v453
        %v1742 = vunpack.c.l.b16 %v454
        %v1743 = vunpack.c.h.b16 %v454
        %v1744 = vunpack.c.l.b16 %v455
        %v1745 = vunpack.c.h.b16 %v455
        %v1746 = vunpack.c.l.b16 %v456
        %v1747 = vunpack.c.h.b16 %v456
        %v1748 = vunpack.c.l.b16 %v457
        %v1749 = vunpack.c.h.b16 %v457
        %v1750 = vunpack.c.l.b16 %v458
        %v1751 = vunpack.c.h.b16 %v458
        %v1752 = vunpack.c.l.b16 %v459
        %v1753 = vunpack.c.h.b16 %v459
        %v1754 = vunpack.c.l.b16 %v460
        %v1755 = vunpack.c.h.b16 %v460
        %v1756 = vunpack.c.l.b16 %v461
        %v1757 = vunpack.c.h.b16 %v461
        %v1758 = vunpack.c.l.b16 %v462
        %v1759 = vunpack.c.h.b16 %v462
        %v1760 = vunpack.c.l.b16 %v463
        %v1761 = vunpack.c.h.b16 %v463
        %v1762 = vunpack.c.l.b16 %v464
        %v1763 = vunpack.c.h.b16 %v464
        %v1764 = vunpack.c.l.b16 %v465
        %v1765 = vunpack.c.h.b16 %v465
        %v1766 = vunpack.c.l.b16 %v466
        %v1767 = vunpack.c.h.b16 %v466
        %v1768 = vunpack.c.l.b16 %v467
        %v1769 = vunpack.c.h.b16 %v467
        %v1770 = vunpack.c.l.b16 %v468
        %v1771 = vunpack.c.h.b16 %v468
        %v1772 = vunpack.c.l.b16 %v469
        %v1773 = vunpack.c.h.b16 %v469
        %v1774 = vunpack.c.l.b16 %v470
        %v1775 = vunpack.c.h.b16 %v470
        %v1776 = vunpack.c.l.b16 %v471
        %v1777 = vunpack.c.h.b16 %v471
        %v1778 = vunpack.c.l.b16 %v472
        %v1779 = vunpack.c.h.b16 %v472
        %v1780 = vunpack.c.l.b16 %v473
        %v1781 = vunpack.c.h.b16 %v473
        %v1782 = vunpack.c.l.b16 %v474
        %v1783 = vunpack.c.h.b16 %v474
        %v1784 = vunpack.c.l.b16 %v475
        %v1785 = vunpack.c.h.b16 %v475
        %v1786 = vunpack.c.l.b16 %v476
        %v1787 = vunpack.c.h.b16 %v476
        %v1788 = vunpack.c.l.b16 %v477
        %v1789 = vunpack.c.h.b16 %v477
        %v1790 = vunpack.c.l.b16 %v478
        %v1791 = vunpack.c.h.b16 %v478
        %v1792 = vunpack.c.l.b16 %v479
        %v1793 = vunpack.c.h.b16 %v479
        %v1794 = vunpack.c.l.b16 %v480
        %v1795 = vunpack.c.h.b16 %v480
        %v1796 = vunpack.c.l.b16 %v481
        %v1797 = vunpack.c.h.b16 %v481
        %v1798 = vunpack.c.l.b16 %v482
        %v1799 = vunpack.c.h.b16 %v482
        %v1800 = vunpack.c.l.b16 %v483
        %v1801 = vunpack.c.h.b16 %v483
        %v1802 = vunpack.c.l.b16 %v484
        %v1803 = vunpack.c.h.b16 %v484
        %v1804 = vunpack.c.l.b16 %v485
        %v1805 = vunpack.c.h.b16 %v485
        %v1806 = vunpack.c.l.b16 %v486
        %v1807 = vunpack.c.h.b16 %v486
        %v1808 = vunpack.c.l.b16 %v487
        %v1809 = vunpack.c.h.b16 %v487
        %v1810 = vunpack.c.l.b16 %v488
        %v1811 = vunpack.c.h.b16 %v488
        %v1812 = vunpack.c.l.b16 %v489
        %v1813 = vunpack.c.h.b16 %v489
        %v1814 = vunpack.c.l.b16 %v490
        %v1815 = vunpack.c.h.b16 %v490
        %v1816 = vunpack.c.l.b16 %v491
        %v1817 = vunpack.c.h.b16 %v491
        %v1818 = vunpack.c.l.b16 %v492
        %v1819 = vunpack.c.h.b16 %v492
        %v1820 = vunpack.c.l.b16 %v493
        %v1821 = vunpack.c.h.b16 %v493
        %v1822 = vunpack.c.l.b16 %v494
        %v1823 = vunpack.c.h.b16 %v494
        %v1824 = vunpack.c.l.b16 %v495
        %v1825 = vunpack.c.h.b16 %v495
        %v1826 = vunpack.c.l.b16 %v496
        %v1827 = vunpack.c.h.b16 %v496
        %v1828 = vunpack.c.l.b16 %v497
        %v1829 = vunpack.c.h.b16 %v497
        %v1830 = vunpack.c.l.b16 %v498
        %v1831 = vunpack.c.h.b16 %v498
        %v1832 = vunpack.c.l.b16 %v499
        %v1833 = vunpack.c.h.b16 %v499
        %v1834 = vunpack.c.l.b16 %v500
        %v1835 = vunpack.c.h.b16 %v500
        %v1836 = vunpack.c.l.b16 %v501
        %v1837 = vunpack.c.h.b16 %v501
        %v1838 = vunpack.c.l.b16 %v502
        %v1839 = vunpack.c.h.b16 %v502
        %v1840 = vunpack.c.l.b16 %v503
        %v1841 = vunpack.c.h.b16 %v503
        %v1842 = vunpack.c.l.b16 %v504
        %v1843 = vunpack.c.h.b16 %v504
        %v1844 = vunpack.c.l.b16 %v505
        %v1845 = vunpack.c.h.b16 %v505
        %v1846 = vunpack.c.l.b16 %v506
        %v1847 = vunpack.c.h.b16 %v506
        %v1848 = vunpack.c.l.b16 %v507
        %v1849 = vunpack.c.h.b16 %v507
        %v1850 = vunpack.c.l.b16 %v508
        %v1851 = vunpack.c.h.b16 %v508
        %v1852 = vunpack.c.l.b16 %v509
        %v1853 = vunpack.c.h.b16 %v509
        %v1854 = vunpack.c.l.b16 %v510
        %v1855 = vunpack.c.h.b16 %v510
        %v1856 = vunpack.c.l.b16 %v511
        %v1857 = vunpack.c.h.b16 %v511
        %v1858 = vunpack.c.l.b16 %v512
        %v1859 = vunpack.c.h.b16 %v512
        %v1860 = vunpack.c.l.b16 %v513
        %v1861 = vunpack.c.h.b16 %v513
        %v1862 = vunpack.c.l.b16 %v514
        %v1863 = vunpack.c.h.b16 %v514
        %v1864 = vunpack.c.l.b16 %v515
        %v1865 = vunpack.c.h.b16 %v515
        %v1866 = vunpack.c.l.b16 %v516
        %v1867 = vunpack.c.h.b16 %v516
        %v1868 = vunpack.c.l.b16 %v517
        %v1869 = vunpack.c.h.b16 %v517
        %v1870 = vunpack.c.l.b16 %v518
        %v1871 = vunpack.c.h.b16 %v518
        %v1872 = vunpack.c.l.b16 %v519
        %v1873 = vunpack.c.h.b16 %v519
        %v1874 = vunpack.c.l.b16 %v520
        %v1875 = vunpack.c.h.b16 %v520
        %v1876 = vunpack.c.l.b16 %v521
        %v1877 = vunpack.c.h.b16 %v521
        %v1878 = vunpack.c.l.b16 %v522
        %v1879 = vunpack.c.h.b16 %v522
        %v1880 = vunpack.c.l.b16 %v523
        %v1881 = vunpack.c.h.b16 %v523
        %v1882 = vunpack.c.l.b16 %v524
        %v1883 = vunpack.c.h.b16 %v524
        %v1884 = vunpack.c.l.b16 %v525
        %v1885 = vunpack.c.h.b16 %v525
        %v1886 = vunpack.c.l.b16 %v526
        %v1887 = vunpack.c.h.b16 %v526
        %v1888 = vunpack.c.l.b16 %v527
        %v1889 = vunpack.c.h.b16 %v527
        %v1890 = vunpack.c.l.b16 %v528
        %v1891 = vunpack.c.h.b16 %v528
        %v1892 = vunpack.c.l.b16 %v529
        %v1893 = vunpack.c.h.b16 %v529
        %v1894 = vunpack.c.l.b16 %v530
        %v1895 = vunpack.c.h.b16 %v530
        %v1896 = vunpack.c.l.b16 %v531
        %v1897 = vunpack.c.h.b16 %v531
        %v1898 = vunpack.c.l.b16 %v532
        %v1899 = vunpack.c.h.b16 %v532
        %v1900 = vunpack.c.l.b16 %v533
        %v1901 = vunpack.c.h.b16 %v533
        %v1902 = vunpack.c.l.b16 %v534
        %v1903 = vunpack.c.h.b16 %v534
        %v1904 = vunpack.c.l.b16 %v535
        %v1905 = vunpack.c.h.b16 %v535
        %v1906 = vunpack.c.l.b16 %v536
        %v1907 = vunpack.c.h.b16 %v536
        %v1908 = vunpack.c.l.b16 %v537
        %v1909 = vunpack.c.h.b16 %v537
        %v1910 = vunpack.c.l.b16 %v538
        %v1911 = vunpack.c.h.b16 %v538
        %v1912 = vunpack.c.l.b16 %v539
        %v1913 = vunpack.c.h.b16 %v539
        %v1914 = vunpack.c.l.b16 %v540
        %v1915 = vunpack.c.h.b16 %v540
        %v1916 = vunpack.c.l.b16 %v541
        %v1917 = vunpack.c.h.b16 %v541
        %v1918 = vunpack.c.l.b16 %v542
        %v1919 = vunpack.c.h.b16 %v542
        %v1920 = vunpack.c.l.b16 %v543
        %v1921 = vunpack.c.h.b16 %v543
        %v1922 = vunpack.c.l.b16 %v544
        %v1923 = vunpack.c.h.b16 %v544
        %v1924 = vunpack.c.l.b16 %v545
        %v1925 = vunpack.c.h.b16 %v545
        %v1926 = vunpack.c.l.b16 %v546
        %v1927 = vunpack.c.h.b16 %v546
        %v1928 = vunpack.c.l.b16 %v547
        %v1929 = vunpack.c.h.b16 %v547
        %v1930 = vunpack.c.l.b16 %v548
        %v1931 = vunpack.c.h.b16 %v548
        %v1932 = vunpack.c.l.b16 %v549
        %v1933 = vunpack.c.h.b16 %v549
        %v1934 = vunpack.c.l.b16 %v550
        %v1935 = vunpack.c.h.b16 %v550
        %v1936 = vunpack.c.l.b16 %v551
        %v1937 = vunpack.c.h.b16 %v551
        %v1938 = vunpack.c.l.b16 %v552
        %v1939 = vunpack.c.h.b16 %v552
        %v1940 = vunpack.c.l.b16 %v553
        %v1941 = vunpack.c.h.b16 %v553
        %v1942 = vunpack.c.l.b16 %v554
        %v1943 = vunpack.c.h.b16 %v554
        %v1944 = vunpack.c.l.b16 %v555
        %v1945 = vunpack.c.h.b16 %v555
        %v1946 = vunpack.c.l.b16 %v556
        %v1947 = vunpack.c.h.b16 %v556
        %v1948 = vunpack.c.l.b16 %v557
        %v1949 = vunpack.c.h.b16 %v557
        %v1950 = vunpack.c.l.b16 %v558
        %v1951 = vunpack.c.h.b16 %v558
        %v1952 = vunpack.c.l.b16 %v559
        %v1953 = vunpack.c.h.b16 %v559
        %v1954 = vunpack.c.l.b16 %v560
        %v1955 = vunpack.c.h.b16 %v560
        %v1956 = vunpack.c.l.b16 %v561
        %v1957 = vunpack.c.h.b16 %v561
        %v1958 = vunpack.c.l.b16 %v562
        %v1959 = vunpack.c.h.b16 %v562
        %v1960 = vunpack.c.l.b16 %v563
        %v1961 = vunpack.c.h.b16 %v563
        %v1962 = vunpack.c.l.b16 %v564
        %v1963 = vunpack.c.h.b16 %v564
        %v1964 = vunpack.c.l.b16 %v565
        %v1965 = vunpack.c.h.b16 %v565
        %v1966 = vunpack.c.l.b16 %v566
        %v1967 = vunpack.c.h.b16 %v566
        %v1968 = vunpack.c.l.b16 %v567
        %v1969 = vunpack.c.h.b16 %v567
        %v1970 = vunpack.c.l.b16 %v568
        %v1971 = vunpack.c.h.b16 %v568
        %v1972 = vunpack.c.l.b16 %v569
        %v1973 = vunpack.c.h.b16 %v569
        %v1974 = vunpack.c.l.b16 %v570
        %v1975 = vunpack.c.h.b16 %v570
        %v1976 = vunpack.c.l.b16 %v571
        %v1977 = vunpack.c.h.b16 %v571
        %v1978 = vunpack.c.l.b16 %v572
        %v1979 = vunpack.c.h.b16 %v572
        %v1980 = vunpack.c.l.b16 %v573
        %v1981 = vunpack.c.h.b16 %v573
        %v1982 = vunpack.c.l.b16 %v574
        %v1983 = vunpack.c.h.b16 %v574
        %v1984 = vunpack.c.l.b16 %v575
        %v1985 = vunpack.c.h.b16 %v575
        %v1986 = vunpack.c.l.b16 %v576
        %v1987 = vunpack.c.h.b16 %v576
        %v1988 = vunpack.c.l.b16 %v577
        %v1989 = vunpack.c.h.b16 %v577
        %v1990 = vunpack.c.l.b16 %v578
        %v1991 = vunpack.c.h.b16 %v578
        %v1992 = vunpack.c.l.b16 %v579
        %v1993 = vunpack.c.h.b16 %v579
        %v1994 = vunpack.c.l.b16 %v580
        %v1995 = vunpack.c.h.b16 %v580
        %v1996 = vunpack.c.l.b16 %v581
        %v1997 = vunpack.c.h.b16 %v581
        %v1998 = vunpack.c.l.b16 %v582
        %v1999 = vunpack.c.h.b16 %v582
        %v2000 = vunpack.c.l.b16 %v583
        %v2001 = vunpack.c.h.b16 %v583
        %v2002 = vunpack.c.l.b16 %v584
        %v2003 = vunpack.c.h.b16 %v584
        %v2004 = vunpack.c.l.b16 %v585
        %v2005 = vunpack.c.h.b16 %v585
        %v2006 = vunpack.c.l.b16 %v586
        %v2007 = vunpack.c.h.b16 %v586
        %v2008 = vunpack.c.l.b16 %v587
        %v2009 = vunpack.c.h.b16 %v587
        %v2010 = vunpack.c.l.b16 %v588
        %v2011 = vunpack.c.h.b16 %v588
        %v2012 = vunpack.c.l.b16 %v589
        %v2013 = vunpack.c.h.b16 %v589
        %v2014 = vunpack.c.l.b16 %v590
        %v2015 = vunpack.c.h.b16 %v590
        %v2016 = vunpack.c.l.b16 %v591
        %v2017 = vunpack.c.h.b16 %v591
        %v2018 = vunpack.c.l.b16 %v592
        %v2019 = vunpack.c.h.b16 %v592
        %v2020 = vunpack.c.l.b16 %v593
        %v2021 = vunpack.c.h.b16 %v593
        %v2022 = vunpack.c.l.b16 %v594
        %v2023 = vunpack.c.h.b16 %v594
        %v2024 = vunpack.c.l.b16 %v595
        %v2025 = vunpack.c.h.b16 %v595
        %v2026 = vunpack.c.l.b16 %v596
        %v2027 = vunpack.c.h.b16 %v596
        %v2028 = vunpack.c.l.b16 %v597
        %v2029 = vunpack.c.h.b16 %v597
        %v2030 = vunpack.c.l.b16 %v598
        %v2031 = vunpack.c.h.b16 %v598
        %v2032 = vunpack.c.l.b16 %v599
        %v2033 = vunpack.c.h.b16 %v599
        %v2034 = vunpack.c.l.b16 %v600
        %v2035 = vunpack.c.h.b16 %v600
        %v2036 = vunpack.c.l.b16 %v601
        %v2037 = vunpack.c.h.b16 %v601
        %v2038 = vunpack.c.l.b16 %v602
        %v2039 = vunpack.c.h.b16 %v602
        %v2040 = vunpack.c.l.b16 %v603
        %v2041 = vunpack.c.h.b16 %v603
        %v2042 = vunpack.c.l.b16 %v604
        %v2043 = vunpack.c.h.b16 %v604
        %v2044 = vunpack.c.l.b16 %v605
        %v2045 = vunpack.c.h.b16 %v605
        %v2046 = vunpack.c.l.b16 %v606
        %v2047 = vunpack.c.h.b16 %v606
        %v2048 = vunpack.c.l.b16 %v607
        %v2049 = vunpack.c.h.b16 %v607
        %v2050 = vunpack.c.l.b16 %v608
        %v2051 = vunpack.c.h.b16 %v608
        %v2052 = vunpack.c.l.b16 %v609
        %v2053 = vunpack.c.h.b16 %v609
        %v2054 = vunpack.c.l.b16 %v610
        %v2055 = vunpack.c.h.b16 %v610
        %v2056 = vunpack.c.l.b16 %v611
        %v2057 = vunpack.c.h.b16 %v611
        %v2058 = vunpack.c.l.b16 %v612
        %v2059 = vunpack.c.h.b16 %v612
        %v2060 = vunpack.c.l.b16 %v613
        %v2061 = vunpack.c.h.b16 %v613
        %v2062 = vunpack.c.l.b16 %v614
        %v2063 = vunpack.c.h.b16 %v614
        %v2064 = vunpack.c.l.b16 %v615
        %v2065 = vunpack.c.h.b16 %v615
        %v2066 = vunpack.c.l.b16 %v616
        %v2067 = vunpack.c.h.b16 %v616
        %v2068 = vunpack.c.l.b16 %v617
        %v2069 = vunpack.c.h.b16 %v617
        %v2070 = vunpack.c.l.b16 %v618
        %v2071 = vunpack.c.h.b16 %v618
        %v2072 = vunpack.c.l.b16 %v619
        %v2073 = vunpack.c.h.b16 %v619
        %v2074 = vunpack.c.l.b16 %v620
        %v2075 = vunpack.c.h.b16 %v620
        %v2076 = vunpack.c.l.b16 %v621
        %v2077 = vunpack.c.h.b16 %v621
        %v2078 = vunpack.c.l.b16 %v622
        %v2079 = vunpack.c.h.b16 %v622
        %v2080 = vunpack.c.l.b16 %v623
        %v2081 = vunpack.c.h.b16 %v623
        %v2082 = vunpack.c.l.b16 %v624
        %v2083 = vunpack.c.h.b16 %v624
        %v2084 = vunpack.c.l.b16 %v625
        %v2085 = vunpack.c.h.b16 %v625
        %v2086 = vunpack.c.l.b16 %v626
        %v2087 = vunpack.c.h.b16 %v626
        %v2088 = vunpack.c.l.b16 %v627
        %v2089 = vunpack.c.h.b16 %v627
        %v2090 = vunpack.c.l.b16 %v628
        %v2091 = vunpack.c.h.b16 %v628
        %v2092 = vunpack.c.l.b16 %v629
        %v2093 = vunpack.c.h.b16 %v629
        %v2094 = vunpack.c.l.b16 %v630
        %v2095 = vunpack.c.h.b16 %v630
        %v2096 = vunpack.c.l.b16 %v631
        %v2097 = vunpack.c.h.b16 %v631
        %v2098 = vunpack.c.l.b16 %v632
        %v2099 = vunpack.c.h.b16 %v632
        %v2100 = vunpack.c.l.b16 %v633
        %v2101 = vunpack.c.h.b16 %v633
        %v2102 = vunpack.c.l.b16 %v634
        %v2103 = vunpack.c.h.b16 %v634
        %v2104 = vunpack.c.l.b16 %v635
        %v2105 = vunpack.c.h.b16 %v635
        %v2106 = vunpack.c.l.b16 %v636
        %v2107 = vunpack.c.h.b16 %v636
        %v2108 = vunpack.c.l.b16 %v637
        %v2109 = vunpack.c.h.b16 %v637
        %v2110 = vunpack.c.l.b16 %v638
        %v2111 = vunpack.c.h.b16 %v638
        %v2112 = vunpack.c.l.b16 %v639
        %v2113 = vunpack.c.h.b16 %v639
        %v2114 = vunpack.c.l.b16 %v640
        %v2115 = vunpack.c.h.b16 %v640
        %v2116 = vunpack.c.l.b16 %v641
        %v2117 = vunpack.c.h.b16 %v641
        %v2118 = vunpack.c.l.b16 %v642
        %v2119 = vunpack.c.h.b16 %v642
        %v2120 = vunpack.c.l.b16 %v643
        %v2121 = vunpack.c.h.b16 %v643
        %v2122 = vunpack.c.l.b16 %v644
        %v2123 = vunpack.c.h.b16 %v644
        %v2124 = vunpack.c.l.b16 %v645
        %v2125 = vunpack.c.h.b16 %v645
        %v2126 = vunpack.c.l.b16 %v646
        %v2127 = vunpack.c.h.b16 %v646
        %v2128 = vunpack.c.l.b16 %v647
        %v2129 = vunpack.c.h.b16 %v647
        %v2130 = vunpack.c.l.b16 %v648
        %v2131 = vunpack.c.h.b16 %v648
        %v2132 = vunpack.c.l.b16 %v649
        %v2133 = vunpack.c.h.b16 %v649
        %v2134 = vunpack.c.l.b16 %v650
        %v2135 = vunpack.c.h.b16 %v650
        %v2136 = vunpack.c.l.b16 %v651
        %v2137 = vunpack.c.h.b16 %v651
        %v2138 = vunpack.c.l.b16 %v652
        %v2139 = vunpack.c.h.b16 %v652
        %v2140 = vunpack.c.l.b16 %v653
        %v2141 = vunpack.c.h.b16 %v653
        %v2142 = vunpack.c.l.b16 %v654
        %v2143 = vunpack.c.h.b16 %v654
        %v2144 = vunpack.c.l.b16 %v655
        %v2145 = vunpack.c.h.b16 %v655
        %v2146 = vunpack.c.l.b16 %v656
        %v2147 = vunpack.c.h.b16 %v656
        %v2148 = vunpack.c.l.b16 %v657
        %v2149 = vunpack.c.h.b16 %v657
        %v2150 = vunpack.c.l.b16 %v658
        %v2151 = vunpack.c.h.b16 %v658
        %v2152 = vunpack.c.l.b16 %v659
        %v2153 = vunpack.c.h.b16 %v659
        %v2154 = vunpack.c.l.b16 %v660
        %v2155 = vunpack.c.h.b16 %v660
        %v2156 = vunpack.c.l.b16 %v661
        %v2157 = vunpack.c.h.b16 %v661
        %v2158 = vunpack.c.l.b16 %v662
        %v2159 = vunpack.c.h.b16 %v662
        %v2160 = vunpack.c.l.b16 %v663
        %v2161 = vunpack.c.h.b16 %v663
        %v2162 = vunpack.c.l.b16 %v664
        %v2163 = vunpack.c.h.b16 %v664
        %v2164 = vunpack.c.l.b16 %v665
        %v2165 = vunpack.c.h.b16 %v665
        %v2166 = vunpack.c.l.b16 %v666
        %v2167 = vunpack.c.h.b16 %v666
        %v2168 = vunpack.c.l.b16 %v667
        %v2169 = vunpack.c.h.b16 %v667
        %v2170 = vunpack.c.l.b16 %v668
        %v2171 = vunpack.c.h.b16 %v668
        %v2172 = vunpack.c.l.b16 %v669
        %v2173 = vunpack.c.h.b16 %v669
        %v2174 = vunpack.c.l.b16 %v670
        %v2175 = vunpack.c.h.b16 %v670
        %v2176 = vunpack.c.l.b16 %v671
        %v2177 = vunpack.c.h.b16 %v671
        %v2178 = vunpack.c.l.b16 %v672
        %v2179 = vunpack.c.h.b16 %v672
        %v2180 = vunpack.c.l.b16 %v673
        %v2181 = vunpack.c.h.b16 %v673
        %v2182 = vunpack.c.l.b16 %v674
        %v2183 = vunpack.c.h.b16 %v674
        %v2184 = vunpack.c.l.b16 %v675
        %v2185 = vunpack.c.h.b16 %v675
        %v2186 = vunpack.c.l.b16 %v676
        %v2187 = vunpack.c.h.b16 %v676
        %v2188 = vunpack.c.l.b16 %v677
        %v2189 = vunpack.c.h.b16 %v677
        %v2190 = vunpack.c.l.b16 %v678
        %v2191 = vunpack.c.h.b16 %v678
        %v2192 = vunpack.c.l.b16 %v679
        %v2193 = vunpack.c.h.b16 %v679
        %v2194 = vunpack.c.l.b16 %v680
        %v2195 = vunpack.c.h.b16 %v680
        %v2196 = vunpack.c.l.b16 %v681
        %v2197 = vunpack.c.h.b16 %v681
        %v2198 = vunpack.c.l.b16 %v682
        %v2199 = vunpack.c.h.b16 %v682
        %v2200 = vunpack.c.l.b16 %v683
        %v2201 = vunpack.c.h.b16 %v683
        %v2202 = vunpack.c.l.b16 %v684
        %v2203 = vunpack.c.h.b16 %v684
        %v2204 = vunpack.c.l.b16 %v685
        %v2205 = vunpack.c.h.b16 %v685
        %v2206 = vunpack.c.l.b16 %v686
        %v2207 = vunpack.c.h.b16 %v686
        %v2208 = vunpack.c.l.b16 %v687
        %v2209 = vunpack.c.h.b16 %v687
        %v2210 = vunpack.c.l.b16 %v688
        %v2211 = vunpack.c.h.b16 %v688
        %v2212 = vunpack.c.l.b16 %v689
        %v2213 = vunpack.c.h.b16 %v689
        %v2214 = vunpack.c.l.b16 %v690
        %v2215 = vunpack.c.h.b16 %v690
        %v2216 = vunpack.c.l.b16 %v691
        %v2217 = vunpack.c.h.b16 %v691
        %v2218 = vunpack.c.l.b16 %v692
        %v2219 = vunpack.c.h.b16 %v692
        %v2220 = vunpack.c.l.b16 %v693
        %v2221 = vunpack.c.h.b16 %v693
        %v2222 = vunpack.c.l.b16 %v694
        %v2223 = vunpack.c.h.b16 %v694
        %v2224 = vunpack.c.l.b16 %v695
        %v2225 = vunpack.c.h.b16 %v695
        %v2226 = vunpack.c.l.b16 %v696
        %v2227 = vunpack.c.h.b16 %v696
        %v2228 = vunpack.c.l.b16 %v697
        %v2229 = vunpack.c.h.b16 %v697
        %v2230 = vunpack.c.l.b16 %v698
        %v2231 = vunpack.c.h.b16 %v698
        %v2232 = vunpack.c.l.b16 %v699
        %v2233 = vunpack.c.h.b16 %v699
        %v2234 = vunpack.c.l.b16 %v700
        %v2235 = vunpack.c.h.b16 %v700
        %v2236 = vunpack.c.l.b16 %v701
        %v2237 = vunpack.c.h.b16 %v701
        %v2238 = vunpack.c.l.b16 %v702
        %v2239 = vunpack.c.h.b16 %v702
        %v2240 = vunpack.c.l.b16 %v703
        %v2241 = vunpack.c.h.b16 %v703
        %v2242 = vunpack.c.l.b16 %v704
        %v2243 = vunpack.c.h.b16 %v704
        %v2244 = vunpack.c.l.b16 %v705
        %v2245 = vunpack.c.h.b16 %v705
        %v2246 = vunpack.c.l.b16 %v706
        %v2247 = vunpack.c.h.b16 %v706
        %v2248 = vunpack.c.l.b16 %v707
        %v2249 = vunpack.c.h.b16 %v707
        %v2250 = vunpack.c.l.b16 %v708
        %v2251 = vunpack.c.h.b16 %v708
        %v2252 = vunpack.c.l.b16 %v709
        %v2253 = vunpack.c.h.b16 %v709
        %v2254 = vunpack.c.l.b16 %v710
        %v2255 = vunpack.c.h.b16 %v710
        %v2256 = vunpack.c.l.b16 %v711
        %v2257 = vunpack.c.h.b16 %v711
        %v2258 = vunpack.c.l.b16 %v712
        %v2259 = vunpack.c.h.b16 %v712
        %v2260 = vunpack.c.l.b16 %v713
        %v2261 = vunpack.c.h.b16 %v713
        %v2262 = vunpack.c.l.b16 %v714
        %v2263 = vunpack.c.h.b16 %v714
        %v2264 = vunpack.c.l.b16 %v715
        %v2265 = vunpack.c.h.b16 %v715
        %v2266 = vunpack.c.l.b16 %v716
        %v2267 = vunpack.c.h.b16 %v716
        %v2268 = vunpack.c.l.b16 %v717
        %v2269 = vunpack.c.h.b16 %v717
        %v2270 = vunpack.c.l.b16 %v718
        %v2271 = vunpack.c.h.b16 %v718
        %v2272 = vunpack.c.l.b16 %v719
        %v2273 = vunpack.c.h.b16 %v719
        %v2274 = vunpack.c.l.b16 %v720
        %v2275 = vunpack.c.h.b16 %v720
        %v2276 = vunpack.c.l.b16 %v721
        %v2277 = vunpack.c.h.b16 %v721
        %v2278 = vpack.c.b16 %v1270, %v1254
        %v2279 = vpack.c.b16 %v1271, %v1255
        %v2280 = vpack.c.b16 %v1272, %v1256
        %v2281 = vpack.c.b16 %v1273, %v1257
        %v2282 = vpack.c.b16 %v1274, %v1258
        %v2283 = vpack.c.b16 %v1275, %v1259
        %v2284 = vpack.c.b16 %v1276, %v1260
        %v2285 = vpack.c.b16 %v1277, %v1261
        %v2286 = vpack.c.b16 %v1278, %v1262
        %v2287 = vpack.c.b16 %v1279, %v1263
        %v2288 = vpack.c.b16 %v1280, %v1264
        %v2289 = vpack.c.b16 %v1281, %v1265
        %v2290 = vpack.c.b16 %v1282, %v1266
        %v2291 = vpack.c.b16 %v1283, %v1267
        %v2292 = vpack.c.b16 %v1284, %v1268
        %v2293 = vpack.c.b16 %v1285, %v1269
        %v2294 = vpack.c.b16 %v1302, %v1286
        %v2295 = vpack.c.b16 %v1303, %v1287
        %v2296 = vpack.c.b16 %v1304, %v1288
        %v2297 = vpack.c.b16 %v1305, %v1289
        %v2298 = vpack.c.b16 %v1306, %v1290
        %v2299 = vpack.c.b16 %v1307, %v1291
        %v2300 = vpack.c.b16 %v1308, %v1292
        %v2301 = vpack.c.b16 %v1309, %v1293
        %v2302 = vpack.c.b16 %v1310, %v1294
        %v2303 = vpack.c.b16 %v1311, %v1295
        %v2304 = vpack.c.b16 %v1312, %v1296
        %v2305 = vpack.c.b16 %v1313, %v1297
        %v2306 = vpack.c.b16 %v1314, %v1298
        %v2307 = vpack.c.b16 %v1315, %v1299
        %v2308 = vpack.c.b16 %v1316, %v1300
        %v2309 = vpack.c.b16 %v1317, %v1301
        %v2310 = vpack.c.b16 %v1334, %v1318
        %v2311 = vpack.c.b16 %v1335, %v1319
        %v2312 = vpack.c.b16 %v1336, %v1320
        %v2313 = vpack.c.b16 %v1337, %v1321
        %v2314 = vpack.c.b16 %v1338, %v1322
        %v2315 = vpack.c.b16 %v1339, %v1323
        %v2316 = vpack.c.b16 %v1340, %v1324
        %v2317 = vpack.c.b16 %v1341, %v1325
        %v2318 = vpack.c.b16 %v1342, %v1326
        %v2319 = vpack.c.b16 %v1343, %v1327
        %v2320 = vpack.c.b16 %v1344, %v1328
        %v2321 = vpack.c.b16 %v1345, %v1329
        %v2322 = vpack.c.b16 %v1346, %v1330
        %v2323 = vpack.c.b16 %v1347, %v1331
        %v2324 = vpack.c.b16 %v1348, %v1332
        %v2325 = vpack.c.b16 %v1349, %v1333
        %v2326 = vpack.c.b16 %v1366, %v1350
        %v2327 = vpack.c.b16 %v1367, %v1351
        %v2328 = vpack.c.b16 %v1368, %v1352
        %v2329 = vpack.c.b16 %v1369, %v1353
        %v2330 = vpack.c.b16 %v1370, %v1354
        %v2331 = vpack.c.b16 %v1371, %v1355
        %v2332 = vpack.c.b16 %v1372, %v1356
        %v2333 = vpack.c.b16 %v1373, %v1357
        %v2334 = vpack.c.b16 %v1374, %v1358
        %v2335 = vpack.c.b16 %v1375, %v1359
        %v2336 = vpack.c.b16 %v1376, %v1360
        %v2337 = vpack.c.b16 %v1377, %v1361
        %v2338 = vpack.c.b16 %v1378, %v1362
        %v2339 = vpack.c.b16 %v1379, %v1363
        %v2340 = vpack.c.b16 %v1380, %v1364
        %v2341 = vpack.c.b16 %v1381, %v1365
        %v2342 = vpack.c.b16 %v1398, %v1382
        %v2343 = vpack.c.b16 %v1399, %v1383
        %v2344 = vpack.c.b16 %v1400, %v1384
        %v2345 = vpack.c.b16 %v1401, %v1385
        %v2346 = vpack.c.b16 %v1402, %v1386
        %v2347 = vpack.c.b16 %v1403, %v1387
        %v2348 = vpack.c.b16 %v1404, %v1388
        %v2349 = vpack.c.b16 %v1405, %v1389
        %v2350 = vpack.c.b16 %v1406, %v1390
        %v2351 = vpack.c.b16 %v1407, %v1391
        %v2352 = vpack.c.b16 %v1408, %v1392
        %v2353 = vpack.c.b16 %v1409, %v1393
        %v2354 = vpack.c.b16 %v1410, %v1394
        %v2355 = vpack.c.b16 %v1411, %v1395
        %v2356 = vpack.c.b16 %v1412, %v1396
        %v2357 = vpack.c.b16 %v1413, %v1397
        %v2358 = vpack.c.b16 %v1430, %v1414
        %v2359 = vpack.c.b16 %v1431, %v1415
        %v2360 = vpack.c.b16 %v1432, %v1416
        %v2361 = vpack.c.b16 %v1433, %v1417
        %v2362 = vpack.c.b16 %v1434, %v1418
        %v2363 = vpack.c.b16 %v1435, %v1419
        %v2364 = vpack.c.b16 %v1436, %v1420
        %v2365 = vpack.c.b16 %v1437, %v1421
        %v2366 = vpack.c.b16 %v1438, %v1422
        %v2367 = vpack.c.b16 %v1439, %v1423
        %v2368 = vpack.c.b16 %v1440, %v1424
        %v2369 = vpack.c.b16 %v1441, %v1425
        %v2370 = vpack.c.b16 %v1442, %v1426
        %v2371 = vpack.c.b16 %v1443, %v1427
        %v2372 = vpack.c.b16 %v1444, %v1428
        %v2373 = vpack.c.b16 %v1445, %v1429
        %v2374 = vpack.c.b16 %v1462, %v1446
        %v2375 = vpack.c.b16 %v1463, %v1447
        %v2376 = vpack.c.b16 %v1464, %v1448
        %v2377 = vpack.c.b16 %v1465, %v1449
        %v2378 = vpack.c.b16 %v1466, %v1450
        %v2379 = vpack.c.b16 %v1467, %v1451
        %v2380 = vpack.c.b16 %v1468, %v1452
        %v2381 = vpack.c.b16 %v1469, %v1453
        %v2382 = vpack.c.b16 %v1470, %v1454
        %v2383 = vpack.c.b16 %v1471, %v1455
        %v2384 = vpack.c.b16 %v1472, %v1456
        %v2385 = vpack.c.b16 %v1473, %v1457
        %v2386 = vpack.c.b16 %v1474, %v1458
        %v2387 = vpack.c.b16 %v1475, %v1459
        %v2388 = vpack.c.b16 %v1476, %v1460
        %v2389 = vpack.c.b16 %v1477, %v1461
        %v2390 = vpack.c.b16 %v1494, %v1478
        %v2391 = vpack.c.b16 %v1495, %v1479
        %v2392 = vpack.c.b16 %v1496, %v1480
        %v2393 = vpack.c.b16 %v1497, %v1481
        %v2394 = vpack.c.b16 %v1498, %v1482
        %v2395 = vpack.c.b16 %v1499, %v1483
        %v2396 = vpack.c.b16 %v1500, %v1484
        %v2397 = vpack.c.b16 %v1501, %v1485
        %v2398 = vpack.c.b16 %v1502, %v1486
        %v2399 = vpack.c.b16 %v1503, %v1487
        %v2400 = vpack.c.b16 %v1504, %v1488
        %v2401 = vpack.c.b16 %v1505, %v1489
        %v2402 = vpack.c.b16 %v1506, %v1490
        %v2403 = vpack.c.b16 %v1507, %v1491
        %v2404 = vpack.c.b16 %v1508, %v1492
        %v2405 = vpack.c.b16 %v1509, %v1493
        %v2406 = vpack.c.b16 %v1526, %v1510
        %v2407 = vpack.c.b16 %v1527, %v1511
        %v2408 = vpack.c.b16 %v1528, %v1512
        %v2409 = vpack.c.b16 %v1529, %v1513
        %v2410 = vpack.c.b16 %v1530, %v1514
        %v2411 = vpack.c.b16 %v1531, %v1515
        %v2412 = vpack.c.b16 %v1532, %v1516
        %v2413 = vpack.c.b16 %v1533, %v1517
        %v2414 = vpack.c.b16 %v1534, %v1518
        %v2415 = vpack.c.b16 %v1535, %v1519
        %v2416 = vpack.c.b16 %v1536, %v1520
        %v2417 = vpack.c.b16 %v1537, %v1521
        %v2418 = vpack.c.b16 %v1538, %v1522
        %v2419 = vpack.c.b16 %v1539, %v1523
        %v2420 = vpack.c.b16 %v1540, %v1524
        %v2421 = vpack.c.b16 %v1541, %v1525
        %v2422 = vpack.c.b16 %v1558, %v1542
        %v2423 = vpack.c.b16 %v1559, %v1543
        %v2424 = vpack.c.b16 %v1560, %v1544
        %v2425 = vpack.c.b16 %v1561, %v1545
        %v2426 = vpack.c.b16 %v1562, %v1546
        %v2427 = vpack.c.b16 %v1563, %v1547
        %v2428 = vpack.c.b16 %v1564, %v1548
        %v2429 = vpack.c.b16 %v1565, %v1549
        %v2430 = vpack.c.b16 %v1566, %v1550
        %v2431 = vpack.c.b16 %v1567, %v1551
        %v2432 = vpack.c.b16 %v1568, %v1552
        %v2433 = vpack.c.b16 %v1569, %v1553
        %v2434 = vpack.c.b16 %v1570, %v1554
        %v2435 = vpack.c.b16 %v1571, %v1555
        %v2436 = vpack.c.b16 %v1572, %v1556
        %v2437 = vpack.c.b16 %v1573, %v1557
        %v2438 = vpack.c.b16 %v1590, %v1574
        %v2439 = vpack.c.b16 %v1591, %v1575
        %v2440 = vpack.c.b16 %v1592, %v1576
        %v2441 = vpack.c.b16 %v1593, %v1577
        %v2442 = vpack.c.b16 %v1594, %v1578
        %v2443 = vpack.c.b16 %v1595, %v1579
        %v2444 = vpack.c.b16 %v1596, %v1580
        %v2445 = vpack.c.b16 %v1597, %v1581
        %v2446 = vpack.c.b16 %v1598, %v1582
        %v2447 = vpack.c.b16 %v1599, %v1583
        %v2448 = vpack.c.b16 %v1600, %v1584
        %v2449 = vpack.c.b16 %v1601, %v1585
        %v2450 = vpack.c.b16 %v1602, %v1586
        %v2451 = vpack.c.b16 %v1603, %v1587
        %v2452 = vpack.c.b16 %v1604, %v1588
        %v2453 = vpack.c.b16 %v1605, %v1589
        %v2454 = vpack.c.b16 %v1622, %v1606
        %v2455 = vpack.c.b16 %v1623, %v1607
        %v2456 = vpack.c.b16 %v1624, %v1608
        %v2457 = vpack.c.b16 %v1625, %v1609
        %v2458 = vpack.c.b16 %v1626, %v1610
        %v2459 = vpack.c.b16 %v1627, %v1611
        %v2460 = vpack.c.b16 %v1628, %v1612
        %v2461 = vpack.c.b16 %v1629, %v1613
        %v2462 = vpack.c.b16 %v1630, %v1614
        %v2463 = vpack.c.b16 %v1631, %v1615
        %v2464 = vpack.c.b16 %v1632, %v1616
        %v2465 = vpack.c.b16 %v1633, %v1617
        %v2466 = vpack.c.b16 %v1634, %v1618
        %v2467 = vpack.c.b16 %v1635, %v1619
        %v2468 = vpack.c.b16 %v1636, %v1620
        %v2469 = vpack.c.b16 %v1637, %v1621
        %v2470 = vpack.c.b16 %v1654, %v1638
        %v2471 = vpack.c.b16 %v1655, %v1639
        %v2472 = vpack.c.b16 %v1656, %v1640
        %v2473 = vpack.c.b16 %v1657, %v1641
        %v2474 = vpack.c.b16 %v1658, %v1642
        %v2475 = vpack.c.b16 %v1659, %v1643
        %v2476 = vpack.c.b16 %v1660, %v1644
        %v2477 = vpack.c.b16 %v1661, %v1645
        %v2478 = vpack.c.b16 %v1662, %v1646
        %v2479 = vpack.c.b16 %v1663, %v1647
        %v2480 = vpack.c.b16 %v1664, %v1648
        %v2481 = vpack.c.b16 %v1665, %v1649
        %v2482 = vpack.c.b16 %v1666, %v1650
        %v2483 = vpack.c.b16 %v1667, %v1651
        %v2484 = vpack.c.b16 %v1668, %v1652
        %v2485 = vpack.c.b16 %v1669, %v1653
        %v2486 = vpack.c.b16 %v1686, %v1670
        %v2487 = vpack.c.b16 %v1687, %v1671
        %v2488 = vpack.c.b16 %v1688, %v1672
        %v2489 = vpack.c.b16 %v1689, %v1673
        %v2490 = vpack.c.b16 %v1690, %v1674
        %v2491 = vpack.c.b16 %v1691, %v1675
        %v2492 = vpack.c.b16 %v1692, %v1676
        %v2493 = vpack.c.b16 %v1693, %v1677
        %v2494 = vpack.c.b16 %v1694, %v1678
        %v2495 = vpack.c.b16 %v1695, %v1679
        %v2496 = vpack.c.b16 %v1696, %v1680
        %v2497 = vpack.c.b16 %v1697, %v1681
        %v2498 = vpack.c.b16 %v1698, %v1682
        %v2499 = vpack.c.b16 %v1699, %v1683
        %v2500 = vpack.c.b16 %v1700, %v1684
        %v2501 = vpack.c.b16 %v1701, %v1685
        %v2502 = vpack.c.b16 %v1718, %v1702
        %v2503 = vpack.c.b16 %v1719, %v1703
        %v2504 = vpack.c.b16 %v1720, %v1704
        %v2505 = vpack.c.b16 %v1721, %v1705
        %v2506 = vpack.c.b16 %v1722, %v1706
        %v2507 = vpack.c.b16 %v1723, %v1707
        %v2508 = vpack.c.b16 %v1724, %v1708
        %v2509 = vpack.c.b16 %v1725, %v1709
        %v2510 = vpack.c.b16 %v1726, %v1710
        %v2511 = vpack.c.b16 %v1727, %v1711
        %v2512 = vpack.c.b16 %v1728, %v1712
        %v2513 = vpack.c.b16 %v1729, %v1713
        %v2514 = vpack.c.b16 %v1730, %v1714
        %v2515 = vpack.c.b16 %v1731, %v1715
        %v2516 = vpack.c.b16 %v1732, %v1716
        %v2517 = vpack.c.b16 %v1733, %v1717
        %v2518 = vpack.c.b16 %v1750, %v1734
        %v2519 = vpack.c.b16 %v1751, %v1735
        %v2520 = vpack.c.b16 %v1752, %v1736
        %v2521 = vpack.c.b16 %v1753, %v1737
        %v2522 = vpack.c.b16 %v1754, %v1738
        %v2523 = vpack.c.b16 %v1755, %v1739
        %v2524 = vpack.c.b16 %v1756, %v1740
        %v2525 = vpack.c.b16 %v1757, %v1741
        %v2526 = vpack.c.b16 %v1758, %v1742
        %v2527 = vpack.c.b16 %v1759, %v1743
        %v2528 = vpack.c.b16 %v1760, %v1744
        %v2529 = vpack.c.b16 %v1761, %v1745
        %v2530 = vpack.c.b16 %v1762, %v1746
        %v2531 = vpack.c.b16 %v1763, %v1747
        %v2532 = vpack.c.b16 %v1764, %v1748
        %v2533 = vpack.c.b16 %v1765, %v1749
        %v2534 = vpack.c.b16 %v1782, %v1766
        %v2535 = vpack.c.b16 %v1783, %v1767
        %v2536 = vpack.c.b16 %v1784, %v1768
        %v2537 = vpack.c.b16 %v1785, %v1769
        %v2538 = vpack.c.b16 %v1786, %v1770
        %v2539 = vpack.c.b16 %v1787, %v1771
        %v2540 = vpack.c.b16 %v1788, %v1772
        %v2541 = vpack.c.b16 %v1789, %v1773
        %v2542 = vpack.c.b16 %v1790, %v1774
        %v2543 = vpack.c.b16 %v1791, %v1775
        %v2544 = vpack.c.b16 %v1792, %v1776
        %v2545 = vpack.c.b16 %v1793, %v1777
        %v2546 = vpack.c.b16 %v1794, %v1778
        %v2547 = vpack.c.b16 %v1795, %v1779
        %v2548 = vpack.c.b16 %v1796, %v1780
        %v2549 = vpack.c.b16 %v1797, %v1781
        %v2550 = vpack.c.b16 %v1814, %v1798
        %v2551 = vpack.c.b16 %v1815, %v1799
        %v2552 = vpack.c.b16 %v1816, %v1800
        %v2553 = vpack.c.b16 %v1817, %v1801
        %v2554 = vpack.c.b16 %v1818, %v1802
        %v2555 = vpack.c.b16 %v1819, %v1803
        %v2556 = vpack.c.b16 %v1820, %v1804
        %v2557 = vpack.c.b16 %v1821, %v1805
        %v2558 = vpack.c.b16 %v1822, %v1806
        %v2559 = vpack.c.b16 %v1823, %v1807
        %v2560 = vpack.c.b16 %v1824, %v1808
        %v2561 = vpack.c.b16 %v1825, %v1809
        %v2562 = vpack.c.b16 %v1826, %v1810
        %v2563 = vpack.c.b16 %v1827, %v1811
        %v2564 = vpack.c.b16 %v1828, %v1812
        %v2565 = vpack.c.b16 %v1829, %v1813
        %v2566 = vpack.c.b16 %v1846, %v1830
        %v2567 = vpack.c.b16 %v1847, %v1831
        %v2568 = vpack.c.b16 %v1848, %v1832
        %v2569 = vpack.c.b16 %v1849, %v1833
        %v2570 = vpack.c.b16 %v1850, %v1834
        %v2571 = vpack.c.b16 %v1851, %v1835
        %v2572 = vpack.c.b16 %v1852, %v1836
        %v2573 = vpack.c.b16 %v1853, %v1837
        %v2574 = vpack.c.b16 %v1854, %v1838
        %v2575 = vpack.c.b16 %v1855, %v1839
        %v2576 = vpack.c.b16 %v1856, %v1840
        %v2577 = vpack.c.b16 %v1857, %v1841
        %v2578 = vpack.c.b16 %v1858, %v1842
        %v2579 = vpack.c.b16 %v1859, %v1843
        %v2580 = vpack.c.b16 %v1860, %v1844
        %v2581 = vpack.c.b16 %v1861, %v1845
        %v2582 = vpack.c.b16 %v1878, %v1862
        %v2583 = vpack.c.b16 %v1879, %v1863
        %v2584 = vpack.c.b16 %v1880, %v1864
        %v2585 = vpack.c.b16 %v1881, %v1865
        %v2586 = vpack.c.b16 %v1882, %v1866
        %v2587 = vpack.c.b16 %v1883, %v1867
        %v2588 = vpack.c.b16 %v1884, %v1868
        %v2589 = vpack.c.b16 %v1885, %v1869
        %v2590 = vpack.c.b16 %v1886, %v1870
        %v2591 = vpack.c.b16 %v1887, %v1871
        %v2592 = vpack.c.b16 %v1888, %v1872
        %v2593 = vpack.c.b16 %v1889, %v1873
        %v2594 = vpack.c.b16 %v1890, %v1874
        %v2595 = vpack.c.b16 %v1891, %v1875
        %v2596 = vpack.c.b16 %v1892, %v1876
        %v2597 = vpack.c.b16 %v1893, %v1877
        %v2598 = vpack.c.b16 %v1910, %v1894
        %v2599 = vpack.c.b16 %v1911, %v1895
        %v2600 = vpack.c.b16 %v1912, %v1896
        %v2601 = vpack.c.b16 %v1913, %v1897
        %v2602 = vpack.c.b16 %v1914, %v1898
        %v2603 = vpack.c.b16 %v1915, %v1899
        %v2604 = vpack.c.b16 %v1916, %v1900
        %v2605 = vpack.c.b16 %v1917, %v1901
        %v2606 = vpack.c.b16 %v1918, %v1902
        %v2607 = vpack.c.b16 %v1919, %v1903
        %v2608 = vpack.c.b16 %v1920, %v1904
        %v2609 = vpack.c.b16 %v1921, %v1905
        %v2610 = vpack.c.b16 %v1922, %v1906
        %v2611 = vpack.c.b16 %v1923, %v1907
        %v2612 = vpack.c.b16 %v1924, %v1908
        %v2613 = vpack.c.b16 %v1925, %v1909
        %v2614 = vpack.c.b16 %v1942, %v1926
        %v2615 = vpack.c.b16 %v1943, %v1927
        %v2616 = vpack.c.b16 %v1944, %v1928
        %v2617 = vpack.c.b16 %v1945, %v1929
        %v2618 = vpack.c.b16 %v1946, %v1930
        %v2619 = vpack.c.b16 %v1947, %v1931
        %v2620 = vpack.c.b16 %v1948, %v1932
        %v2621 = vpack.c.b16 %v1949, %v1933
        %v2622 = vpack.c.b16 %v1950, %v1934
        %v2623 = vpack.c.b16 %v1951, %v1935
        %v2624 = vpack.c.b16 %v1952, %v1936
        %v2625 = vpack.c.b16 %v1953, %v1937
        %v2626 = vpack.c.b16 %v1954, %v1938
        %v2627 = vpack.c.b16 %v1955, %v1939
        %v2628 = vpack.c.b16 %v1956, %v1940
        %v2629 = vpack.c.b16 %v1957, %v1941
        %v2630 = vpack.c.b16 %v1974, %v1958
        %v2631 = vpack.c.b16 %v1975, %v1959
        %v2632 = vpack.c.b16 %v1976, %v1960
        %v2633 = vpack.c.b16 %v1977, %v1961
        %v2634 = vpack.c.b16 %v1978, %v1962
        %v2635 = vpack.c.b16 %v1979, %v1963
        %v2636 = vpack.c.b16 %v1980, %v1964
        %v2637 = vpack.c.b16 %v1981, %v1965
        %v2638 = vpack.c.b16 %v1982, %v1966
        %v2639 = vpack.c.b16 %v1983, %v1967
        %v2640 = vpack.c.b16 %v1984, %v1968
        %v2641 = vpack.c.b16 %v1985, %v1969
        %v2642 = vpack.c.b16 %v1986, %v1970
        %v2643 = vpack.c.b16 %v1987, %v1971
        %v2644 = vpack.c.b16 %v1988, %v1972
        %v2645 = vpack.c.b16 %v1989, %v1973
        %v2646 = vpack.c.b16 %v2006, %v1990
        %v2647 = vpack.c.b16 %v2007, %v1991
        %v2648 = vpack.c.b16 %v2008, %v1992
        %v2649 = vpack.c.b16 %v2009, %v1993
        %v2650 = vpack.c.b16 %v2010, %v1994
        %v2651 = vpack.c.b16 %v2011, %v1995
        %v2652 = vpack.c.b16 %v2012, %v1996
        %v2653 = vpack.c.b16 %v2013, %v1997
        %v2654 = vpack.c.b16 %v2014, %v1998
        %v2655 = vpack.c.b16 %v2015, %v1999
        %v2656 = vpack.c.b16 %v2016, %v2000
        %v2657 = vpack.c.b16 %v2017, %v2001
        %v2658 = vpack.c.b16 %v2018, %v2002
        %v2659 = vpack.c.b16 %v2019, %v2003
        %v2660 = vpack.c.b16 %v2020, %v2004
        %v2661 = vpack.c.b16 %v2021, %v2005
        %v2662 = vpack.c.b16 %v2038, %v2022
        %v2663 = vpack.c.b16 %v2039, %v2023
        %v2664 = vpack.c.b16 %v2040, %v2024
        %v2665 = vpack.c.b16 %v2041, %v2025
        %v2666 = vpack.c.b16 %v2042, %v2026
        %v2667 = vpack.c.b16 %v2043, %v2027
        %v2668 = vpack.c.b16 %v2044, %v2028
        %v2669 = vpack.c.b16 %v2045, %v2029
        %v2670 = vpack.c.b16 %v2046, %v2030
        %v2671 = vpack.c.b16 %v2047, %v2031
        %v2672 = vpack.c.b16 %v2048, %v2032
        %v2673 = vpack.c.b16 %v2049, %v2033
        %v2674 = vpack.c.b16 %v2050, %v2034
        %v2675 = vpack.c.b16 %v2051, %v2035
        %v2676 = vpack.c.b16 %v2052, %v2036
        %v2677 = vpack.c.b16 %v2053, %v2037
        %v2678 = vpack.c.b16 %v2070, %v2054
        %v2679 = vpack.c.b16 %v2071, %v2055
        %v2680 = vpack.c.b16 %v2072, %v2056
        %v2681 = vpack.c.b16 %v2073, %v2057
        %v2682 = vpack.c.b16 %v2074, %v2058
        %v2683 = vpack.c.b16 %v2075, %v2059
        %v2684 = vpack.c.b16 %v2076, %v2060
        %v2685 = vpack.c.b16 %v2077, %v2061
        %v2686 = vpack.c.b16 %v2078, %v2062
        %v2687 = vpack.c.b16 %v2079, %v2063
        %v2688 = vpack.c.b16 %v2080, %v2064
        %v2689 = vpack.c.b16 %v2081, %v2065
        %v2690 = vpack.c.b16 %v2082, %v2066
        %v2691 = vpack.c.b16 %v2083, %v2067
        %v2692 = vpack.c.b16 %v2084, %v2068
        %v2693 = vpack.c.b16 %v2085, %v2069
        %v2694 = vpack.c.b16 %v2102, %v2086
        %v2695 = vpack.c.b16 %v2103, %v2087
        %v2696 = vpack.c.b16 %v2104, %v2088
        %v2697 = vpack.c.b16 %v2105, %v2089
        %v2698 = vpack.c.b16 %v2106, %v2090
        %v2699 = vpack.c.b16 %v2107, %v2091
        %v2700 = vpack.c.b16 %v2108, %v2092
        %v2701 = vpack.c.b16 %v2109, %v2093
        %v2702 = vpack.c.b16 %v2110, %v2094
        %v2703 = vpack.c.b16 %v2111, %v2095
        %v2704 = vpack.c.b16 %v2112, %v2096
        %v2705 = vpack.c.b16 %v2113, %v2097
        %v2706 = vpack.c.b16 %v2114, %v2098
        %v2707 = vpack.c.b16 %v2115, %v2099
        %v2708 = vpack.c.b16 %v2116, %v2100
        %v2709 = vpack.c.b16 %v2117, %v2101
        %v2710 = vpack.c.b16 %v2134, %v2118
        %v2711 = vpack.c.b16 %v2135, %v2119
        %v2712 = vpack.c.b16 %v2136, %v2120
        %v2713 = vpack.c.b16 %v2137, %v2121
        %v2714 = vpack.c.b16 %v2138, %v2122
        %v2715 = vpack.c.b16 %v2139, %v2123
        %v2716 = vpack.c.b16 %v2140, %v2124
        %v2717 = vpack.c.b16 %v2141, %v2125
        %v2718 = vpack.c.b16 %v2142, %v2126
        %v2719 = vpack.c.b16 %v2143, %v2127
        %v2720 = vpack.c.b16 %v2144, %v2128
        %v2721 = vpack.c.b16 %v2145, %v2129
        %v2722 = vpack.c.b16 %v2146, %v2130
        %v2723 = vpack.c.b16 %v2147, %v2131
        %v2724 = vpack.c.b16 %v2148, %v2132
        %v2725 = vpack.c.b16 %v2149, %v2133
        %v2726 = vpack.c.b16 %v2166, %v2150
        %v2727 = vpack.c.b16 %v2167, %v2151
        %v2728 = vpack.c.b16 %v2168, %v2152
        %v2729 = vpack.c.b16 %v2169, %v2153
        %v2730 = vpack.c.b16 %v2170, %v2154
        %v2731 = vpack.c.b16 %v2171, %v2155
        %v2732 = vpack.c.b16 %v2172, %v2156
        %v2733 = vpack.c.b16 %v2173, %v2157
        %v2734 = vpack.c.b16 %v2174, %v2158
        %v2735 = vpack.c.b16 %v2175, %v2159
        %v2736 = vpack.c.b16 %v2176, %v2160
        %v2737 = vpack.c.b16 %v2177, %v2161
        %v2738 = vpack.c.b16 %v2178, %v2162
        %v2739 = vpack.c.b16 %v2179, %v2163
        %v2740 = vpack.c.b16 %v2180, %v2164
        %v2741 = vpack.c.b16 %v2181, %v2165
        %v2742 = vpack.c.b16 %v2198, %v2182
        %v2743 = vpack.c.b16 %v2199, %v2183
        %v2744 = vpack.c.b16 %v2200, %v2184
        %v2745 = vpack.c.b16 %v2201, %v2185
        %v2746 = vpack.c.b16 %v2202, %v2186
        %v2747 = vpack.c.b16 %v2203, %v2187
        %v2748 = vpack.c.b16 %v2204, %v2188
        %v2749 = vpack.c.b16 %v2205, %v2189
        %v2750 = vpack.c.b16 %v2206, %v2190
        %v2751 = vpack.c.b16 %v2207, %v2191
        %v2752 = vpack.c.b16 %v2208, %v2192
        %v2753 = vpack.c.b16 %v2209, %v2193
        %v2754 = vpack.c.b16 %v2210, %v2194
        %v2755 = vpack.c.b16 %v2211, %v2195
        %v2756 = vpack.c.b16 %v2212, %v2196
        %v2757 = vpack.c.b16 %v2213, %v2197
        %v2758 = vpack.c.b16 %v2230, %v2214
        %v2759 = vpack.c.b16 %v2231, %v2215
        %v2760 = vpack.c.b16 %v2232, %v2216
        %v2761 = vpack.c.b16 %v2233, %v2217
        %v2762 = vpack.c.b16 %v2234, %v2218
        %v2763 = vpack.c.b16 %v2235, %v2219
        %v2764 = vpack.c.b16 %v2236, %v2220
        %v2765 = vpack.c.b16 %v2237, %v2221
        %v2766 = vpack.c.b16 %v2238, %v2222
        %v2767 = vpack.c.b16 %v2239, %v2223
        %v2768 = vpack.c.b16 %v2240, %v2224
        %v2769 = vpack.c.b16 %v2241, %v2225
        %v2770 = vpack.c.b16 %v2242, %v2226
        %v2771 = vpack.c.b16 %v2243, %v2227
        %v2772 = vpack.c.b16 %v2244, %v2228
        %v2773 = vpack.c.b16 %v2245, %v2229
        %v2774 = vpack.c.b16 %v2262, %v2246
        %v2775 = vpack.c.b16 %v2263, %v2247
        %v2776 = vpack.c.b16 %v2264, %v2248
        %v2777 = vpack.c.b16 %v2265, %v2249
        %v2778 = vpack.c.b16 %v2266, %v2250
        %v2779 = vpack.c.b16 %v2267, %v2251
        %v2780 = vpack.c.b16 %v2268, %v2252
        %v2781 = vpack.c.b16 %v2269, %v2253
        %v2782 = vpack.c.b16 %v2270, %v2254
        %v2783 = vpack.c.b16 %v2271, %v2255
        %v2784 = vpack.c.b16 %v2272, %v2256
        %v2785 = vpack.c.b16 %v2273, %v2257
        %v2786 = vpack.c.b16 %v2274, %v2258
        %v2787 = vpack.c.b16 %v2275, %v2259
        %v2788 = vpack.c.b16 %v2276, %v2260
        %v2789 = vpack.c.b16 %v2277, %v2261
        %3302 = vmatpush.bf16.msra.mxu0 %v2390
        %3303 = vmatpush.bf16.msra.mxu0 %v2374
        %3304 = vmatpush.bf16.msra.mxu0 %v2358
        %3305 = vmatpush.bf16.msra.mxu0 %v2342
        %3306 = vmatpush.bf16.msra.mxu0 %v2326
        %3307 = vmatpush.bf16.msra.mxu0 %v2310
        %3308 = vmatpush.bf16.msra.mxu0 %v2294
        %3309 = vmatpush.bf16.msra.mxu0 %v2278
        %3310 = vmatmul.bf16.gmra.mxu0 %v734
        %v3311 = vpop.f32.mrf.mxu0
        %v3312 = vadd.f32 0.0, %v3311
        %v3313 = vpop.f32.mrf.mxu0
        %v3314 = vadd.f32 0.0, %v3313
        %3315 = vdwg.mxu0
        %3316 = vmatpush.bf16.msra.mxu0 %v2518
        %3317 = vmatpush.bf16.msra.mxu0 %v2502
        %3318 = vmatpush.bf16.msra.mxu0 %v2486
        %3319 = vmatpush.bf16.msra.mxu0 %v2470
        %3320 = vmatpush.bf16.msra.mxu0 %v2454
        %3321 = vmatpush.bf16.msra.mxu0 %v2438
        %3322 = vmatpush.bf16.msra.mxu0 %v2422
        %3323 = vmatpush.bf16.msra.mxu0 %v2406
        %3324 = vmatmul.bf16.gmra.mxu0 %v735
        %v3325 = vpop.f32.mrf.mxu0
        %v3326 = vadd.f32 %v3312, %v3325
        %v3327 = vpop.f32.mrf.mxu0
        %v3328 = vadd.f32 %v3314, %v3327
        %3329 = vdwg.mxu0
        %3330 = vmatpush.bf16.msra.mxu0 %v2646
        %3331 = vmatpush.bf16.msra.mxu0 %v2630
        %3332 = vmatpush.bf16.msra.mxu0 %v2614
        %3333 = vmatpush.bf16.msra.mxu0 %v2598
        %3334 = vmatpush.bf16.msra.mxu0 %v2582
        %3335 = vmatpush.bf16.msra.mxu0 %v2566
        %3336 = vmatpush.bf16.msra.mxu0 %v2550
        %3337 = vmatpush.bf16.msra.mxu0 %v2534
        %3338 = vmatmul.bf16.gmra.mxu0 %v736
        %v3339 = vpop.f32.mrf.mxu0
        %v3340 = vadd.f32 %v3326, %v3339
        %v3341 = vpop.f32.mrf.mxu0
        %v3342 = vadd.f32 %v3328, %v3341
        %3343 = vdwg.mxu0
        %3344 = vmatpush.bf16.msra.mxu0 %v2774
        %3345 = vmatpush.bf16.msra.mxu0 %v2758
        %3346 = vmatpush.bf16.msra.mxu0 %v2742
        %3347 = vmatpush.bf16.msra.mxu0 %v2726
        %3348 = vmatpush.bf16.msra.mxu0 %v2710
        %3349 = vmatpush.bf16.msra.mxu0 %v2694
        %3350 = vmatpush.bf16.msra.mxu0 %v2678
        %3351 = vmatpush.bf16.msra.mxu0 %v2662
        %3352 = vmatmul.bf16.gmra.mxu0 %v737
        %v3353 = vpop.f32.mrf.mxu0
        %v3354 = vadd.f32 %v3340, %v3353
        %v3355 = vpop.f32.mrf.mxu0
        %v3356 = vadd.f32 %v3342, %v3355
        %3357 = vdwg.mxu0
        %3358 = vmatpush.bf16.msra.mxu0 %v2391
        %3359 = vmatpush.bf16.msra.mxu0 %v2375
        %3360 = vmatpush.bf16.msra.mxu0 %v2359
        %3361 = vmatpush.bf16.msra.mxu0 %v2343
        %3362 = vmatpush.bf16.msra.mxu0 %v2327
        %3363 = vmatpush.bf16.msra.mxu0 %v2311
        %3364 = vmatpush.bf16.msra.mxu0 %v2295
        %3365 = vmatpush.bf16.msra.mxu0 %v2279
        %3366 = vmatmul.bf16.gmra.mxu0 %v734
        %v3367 = vpop.f32.mrf.mxu0
        %v3368 = vadd.f32 0.0, %v3367
        %v3369 = vpop.f32.mrf.mxu0
        %v3370 = vadd.f32 0.0, %v3369
        %3371 = vdwg.mxu0
        %3372 = vmatpush.bf16.msra.mxu0 %v2519
        %3373 = vmatpush.bf16.msra.mxu0 %v2503
        %3374 = vmatpush.bf16.msra.mxu0 %v2487
        %3375 = vmatpush.bf16.msra.mxu0 %v2471
        %3376 = vmatpush.bf16.msra.mxu0 %v2455
        %3377 = vmatpush.bf16.msra.mxu0 %v2439
        %3378 = vmatpush.bf16.msra.mxu0 %v2423
        %3379 = vmatpush.bf16.msra.mxu0 %v2407
        %3380 = vmatmul.bf16.gmra.mxu0 %v735
        %v3381 = vpop.f32.mrf.mxu0
        %v3382 = vadd.f32 %v3368, %v3381
        %v3383 = vpop.f32.mrf.mxu0
        %v3384 = vadd.f32 %v3370, %v3383
        %3385 = vdwg.mxu0
        %3386 = vmatpush.bf16.msra.mxu0 %v2647
        %3387 = vmatpush.bf16.msra.mxu0 %v2631
        %3388 = vmatpush.bf16.msra.mxu0 %v2615
        %3389 = vmatpush.bf16.msra.mxu0 %v2599
        %3390 = vmatpush.bf16.msra.mxu0 %v2583
        %3391 = vmatpush.bf16.msra.mxu0 %v2567
        %3392 = vmatpush.bf16.msra.mxu0 %v2551
        %3393 = vmatpush.bf16.msra.mxu0 %v2535
        %3394 = vmatmul.bf16.gmra.mxu0 %v736
        %v3395 = vpop.f32.mrf.mxu0
        %v3396 = vadd.f32 %v3382, %v3395
        %v3397 = vpop.f32.mrf.mxu0
        %v3398 = vadd.f32 %v3384, %v3397
        %3399 = vdwg.mxu0
        %3400 = vmatpush.bf16.msra.mxu0 %v2775
        %3401 = vmatpush.bf16.msra.mxu0 %v2759
        %3402 = vmatpush.bf16.msra.mxu0 %v2743
        %3403 = vmatpush.bf16.msra.mxu0 %v2727
        %3404 = vmatpush.bf16.msra.mxu0 %v2711
        %3405 = vmatpush.bf16.msra.mxu0 %v2695
        %3406 = vmatpush.bf16.msra.mxu0 %v2679
        %3407 = vmatpush.bf16.msra.mxu0 %v2663
        %3408 = vmatmul.bf16.gmra.mxu0 %v737
        %v3409 = vpop.f32.mrf.mxu0
        %v3410 = vadd.f32 %v3396, %v3409
        %v3411 = vpop.f32.mrf.mxu0
        %v3412 = vadd.f32 %v3398, %v3411
        %3413 = vdwg.mxu0
        %3414 = vmatpush.bf16.msra.mxu0 %v2392
        %3415 = vmatpush.bf16.msra.mxu0 %v2376
        %3416 = vmatpush.bf16.msra.mxu0 %v2360
        %3417 = vmatpush.bf16.msra.mxu0 %v2344
        %3418 = vmatpush.bf16.msra.mxu0 %v2328
        %3419 = vmatpush.bf16.msra.mxu0 %v2312
        %3420 = vmatpush.bf16.msra.mxu0 %v2296
        %3421 = vmatpush.bf16.msra.mxu0 %v2280
        %3422 = vmatmul.bf16.gmra.mxu0 %v734
        %v3423 = vpop.f32.mrf.mxu0
        %v3424 = vadd.f32 0.0, %v3423
        %v3425 = vpop.f32.mrf.mxu0
        %v3426 = vadd.f32 0.0, %v3425
        %3427 = vdwg.mxu0
        %3428 = vmatpush.bf16.msra.mxu0 %v2520
        %3429 = vmatpush.bf16.msra.mxu0 %v2504
        %3430 = vmatpush.bf16.msra.mxu0 %v2488
        %3431 = vmatpush.bf16.msra.mxu0 %v2472
        %3432 = vmatpush.bf16.msra.mxu0 %v2456
        %3433 = vmatpush.bf16.msra.mxu0 %v2440
        %3434 = vmatpush.bf16.msra.mxu0 %v2424
        %3435 = vmatpush.bf16.msra.mxu0 %v2408
        %3436 = vmatmul.bf16.gmra.mxu0 %v735
        %v3437 = vpop.f32.mrf.mxu0
        %v3438 = vadd.f32 %v3424, %v3437
        %v3439 = vpop.f32.mrf.mxu0
        %v3440 = vadd.f32 %v3426, %v3439
        %3441 = vdwg.mxu0
        %3442 = vmatpush.bf16.msra.mxu0 %v2648
        %3443 = vmatpush.bf16.msra.mxu0 %v2632
        %3444 = vmatpush.bf16.msra.mxu0 %v2616
        %3445 = vmatpush.bf16.msra.mxu0 %v2600
        %3446 = vmatpush.bf16.msra.mxu0 %v2584
        %3447 = vmatpush.bf16.msra.mxu0 %v2568
        %3448 = vmatpush.bf16.msra.mxu0 %v2552
        %3449 = vmatpush.bf16.msra.mxu0 %v2536
        %3450 = vmatmul.bf16.gmra.mxu0 %v736
        %v3451 = vpop.f32.mrf.mxu0
        %v3452 = vadd.f32 %v3438, %v3451
        %v3453 = vpop.f32.mrf.mxu0
        %v3454 = vadd.f32 %v3440, %v3453
        %3455 = vdwg.mxu0
        %3456 = vmatpush.bf16.msra.mxu0 %v2776
        %3457 = vmatpush.bf16.msra.mxu0 %v2760
        %3458 = vmatpush.bf16.msra.mxu0 %v2744
        %3459 = vmatpush.bf16.msra.mxu0 %v2728
        %3460 = vmatpush.bf16.msra.mxu0 %v2712
        %3461 = vmatpush.bf16.msra.mxu0 %v2696
        %3462 = vmatpush.bf16.msra.mxu0 %v2680
        %3463 = vmatpush.bf16.msra.mxu0 %v2664
        %3464 = vmatmul.bf16.gmra.mxu0 %v737
        %v3465 = vpop.f32.mrf.mxu0
        %v3466 = vadd.f32 %v3452, %v3465
        %v3467 = vpop.f32.mrf.mxu0
        %v3468 = vadd.f32 %v3454, %v3467
        %3469 = vdwg.mxu0
        %3470 = vmatpush.bf16.msra.mxu0 %v2393
        %3471 = vmatpush.bf16.msra.mxu0 %v2377
        %3472 = vmatpush.bf16.msra.mxu0 %v2361
        %3473 = vmatpush.bf16.msra.mxu0 %v2345
        %3474 = vmatpush.bf16.msra.mxu0 %v2329
        %3475 = vmatpush.bf16.msra.mxu0 %v2313
        %3476 = vmatpush.bf16.msra.mxu0 %v2297
        %3477 = vmatpush.bf16.msra.mxu0 %v2281
        %3478 = vmatmul.bf16.gmra.mxu0 %v734
        %v3479 = vpop.f32.mrf.mxu0
        %v3480 = vadd.f32 0.0, %v3479
        %v3481 = vpop.f32.mrf.mxu0
        %v3482 = vadd.f32 0.0, %v3481
        %3483 = vdwg.mxu0
        %3484 = vmatpush.bf16.msra.mxu0 %v2521
        %3485 = vmatpush.bf16.msra.mxu0 %v2505
        %3486 = vmatpush.bf16.msra.mxu0 %v2489
        %3487 = vmatpush.bf16.msra.mxu0 %v2473
        %3488 = vmatpush.bf16.msra.mxu0 %v2457
        %3489 = vmatpush.bf16.msra.mxu0 %v2441
        %3490 = vmatpush.bf16.msra.mxu0 %v2425
        %3491 = vmatpush.bf16.msra.mxu0 %v2409
        %3492 = vmatmul.bf16.gmra.mxu0 %v735
        %v3493 = vpop.f32.mrf.mxu0
        %v3494 = vadd.f32 %v3480, %v3493
        %v3495 = vpop.f32.mrf.mxu0
        %v3496 = vadd.f32 %v3482, %v3495
        %3497 = vdwg.mxu0
        %3498 = vmatpush.bf16.msra.mxu0 %v2649
        %3499 = vmatpush.bf16.msra.mxu0 %v2633
        %3500 = vmatpush.bf16.msra.mxu0 %v2617
        %3501 = vmatpush.bf16.msra.mxu0 %v2601
        %3502 = vmatpush.bf16.msra.mxu0 %v2585
        %3503 = vmatpush.bf16.msra.mxu0 %v2569
        %3504 = vmatpush.bf16.msra.mxu0 %v2553
        %3505 = vmatpush.bf16.msra.mxu0 %v2537
        %3506 = vmatmul.bf16.gmra.mxu0 %v736
        %v3507 = vpop.f32.mrf.mxu0
        %v3508 = vadd.f32 %v3494, %v3507
        %v3509 = vpop.f32.mrf.mxu0
        %v3510 = vadd.f32 %v3496, %v3509
        %3511 = vdwg.mxu0
        %3512 = vmatpush.bf16.msra.mxu0 %v2777
        %3513 = vmatpush.bf16.msra.mxu0 %v2761
        %3514 = vmatpush.bf16.msra.mxu0 %v2745
        %3515 = vmatpush.bf16.msra.mxu0 %v2729
        %3516 = vmatpush.bf16.msra.mxu0 %v2713
        %3517 = vmatpush.bf16.msra.mxu0 %v2697
        %3518 = vmatpush.bf16.msra.mxu0 %v2681
        %3519 = vmatpush.bf16.msra.mxu0 %v2665
        %3520 = vmatmul.bf16.gmra.mxu0 %v737
        %v3521 = vpop.f32.mrf.mxu0
        %v3522 = vadd.f32 %v3508, %v3521
        %v3523 = vpop.f32.mrf.mxu0
        %v3524 = vadd.f32 %v3510, %v3523
        %3525 = vdwg.mxu0
        %3526 = vmatpush.bf16.msra.mxu0 %v2394
        %3527 = vmatpush.bf16.msra.mxu0 %v2378
        %3528 = vmatpush.bf16.msra.mxu0 %v2362
        %3529 = vmatpush.bf16.msra.mxu0 %v2346
        %3530 = vmatpush.bf16.msra.mxu0 %v2330
        %3531 = vmatpush.bf16.msra.mxu0 %v2314
        %3532 = vmatpush.bf16.msra.mxu0 %v2298
        %3533 = vmatpush.bf16.msra.mxu0 %v2282
        %3534 = vmatmul.bf16.gmra.mxu0 %v734
        %v3535 = vpop.f32.mrf.mxu0
        %v3536 = vadd.f32 0.0, %v3535
        %v3537 = vpop.f32.mrf.mxu0
        %v3538 = vadd.f32 0.0, %v3537
        %3539 = vdwg.mxu0
        %3540 = vmatpush.bf16.msra.mxu0 %v2522
        %3541 = vmatpush.bf16.msra.mxu0 %v2506
        %3542 = vmatpush.bf16.msra.mxu0 %v2490
        %3543 = vmatpush.bf16.msra.mxu0 %v2474
        %3544 = vmatpush.bf16.msra.mxu0 %v2458
        %3545 = vmatpush.bf16.msra.mxu0 %v2442
        %3546 = vmatpush.bf16.msra.mxu0 %v2426
        %3547 = vmatpush.bf16.msra.mxu0 %v2410
        %3548 = vmatmul.bf16.gmra.mxu0 %v735
        %v3549 = vpop.f32.mrf.mxu0
        %v3550 = vadd.f32 %v3536, %v3549
        %v3551 = vpop.f32.mrf.mxu0
        %v3552 = vadd.f32 %v3538, %v3551
        %3553 = vdwg.mxu0
        %3554 = vmatpush.bf16.msra.mxu0 %v2650
        %3555 = vmatpush.bf16.msra.mxu0 %v2634
        %3556 = vmatpush.bf16.msra.mxu0 %v2618
        %3557 = vmatpush.bf16.msra.mxu0 %v2602
        %3558 = vmatpush.bf16.msra.mxu0 %v2586
        %3559 = vmatpush.bf16.msra.mxu0 %v2570
        %3560 = vmatpush.bf16.msra.mxu0 %v2554
        %3561 = vmatpush.bf16.msra.mxu0 %v2538
        %3562 = vmatmul.bf16.gmra.mxu0 %v736
        %v3563 = vpop.f32.mrf.mxu0
        %v3564 = vadd.f32 %v3550, %v3563
        %v3565 = vpop.f32.mrf.mxu0
        %v3566 = vadd.f32 %v3552, %v3565
        %3567 = vdwg.mxu0
        %3568 = vmatpush.bf16.msra.mxu0 %v2778
        %3569 = vmatpush.bf16.msra.mxu0 %v2762
        %3570 = vmatpush.bf16.msra.mxu0 %v2746
        %3571 = vmatpush.bf16.msra.mxu0 %v2730
        %3572 = vmatpush.bf16.msra.mxu0 %v2714
        %3573 = vmatpush.bf16.msra.mxu0 %v2698
        %3574 = vmatpush.bf16.msra.mxu0 %v2682
        %3575 = vmatpush.bf16.msra.mxu0 %v2666
        %3576 = vmatmul.bf16.gmra.mxu0 %v737
        %v3577 = vpop.f32.mrf.mxu0
        %v3578 = vadd.f32 %v3564, %v3577
        %v3579 = vpop.f32.mrf.mxu0
        %v3580 = vadd.f32 %v3566, %v3579
        %3581 = vdwg.mxu0
        %3582 = vmatpush.bf16.msra.mxu0 %v2395
        %3583 = vmatpush.bf16.msra.mxu0 %v2379
        %3584 = vmatpush.bf16.msra.mxu0 %v2363
        %3585 = vmatpush.bf16.msra.mxu0 %v2347
        %3586 = vmatpush.bf16.msra.mxu0 %v2331
        %3587 = vmatpush.bf16.msra.mxu0 %v2315
        %3588 = vmatpush.bf16.msra.mxu0 %v2299
        %3589 = vmatpush.bf16.msra.mxu0 %v2283
        %3590 = vmatmul.bf16.gmra.mxu0 %v734
        %v3591 = vpop.f32.mrf.mxu0
        %v3592 = vadd.f32 0.0, %v3591
        %v3593 = vpop.f32.mrf.mxu0
        %v3594 = vadd.f32 0.0, %v3593
        %3595 = vdwg.mxu0
        %3596 = vmatpush.bf16.msra.mxu0 %v2523
        %3597 = vmatpush.bf16.msra.mxu0 %v2507
        %3598 = vmatpush.bf16.msra.mxu0 %v2491
        %3599 = vmatpush.bf16.msra.mxu0 %v2475
        %3600 = vmatpush.bf16.msra.mxu0 %v2459
        %3601 = vmatpush.bf16.msra.mxu0 %v2443
        %3602 = vmatpush.bf16.msra.mxu0 %v2427
        %3603 = vmatpush.bf16.msra.mxu0 %v2411
        %3604 = vmatmul.bf16.gmra.mxu0 %v735
        %v3605 = vpop.f32.mrf.mxu0
        %v3606 = vadd.f32 %v3592, %v3605
        %v3607 = vpop.f32.mrf.mxu0
        %v3608 = vadd.f32 %v3594, %v3607
        %3609 = vdwg.mxu0
        %3610 = vmatpush.bf16.msra.mxu0 %v2651
        %3611 = vmatpush.bf16.msra.mxu0 %v2635
        %3612 = vmatpush.bf16.msra.mxu0 %v2619
        %3613 = vmatpush.bf16.msra.mxu0 %v2603
        %3614 = vmatpush.bf16.msra.mxu0 %v2587
        %3615 = vmatpush.bf16.msra.mxu0 %v2571
        %3616 = vmatpush.bf16.msra.mxu0 %v2555
        %3617 = vmatpush.bf16.msra.mxu0 %v2539
        %3618 = vmatmul.bf16.gmra.mxu0 %v736
        %v3619 = vpop.f32.mrf.mxu0
        %v3620 = vadd.f32 %v3606, %v3619
        %v3621 = vpop.f32.mrf.mxu0
        %v3622 = vadd.f32 %v3608, %v3621
        %3623 = vdwg.mxu0
        %3624 = vmatpush.bf16.msra.mxu0 %v2779
        %3625 = vmatpush.bf16.msra.mxu0 %v2763
        %3626 = vmatpush.bf16.msra.mxu0 %v2747
        %3627 = vmatpush.bf16.msra.mxu0 %v2731
        %3628 = vmatpush.bf16.msra.mxu0 %v2715
        %3629 = vmatpush.bf16.msra.mxu0 %v2699
        %3630 = vmatpush.bf16.msra.mxu0 %v2683
        %3631 = vmatpush.bf16.msra.mxu0 %v2667
        %3632 = vmatmul.bf16.gmra.mxu0 %v737
        %v3633 = vpop.f32.mrf.mxu0
        %v3634 = vadd.f32 %v3620, %v3633
        %v3635 = vpop.f32.mrf.mxu0
        %v3636 = vadd.f32 %v3622, %v3635
        %3637 = vdwg.mxu0
        %3638 = vmatpush.bf16.msra.mxu0 %v2396
        %3639 = vmatpush.bf16.msra.mxu0 %v2380
        %3640 = vmatpush.bf16.msra.mxu0 %v2364
        %3641 = vmatpush.bf16.msra.mxu0 %v2348
        %3642 = vmatpush.bf16.msra.mxu0 %v2332
        %3643 = vmatpush.bf16.msra.mxu0 %v2316
        %3644 = vmatpush.bf16.msra.mxu0 %v2300
        %3645 = vmatpush.bf16.msra.mxu0 %v2284
        %3646 = vmatmul.bf16.gmra.mxu0 %v734
        %v3647 = vpop.f32.mrf.mxu0
        %v3648 = vadd.f32 0.0, %v3647
        %v3649 = vpop.f32.mrf.mxu0
        %v3650 = vadd.f32 0.0, %v3649
        %3651 = vdwg.mxu0
        %3652 = vmatpush.bf16.msra.mxu0 %v2524
        %3653 = vmatpush.bf16.msra.mxu0 %v2508
        %3654 = vmatpush.bf16.msra.mxu0 %v2492
        %3655 = vmatpush.bf16.msra.mxu0 %v2476
        %3656 = vmatpush.bf16.msra.mxu0 %v2460
        %3657 = vmatpush.bf16.msra.mxu0 %v2444
        %3658 = vmatpush.bf16.msra.mxu0 %v2428
        %3659 = vmatpush.bf16.msra.mxu0 %v2412
        %3660 = vmatmul.bf16.gmra.mxu0 %v735
        %v3661 = vpop.f32.mrf.mxu0
        %v3662 = vadd.f32 %v3648, %v3661
        %v3663 = vpop.f32.mrf.mxu0
        %v3664 = vadd.f32 %v3650, %v3663
        %3665 = vdwg.mxu0
        %3666 = vmatpush.bf16.msra.mxu0 %v2652
        %3667 = vmatpush.bf16.msra.mxu0 %v2636
        %3668 = vmatpush.bf16.msra.mxu0 %v2620
        %3669 = vmatpush.bf16.msra.mxu0 %v2604
        %3670 = vmatpush.bf16.msra.mxu0 %v2588
        %3671 = vmatpush.bf16.msra.mxu0 %v2572
        %3672 = vmatpush.bf16.msra.mxu0 %v2556
        %3673 = vmatpush.bf16.msra.mxu0 %v2540
        %3674 = vmatmul.bf16.gmra.mxu0 %v736
        %v3675 = vpop.f32.mrf.mxu0
        %v3676 = vadd.f32 %v3662, %v3675
        %v3677 = vpop.f32.mrf.mxu0
        %v3678 = vadd.f32 %v3664, %v3677
        %3679 = vdwg.mxu0
        %3680 = vmatpush.bf16.msra.mxu0 %v2780
        %3681 = vmatpush.bf16.msra.mxu0 %v2764
        %3682 = vmatpush.bf16.msra.mxu0 %v2748
        %3683 = vmatpush.bf16.msra.mxu0 %v2732
        %3684 = vmatpush.bf16.msra.mxu0 %v2716
        %3685 = vmatpush.bf16.msra.mxu0 %v2700
        %3686 = vmatpush.bf16.msra.mxu0 %v2684
        %3687 = vmatpush.bf16.msra.mxu0 %v2668
        %3688 = vmatmul.bf16.gmra.mxu0 %v737
        %v3689 = vpop.f32.mrf.mxu0
        %v3690 = vadd.f32 %v3676, %v3689
        %v3691 = vpop.f32.mrf.mxu0
        %v3692 = vadd.f32 %v3678, %v3691
        %3693 = vdwg.mxu0
        %3694 = vmatpush.bf16.msra.mxu0 %v2397
        %3695 = vmatpush.bf16.msra.mxu0 %v2381
        %3696 = vmatpush.bf16.msra.mxu0 %v2365
        %3697 = vmatpush.bf16.msra.mxu0 %v2349
        %3698 = vmatpush.bf16.msra.mxu0 %v2333
        %3699 = vmatpush.bf16.msra.mxu0 %v2317
        %3700 = vmatpush.bf16.msra.mxu0 %v2301
        %3701 = vmatpush.bf16.msra.mxu0 %v2285
        %3702 = vmatmul.bf16.gmra.mxu0 %v734
        %v3703 = vpop.f32.mrf.mxu0
        %v3704 = vadd.f32 0.0, %v3703
        %v3705 = vpop.f32.mrf.mxu0
        %v3706 = vadd.f32 0.0, %v3705
        %3707 = vdwg.mxu0
        %3708 = vmatpush.bf16.msra.mxu0 %v2525
        %3709 = vmatpush.bf16.msra.mxu0 %v2509
        %3710 = vmatpush.bf16.msra.mxu0 %v2493
        %3711 = vmatpush.bf16.msra.mxu0 %v2477
        %3712 = vmatpush.bf16.msra.mxu0 %v2461
        %3713 = vmatpush.bf16.msra.mxu0 %v2445
        %3714 = vmatpush.bf16.msra.mxu0 %v2429
        %3715 = vmatpush.bf16.msra.mxu0 %v2413
        %3716 = vmatmul.bf16.gmra.mxu0 %v735
        %v3717 = vpop.f32.mrf.mxu0
        %v3718 = vadd.f32 %v3704, %v3717
        %v3719 = vpop.f32.mrf.mxu0
        %v3720 = vadd.f32 %v3706, %v3719
        %3721 = vdwg.mxu0
        %3722 = vmatpush.bf16.msra.mxu0 %v2653
        %3723 = vmatpush.bf16.msra.mxu0 %v2637
        %3724 = vmatpush.bf16.msra.mxu0 %v2621
        %3725 = vmatpush.bf16.msra.mxu0 %v2605
        %3726 = vmatpush.bf16.msra.mxu0 %v2589
        %3727 = vmatpush.bf16.msra.mxu0 %v2573
        %3728 = vmatpush.bf16.msra.mxu0 %v2557
        %3729 = vmatpush.bf16.msra.mxu0 %v2541
        %3730 = vmatmul.bf16.gmra.mxu0 %v736
        %v3731 = vpop.f32.mrf.mxu0
        %v3732 = vadd.f32 %v3718, %v3731
        %v3733 = vpop.f32.mrf.mxu0
        %v3734 = vadd.f32 %v3720, %v3733
        %3735 = vdwg.mxu0
        %3736 = vmatpush.bf16.msra.mxu0 %v2781
        %3737 = vmatpush.bf16.msra.mxu0 %v2765
        %3738 = vmatpush.bf16.msra.mxu0 %v2749
        %3739 = vmatpush.bf16.msra.mxu0 %v2733
        %3740 = vmatpush.bf16.msra.mxu0 %v2717
        %3741 = vmatpush.bf16.msra.mxu0 %v2701
        %3742 = vmatpush.bf16.msra.mxu0 %v2685
        %3743 = vmatpush.bf16.msra.mxu0 %v2669
        %3744 = vmatmul.bf16.gmra.mxu0 %v737
        %v3745 = vpop.f32.mrf.mxu0
        %v3746 = vadd.f32 %v3732, %v3745
        %v3747 = vpop.f32.mrf.mxu0
        %v3748 = vadd.f32 %v3734, %v3747
        %3749 = vdwg.mxu0
        %3750 = vmatpush.bf16.msra.mxu0 %v2398
        %3751 = vmatpush.bf16.msra.mxu0 %v2382
        %3752 = vmatpush.bf16.msra.mxu0 %v2366
        %3753 = vmatpush.bf16.msra.mxu0 %v2350
        %3754 = vmatpush.bf16.msra.mxu0 %v2334
        %3755 = vmatpush.bf16.msra.mxu0 %v2318
        %3756 = vmatpush.bf16.msra.mxu0 %v2302
        %3757 = vmatpush.bf16.msra.mxu0 %v2286
        %3758 = vmatmul.bf16.gmra.mxu0 %v734
        %v3759 = vpop.f32.mrf.mxu0
        %v3760 = vadd.f32 0.0, %v3759
        %v3761 = vpop.f32.mrf.mxu0
        %v3762 = vadd.f32 0.0, %v3761
        %3763 = vdwg.mxu0
        %3764 = vmatpush.bf16.msra.mxu0 %v2526
        %3765 = vmatpush.bf16.msra.mxu0 %v2510
        %3766 = vmatpush.bf16.msra.mxu0 %v2494
        %3767 = vmatpush.bf16.msra.mxu0 %v2478
        %3768 = vmatpush.bf16.msra.mxu0 %v2462
        %3769 = vmatpush.bf16.msra.mxu0 %v2446
        %3770 = vmatpush.bf16.msra.mxu0 %v2430
        %3771 = vmatpush.bf16.msra.mxu0 %v2414
        %3772 = vmatmul.bf16.gmra.mxu0 %v735
        %v3773 = vpop.f32.mrf.mxu0
        %v3774 = vadd.f32 %v3760, %v3773
        %v3775 = vpop.f32.mrf.mxu0
        %v3776 = vadd.f32 %v3762, %v3775
        %3777 = vdwg.mxu0
        %3778 = vmatpush.bf16.msra.mxu0 %v2654
        %3779 = vmatpush.bf16.msra.mxu0 %v2638
        %3780 = vmatpush.bf16.msra.mxu0 %v2622
        %3781 = vmatpush.bf16.msra.mxu0 %v2606
        %3782 = vmatpush.bf16.msra.mxu0 %v2590
        %3783 = vmatpush.bf16.msra.mxu0 %v2574
        %3784 = vmatpush.bf16.msra.mxu0 %v2558
        %3785 = vmatpush.bf16.msra.mxu0 %v2542
        %3786 = vmatmul.bf16.gmra.mxu0 %v736
        %v3787 = vpop.f32.mrf.mxu0
        %v3788 = vadd.f32 %v3774, %v3787
        %v3789 = vpop.f32.mrf.mxu0
        %v3790 = vadd.f32 %v3776, %v3789
        %3791 = vdwg.mxu0
        %3792 = vmatpush.bf16.msra.mxu0 %v2782
        %3793 = vmatpush.bf16.msra.mxu0 %v2766
        %3794 = vmatpush.bf16.msra.mxu0 %v2750
        %3795 = vmatpush.bf16.msra.mxu0 %v2734
        %3796 = vmatpush.bf16.msra.mxu0 %v2718
        %3797 = vmatpush.bf16.msra.mxu0 %v2702
        %3798 = vmatpush.bf16.msra.mxu0 %v2686
        %3799 = vmatpush.bf16.msra.mxu0 %v2670
        %3800 = vmatmul.bf16.gmra.mxu0 %v737
        %v3801 = vpop.f32.mrf.mxu0
        %v3802 = vadd.f32 %v3788, %v3801
        %v3803 = vpop.f32.mrf.mxu0
        %v3804 = vadd.f32 %v3790, %v3803
        %3805 = vdwg.mxu0
        %3806 = vmatpush.bf16.msra.mxu0 %v2399
        %3807 = vmatpush.bf16.msra.mxu0 %v2383
        %3808 = vmatpush.bf16.msra.mxu0 %v2367
        %3809 = vmatpush.bf16.msra.mxu0 %v2351
        %3810 = vmatpush.bf16.msra.mxu0 %v2335
        %3811 = vmatpush.bf16.msra.mxu0 %v2319
        %3812 = vmatpush.bf16.msra.mxu0 %v2303
        %3813 = vmatpush.bf16.msra.mxu0 %v2287
        %3814 = vmatmul.bf16.gmra.mxu0 %v734
        %v3815 = vpop.f32.mrf.mxu0
        %v3816 = vadd.f32 0.0, %v3815
        %v3817 = vpop.f32.mrf.mxu0
        %v3818 = vadd.f32 0.0, %v3817
        %3819 = vdwg.mxu0
        %3820 = vmatpush.bf16.msra.mxu0 %v2527
        %3821 = vmatpush.bf16.msra.mxu0 %v2511
        %3822 = vmatpush.bf16.msra.mxu0 %v2495
        %3823 = vmatpush.bf16.msra.mxu0 %v2479
        %3824 = vmatpush.bf16.msra.mxu0 %v2463
        %3825 = vmatpush.bf16.msra.mxu0 %v2447
        %3826 = vmatpush.bf16.msra.mxu0 %v2431
        %3827 = vmatpush.bf16.msra.mxu0 %v2415
        %3828 = vmatmul.bf16.gmra.mxu0 %v735
        %v3829 = vpop.f32.mrf.mxu0
        %v3830 = vadd.f32 %v3816, %v3829
        %v3831 = vpop.f32.mrf.mxu0
        %v3832 = vadd.f32 %v3818, %v3831
        %3833 = vdwg.mxu0
        %3834 = vmatpush.bf16.msra.mxu0 %v2655
        %3835 = vmatpush.bf16.msra.mxu0 %v2639
        %3836 = vmatpush.bf16.msra.mxu0 %v2623
        %3837 = vmatpush.bf16.msra.mxu0 %v2607
        %3838 = vmatpush.bf16.msra.mxu0 %v2591
        %3839 = vmatpush.bf16.msra.mxu0 %v2575
        %3840 = vmatpush.bf16.msra.mxu0 %v2559
        %3841 = vmatpush.bf16.msra.mxu0 %v2543
        %3842 = vmatmul.bf16.gmra.mxu0 %v736
        %v3843 = vpop.f32.mrf.mxu0
        %v3844 = vadd.f32 %v3830, %v3843
        %v3845 = vpop.f32.mrf.mxu0
        %v3846 = vadd.f32 %v3832, %v3845
        %3847 = vdwg.mxu0
        %3848 = vmatpush.bf16.msra.mxu0 %v2783
        %3849 = vmatpush.bf16.msra.mxu0 %v2767
        %3850 = vmatpush.bf16.msra.mxu0 %v2751
        %3851 = vmatpush.bf16.msra.mxu0 %v2735
        %3852 = vmatpush.bf16.msra.mxu0 %v2719
        %3853 = vmatpush.bf16.msra.mxu0 %v2703
        %3854 = vmatpush.bf16.msra.mxu0 %v2687
        %3855 = vmatpush.bf16.msra.mxu0 %v2671
        %3856 = vmatmul.bf16.gmra.mxu0 %v737
        %v3857 = vpop.f32.mrf.mxu0
        %v3858 = vadd.f32 %v3844, %v3857
        %v3859 = vpop.f32.mrf.mxu0
        %v3860 = vadd.f32 %v3846, %v3859
        %3861 = vdwg.mxu0
        %3862 = vmatpush.bf16.msra.mxu0 %v2400
        %3863 = vmatpush.bf16.msra.mxu0 %v2384
        %3864 = vmatpush.bf16.msra.mxu0 %v2368
        %3865 = vmatpush.bf16.msra.mxu0 %v2352
        %3866 = vmatpush.bf16.msra.mxu0 %v2336
        %3867 = vmatpush.bf16.msra.mxu0 %v2320
        %3868 = vmatpush.bf16.msra.mxu0 %v2304
        %3869 = vmatpush.bf16.msra.mxu0 %v2288
        %3870 = vmatmul.bf16.gmra.mxu0 %v734
        %v3871 = vpop.f32.mrf.mxu0
        %v3872 = vadd.f32 0.0, %v3871
        %v3873 = vpop.f32.mrf.mxu0
        %v3874 = vadd.f32 0.0, %v3873
        %3875 = vdwg.mxu0
        %3876 = vmatpush.bf16.msra.mxu0 %v2528
        %3877 = vmatpush.bf16.msra.mxu0 %v2512
        %3878 = vmatpush.bf16.msra.mxu0 %v2496
        %3879 = vmatpush.bf16.msra.mxu0 %v2480
        %3880 = vmatpush.bf16.msra.mxu0 %v2464
        %3881 = vmatpush.bf16.msra.mxu0 %v2448
        %3882 = vmatpush.bf16.msra.mxu0 %v2432
        %3883 = vmatpush.bf16.msra.mxu0 %v2416
        %3884 = vmatmul.bf16.gmra.mxu0 %v735
        %v3885 = vpop.f32.mrf.mxu0
        %v3886 = vadd.f32 %v3872, %v3885
        %v3887 = vpop.f32.mrf.mxu0
        %v3888 = vadd.f32 %v3874, %v3887
        %3889 = vdwg.mxu0
        %3890 = vmatpush.bf16.msra.mxu0 %v2656
        %3891 = vmatpush.bf16.msra.mxu0 %v2640
        %3892 = vmatpush.bf16.msra.mxu0 %v2624
        %3893 = vmatpush.bf16.msra.mxu0 %v2608
        %3894 = vmatpush.bf16.msra.mxu0 %v2592
        %3895 = vmatpush.bf16.msra.mxu0 %v2576
        %3896 = vmatpush.bf16.msra.mxu0 %v2560
        %3897 = vmatpush.bf16.msra.mxu0 %v2544
        %3898 = vmatmul.bf16.gmra.mxu0 %v736
        %v3899 = vpop.f32.mrf.mxu0
        %v3900 = vadd.f32 %v3886, %v3899
        %v3901 = vpop.f32.mrf.mxu0
        %v3902 = vadd.f32 %v3888, %v3901
        %3903 = vdwg.mxu0
        %3904 = vmatpush.bf16.msra.mxu0 %v2784
        %3905 = vmatpush.bf16.msra.mxu0 %v2768
        %3906 = vmatpush.bf16.msra.mxu0 %v2752
        %3907 = vmatpush.bf16.msra.mxu0 %v2736
        %3908 = vmatpush.bf16.msra.mxu0 %v2720
        %3909 = vmatpush.bf16.msra.mxu0 %v2704
        %3910 = vmatpush.bf16.msra.mxu0 %v2688
        %3911 = vmatpush.bf16.msra.mxu0 %v2672
        %3912 = vmatmul.bf16.gmra.mxu0 %v737
        %v3913 = vpop.f32.mrf.mxu0
        %v3914 = vadd.f32 %v3900, %v3913
        %v3915 = vpop.f32.mrf.mxu0
        %v3916 = vadd.f32 %v3902, %v3915
        %3917 = vdwg.mxu0
        %3918 = vmatpush.bf16.msra.mxu0 %v2401
        %3919 = vmatpush.bf16.msra.mxu0 %v2385
        %3920 = vmatpush.bf16.msra.mxu0 %v2369
        %3921 = vmatpush.bf16.msra.mxu0 %v2353
        %3922 = vmatpush.bf16.msra.mxu0 %v2337
        %3923 = vmatpush.bf16.msra.mxu0 %v2321
        %3924 = vmatpush.bf16.msra.mxu0 %v2305
        %3925 = vmatpush.bf16.msra.mxu0 %v2289
        %3926 = vmatmul.bf16.gmra.mxu0 %v734
        %v3927 = vpop.f32.mrf.mxu0
        %v3928 = vadd.f32 0.0, %v3927
        %v3929 = vpop.f32.mrf.mxu0
        %v3930 = vadd.f32 0.0, %v3929
        %3931 = vdwg.mxu0
        %3932 = vmatpush.bf16.msra.mxu0 %v2529
        %3933 = vmatpush.bf16.msra.mxu0 %v2513
        %3934 = vmatpush.bf16.msra.mxu0 %v2497
        %3935 = vmatpush.bf16.msra.mxu0 %v2481
        %3936 = vmatpush.bf16.msra.mxu0 %v2465
        %3937 = vmatpush.bf16.msra.mxu0 %v2449
        %3938 = vmatpush.bf16.msra.mxu0 %v2433
        %3939 = vmatpush.bf16.msra.mxu0 %v2417
        %3940 = vmatmul.bf16.gmra.mxu0 %v735
        %v3941 = vpop.f32.mrf.mxu0
        %v3942 = vadd.f32 %v3928, %v3941
        %v3943 = vpop.f32.mrf.mxu0
        %v3944 = vadd.f32 %v3930, %v3943
        %3945 = vdwg.mxu0
        %3946 = vmatpush.bf16.msra.mxu0 %v2657
        %3947 = vmatpush.bf16.msra.mxu0 %v2641
        %3948 = vmatpush.bf16.msra.mxu0 %v2625
        %3949 = vmatpush.bf16.msra.mxu0 %v2609
        %3950 = vmatpush.bf16.msra.mxu0 %v2593
        %3951 = vmatpush.bf16.msra.mxu0 %v2577
        %3952 = vmatpush.bf16.msra.mxu0 %v2561
        %3953 = vmatpush.bf16.msra.mxu0 %v2545
        %3954 = vmatmul.bf16.gmra.mxu0 %v736
        %v3955 = vpop.f32.mrf.mxu0
        %v3956 = vadd.f32 %v3942, %v3955
        %v3957 = vpop.f32.mrf.mxu0
        %v3958 = vadd.f32 %v3944, %v3957
        %3959 = vdwg.mxu0
        %3960 = vmatpush.bf16.msra.mxu0 %v2785
        %3961 = vmatpush.bf16.msra.mxu0 %v2769
        %3962 = vmatpush.bf16.msra.mxu0 %v2753
        %3963 = vmatpush.bf16.msra.mxu0 %v2737
        %3964 = vmatpush.bf16.msra.mxu0 %v2721
        %3965 = vmatpush.bf16.msra.mxu0 %v2705
        %3966 = vmatpush.bf16.msra.mxu0 %v2689
        %3967 = vmatpush.bf16.msra.mxu0 %v2673
        %3968 = vmatmul.bf16.gmra.mxu0 %v737
        %v3969 = vpop.f32.mrf.mxu0
        %v3970 = vadd.f32 %v3956, %v3969
        %v3971 = vpop.f32.mrf.mxu0
        %v3972 = vadd.f32 %v3958, %v3971
        %3973 = vdwg.mxu0
        %3974 = vmatpush.bf16.msra.mxu0 %v2402
        %3975 = vmatpush.bf16.msra.mxu0 %v2386
        %3976 = vmatpush.bf16.msra.mxu0 %v2370
        %3977 = vmatpush.bf16.msra.mxu0 %v2354
        %3978 = vmatpush.bf16.msra.mxu0 %v2338
        %3979 = vmatpush.bf16.msra.mxu0 %v2322
        %3980 = vmatpush.bf16.msra.mxu0 %v2306
        %3981 = vmatpush.bf16.msra.mxu0 %v2290
        %3982 = vmatmul.bf16.gmra.mxu0 %v734
        %v3983 = vpop.f32.mrf.mxu0
        %v3984 = vadd.f32 0.0, %v3983
        %v3985 = vpop.f32.mrf.mxu0
        %v3986 = vadd.f32 0.0, %v3985
        %3987 = vdwg.mxu0
        %3988 = vmatpush.bf16.msra.mxu0 %v2530
        %3989 = vmatpush.bf16.msra.mxu0 %v2514
        %3990 = vmatpush.bf16.msra.mxu0 %v2498
        %3991 = vmatpush.bf16.msra.mxu0 %v2482
        %3992 = vmatpush.bf16.msra.mxu0 %v2466
        %3993 = vmatpush.bf16.msra.mxu0 %v2450
        %3994 = vmatpush.bf16.msra.mxu0 %v2434
        %3995 = vmatpush.bf16.msra.mxu0 %v2418
        %3996 = vmatmul.bf16.gmra.mxu0 %v735
        %v3997 = vpop.f32.mrf.mxu0
        %v3998 = vadd.f32 %v3984, %v3997
        %v3999 = vpop.f32.mrf.mxu0
        %v4000 = vadd.f32 %v3986, %v3999
        %4001 = vdwg.mxu0
        %4002 = vmatpush.bf16.msra.mxu0 %v2658
        %4003 = vmatpush.bf16.msra.mxu0 %v2642
        %4004 = vmatpush.bf16.msra.mxu0 %v2626
        %4005 = vmatpush.bf16.msra.mxu0 %v2610
        %4006 = vmatpush.bf16.msra.mxu0 %v2594
        %4007 = vmatpush.bf16.msra.mxu0 %v2578
        %4008 = vmatpush.bf16.msra.mxu0 %v2562
        %4009 = vmatpush.bf16.msra.mxu0 %v2546
        %4010 = vmatmul.bf16.gmra.mxu0 %v736
        %v4011 = vpop.f32.mrf.mxu0
        %v4012 = vadd.f32 %v3998, %v4011
        %v4013 = vpop.f32.mrf.mxu0
        %v4014 = vadd.f32 %v4000, %v4013
        %4015 = vdwg.mxu0
        %4016 = vmatpush.bf16.msra.mxu0 %v2786
        %4017 = vmatpush.bf16.msra.mxu0 %v2770
        %4018 = vmatpush.bf16.msra.mxu0 %v2754
        %4019 = vmatpush.bf16.msra.mxu0 %v2738
        %4020 = vmatpush.bf16.msra.mxu0 %v2722
        %4021 = vmatpush.bf16.msra.mxu0 %v2706
        %4022 = vmatpush.bf16.msra.mxu0 %v2690
        %4023 = vmatpush.bf16.msra.mxu0 %v2674
        %4024 = vmatmul.bf16.gmra.mxu0 %v737
        %v4025 = vpop.f32.mrf.mxu0
        %v4026 = vadd.f32 %v4012, %v4025
        %v4027 = vpop.f32.mrf.mxu0
        %v4028 = vadd.f32 %v4014, %v4027
        %4029 = vdwg.mxu0
        %4030 = vmatpush.bf16.msra.mxu0 %v2403
        %4031 = vmatpush.bf16.msra.mxu0 %v2387
        %4032 = vmatpush.bf16.msra.mxu0 %v2371
        %4033 = vmatpush.bf16.msra.mxu0 %v2355
        %4034 = vmatpush.bf16.msra.mxu0 %v2339
        %4035 = vmatpush.bf16.msra.mxu0 %v2323
        %4036 = vmatpush.bf16.msra.mxu0 %v2307
        %4037 = vmatpush.bf16.msra.mxu0 %v2291
        %4038 = vmatmul.bf16.gmra.mxu0 %v734
        %v4039 = vpop.f32.mrf.mxu0
        %v4040 = vadd.f32 0.0, %v4039
        %v4041 = vpop.f32.mrf.mxu0
        %v4042 = vadd.f32 0.0, %v4041
        %4043 = vdwg.mxu0
        %4044 = vmatpush.bf16.msra.mxu0 %v2531
        %4045 = vmatpush.bf16.msra.mxu0 %v2515
        %4046 = vmatpush.bf16.msra.mxu0 %v2499
        %4047 = vmatpush.bf16.msra.mxu0 %v2483
        %4048 = vmatpush.bf16.msra.mxu0 %v2467
        %4049 = vmatpush.bf16.msra.mxu0 %v2451
        %4050 = vmatpush.bf16.msra.mxu0 %v2435
        %4051 = vmatpush.bf16.msra.mxu0 %v2419
        %4052 = vmatmul.bf16.gmra.mxu0 %v735
        %v4053 = vpop.f32.mrf.mxu0
        %v4054 = vadd.f32 %v4040, %v4053
        %v4055 = vpop.f32.mrf.mxu0
        %v4056 = vadd.f32 %v4042, %v4055
        %4057 = vdwg.mxu0
        %4058 = vmatpush.bf16.msra.mxu0 %v2659
        %4059 = vmatpush.bf16.msra.mxu0 %v2643
        %4060 = vmatpush.bf16.msra.mxu0 %v2627
        %4061 = vmatpush.bf16.msra.mxu0 %v2611
        %4062 = vmatpush.bf16.msra.mxu0 %v2595
        %4063 = vmatpush.bf16.msra.mxu0 %v2579
        %4064 = vmatpush.bf16.msra.mxu0 %v2563
        %4065 = vmatpush.bf16.msra.mxu0 %v2547
        %4066 = vmatmul.bf16.gmra.mxu0 %v736
        %v4067 = vpop.f32.mrf.mxu0
        %v4068 = vadd.f32 %v4054, %v4067
        %v4069 = vpop.f32.mrf.mxu0
        %v4070 = vadd.f32 %v4056, %v4069
        %4071 = vdwg.mxu0
        %4072 = vmatpush.bf16.msra.mxu0 %v2787
        %4073 = vmatpush.bf16.msra.mxu0 %v2771
        %4074 = vmatpush.bf16.msra.mxu0 %v2755
        %4075 = vmatpush.bf16.msra.mxu0 %v2739
        %4076 = vmatpush.bf16.msra.mxu0 %v2723
        %4077 = vmatpush.bf16.msra.mxu0 %v2707
        %4078 = vmatpush.bf16.msra.mxu0 %v2691
        %4079 = vmatpush.bf16.msra.mxu0 %v2675
        %4080 = vmatmul.bf16.gmra.mxu0 %v737
        %v4081 = vpop.f32.mrf.mxu0
        %v4082 = vadd.f32 %v4068, %v4081
        %v4083 = vpop.f32.mrf.mxu0
        %v4084 = vadd.f32 %v4070, %v4083
        %4085 = vdwg.mxu0
        %4086 = vmatpush.bf16.msra.mxu0 %v2404
        %4087 = vmatpush.bf16.msra.mxu0 %v2388
        %4088 = vmatpush.bf16.msra.mxu0 %v2372
        %4089 = vmatpush.bf16.msra.mxu0 %v2356
        %4090 = vmatpush.bf16.msra.mxu0 %v2340
        %4091 = vmatpush.bf16.msra.mxu0 %v2324
        %4092 = vmatpush.bf16.msra.mxu0 %v2308
        %4093 = vmatpush.bf16.msra.mxu0 %v2292
        %4094 = vmatmul.bf16.gmra.mxu0 %v734
        %v4095 = vpop.f32.mrf.mxu0
        %v4096 = vadd.f32 0.0, %v4095
        %v4097 = vpop.f32.mrf.mxu0
        %v4098 = vadd.f32 0.0, %v4097
        %4099 = vdwg.mxu0
        %4100 = vmatpush.bf16.msra.mxu0 %v2532
        %4101 = vmatpush.bf16.msra.mxu0 %v2516
        %4102 = vmatpush.bf16.msra.mxu0 %v2500
        %4103 = vmatpush.bf16.msra.mxu0 %v2484
        %4104 = vmatpush.bf16.msra.mxu0 %v2468
        %4105 = vmatpush.bf16.msra.mxu0 %v2452
        %4106 = vmatpush.bf16.msra.mxu0 %v2436
        %4107 = vmatpush.bf16.msra.mxu0 %v2420
        %4108 = vmatmul.bf16.gmra.mxu0 %v735
        %v4109 = vpop.f32.mrf.mxu0
        %v4110 = vadd.f32 %v4096, %v4109
        %v4111 = vpop.f32.mrf.mxu0
        %v4112 = vadd.f32 %v4098, %v4111
        %4113 = vdwg.mxu0
        %4114 = vmatpush.bf16.msra.mxu0 %v2660
        %4115 = vmatpush.bf16.msra.mxu0 %v2644
        %4116 = vmatpush.bf16.msra.mxu0 %v2628
        %4117 = vmatpush.bf16.msra.mxu0 %v2612
        %4118 = vmatpush.bf16.msra.mxu0 %v2596
        %4119 = vmatpush.bf16.msra.mxu0 %v2580
        %4120 = vmatpush.bf16.msra.mxu0 %v2564
        %4121 = vmatpush.bf16.msra.mxu0 %v2548
        %4122 = vmatmul.bf16.gmra.mxu0 %v736
        %v4123 = vpop.f32.mrf.mxu0
        %v4124 = vadd.f32 %v4110, %v4123
        %v4125 = vpop.f32.mrf.mxu0
        %v4126 = vadd.f32 %v4112, %v4125
        %4127 = vdwg.mxu0
        %4128 = vmatpush.bf16.msra.mxu0 %v2788
        %4129 = vmatpush.bf16.msra.mxu0 %v2772
        %4130 = vmatpush.bf16.msra.mxu0 %v2756
        %4131 = vmatpush.bf16.msra.mxu0 %v2740
        %4132 = vmatpush.bf16.msra.mxu0 %v2724
        %4133 = vmatpush.bf16.msra.mxu0 %v2708
        %4134 = vmatpush.bf16.msra.mxu0 %v2692
        %4135 = vmatpush.bf16.msra.mxu0 %v2676
        %4136 = vmatmul.bf16.gmra.mxu0 %v737
        %v4137 = vpop.f32.mrf.mxu0
        %v4138 = vadd.f32 %v4124, %v4137
        %v4139 = vpop.f32.mrf.mxu0
        %v4140 = vadd.f32 %v4126, %v4139
        %4141 = vdwg.mxu0
        %4142 = vmatpush.bf16.msra.mxu0 %v2405
        %4143 = vmatpush.bf16.msra.mxu0 %v2389
        %4144 = vmatpush.bf16.msra.mxu0 %v2373
        %4145 = vmatpush.bf16.msra.mxu0 %v2357
        %4146 = vmatpush.bf16.msra.mxu0 %v2341
        %4147 = vmatpush.bf16.msra.mxu0 %v2325
        %4148 = vmatpush.bf16.msra.mxu0 %v2309
        %4149 = vmatpush.bf16.msra.mxu0 %v2293
        %4150 = vmatmul.bf16.gmra.mxu0 %v734
        %v4151 = vpop.f32.mrf.mxu0
        %v4152 = vadd.f32 0.0, %v4151
        %v4153 = vpop.f32.mrf.mxu0
        %v4154 = vadd.f32 0.0, %v4153
        %4155 = vdwg.mxu0
        %4156 = vmatpush.bf16.msra.mxu0 %v2533
        %4157 = vmatpush.bf16.msra.mxu0 %v2517
        %4158 = vmatpush.bf16.msra.mxu0 %v2501
        %4159 = vmatpush.bf16.msra.mxu0 %v2485
        %4160 = vmatpush.bf16.msra.mxu0 %v2469
        %4161 = vmatpush.bf16.msra.mxu0 %v2453
        %4162 = vmatpush.bf16.msra.mxu0 %v2437
        %4163 = vmatpush.bf16.msra.mxu0 %v2421
        %4164 = vmatmul.bf16.gmra.mxu0 %v735
        %v4165 = vpop.f32.mrf.mxu0
        %v4166 = vadd.f32 %v4152, %v4165
        %v4167 = vpop.f32.mrf.mxu0
        %v4168 = vadd.f32 %v4154, %v4167
        %4169 = vdwg.mxu0
        %4170 = vmatpush.bf16.msra.mxu0 %v2661
        %4171 = vmatpush.bf16.msra.mxu0 %v2645
        %4172 = vmatpush.bf16.msra.mxu0 %v2629
        %4173 = vmatpush.bf16.msra.mxu0 %v2613
        %4174 = vmatpush.bf16.msra.mxu0 %v2597
        %4175 = vmatpush.bf16.msra.mxu0 %v2581
        %4176 = vmatpush.bf16.msra.mxu0 %v2565
        %4177 = vmatpush.bf16.msra.mxu0 %v2549
        %4178 = vmatmul.bf16.gmra.mxu0 %v736
        %v4179 = vpop.f32.mrf.mxu0
        %v4180 = vadd.f32 %v4166, %v4179
        %v4181 = vpop.f32.mrf.mxu0
        %v4182 = vadd.f32 %v4168, %v4181
        %4183 = vdwg.mxu0
        %4184 = vmatpush.bf16.msra.mxu0 %v2789
        %4185 = vmatpush.bf16.msra.mxu0 %v2773
        %4186 = vmatpush.bf16.msra.mxu0 %v2757
        %4187 = vmatpush.bf16.msra.mxu0 %v2741
        %4188 = vmatpush.bf16.msra.mxu0 %v2725
        %4189 = vmatpush.bf16.msra.mxu0 %v2709
        %4190 = vmatpush.bf16.msra.mxu0 %v2693
        %4191 = vmatpush.bf16.msra.mxu0 %v2677
        %4192 = vmatmul.bf16.gmra.mxu0 %v737
        %v4193 = vpop.f32.mrf.mxu0
        %v4194 = vadd.f32 %v4180, %v4193
        %v4195 = vpop.f32.mrf.mxu0
        %v4196 = vadd.f32 %v4182, %v4195
        %4197 = vdwg.mxu0
        %v4198 = vmax.f32 %v3354, 0.0
        %v4199 = vmax.f32 %v3410, 0.0
        %v4200 = vmax.f32 %v3466, 0.0
        %v4201 = vmax.f32 %v3522, 0.0
        %v4202 = vmax.f32 %v3578, 0.0
        %v4203 = vmax.f32 %v3634, 0.0
        %v4204 = vmax.f32 %v3690, 0.0
        %v4205 = vmax.f32 %v3746, 0.0
        %v4206 = vmax.f32 %v3802, 0.0
        %v4207 = vmax.f32 %v3858, 0.0
        %v4208 = vmax.f32 %v3914, 0.0
        %v4209 = vmax.f32 %v3970, 0.0
        %v4210 = vmax.f32 %v4026, 0.0
        %v4211 = vmax.f32 %v4082, 0.0
        %v4212 = vmax.f32 %v4138, 0.0
        %v4213 = vmax.f32 %v4194, 0.0
        %v4214 = vmax.f32 %v3356, 0.0
        %v4215 = vmax.f32 %v3412, 0.0
        %v4216 = vmax.f32 %v3468, 0.0
        %v4217 = vmax.f32 %v3524, 0.0
        %v4218 = vmax.f32 %v3580, 0.0
        %v4219 = vmax.f32 %v3636, 0.0
        %v4220 = vmax.f32 %v3692, 0.0
        %v4221 = vmax.f32 %v3748, 0.0
        %v4222 = vmax.f32 %v3804, 0.0
        %v4223 = vmax.f32 %v3860, 0.0
        %v4224 = vmax.f32 %v3916, 0.0
        %v4225 = vmax.f32 %v3972, 0.0
        %v4226 = vmax.f32 %v4028, 0.0
        %v4227 = vmax.f32 %v4084, 0.0
        %v4228 = vmax.f32 %v4140, 0.0
        %v4229 = vmax.f32 %v4196, 0.0
        %v4262 = vrot.slane %v4199, 4
        %v4263 = vrot.slane %v4201, 4
        %v4264 = vrot.slane %v4203, 4
        %v4265 = vrot.slane %v4205, 4
        %v4266 = vrot.slane %v4207, 4
        %v4267 = vrot.slane %v4209, 4
        %v4268 = vrot.slane %v4211, 4
        %v4269 = vrot.slane %v4213, 4
        %v4270 = vrot.slane %v4215, 4
        %v4271 = vrot.slane %v4217, 4
        %v4272 = vrot.slane %v4219, 4
        %v4273 = vrot.slane %v4221, 4
        %v4274 = vrot.slane %v4223, 4
        %v4275 = vrot.slane %v4225, 4
        %v4276 = vrot.slane %v4227, 4
        %v4277 = vrot.slane %v4229, 4
        %vm4278 = vcmask 1043456
        %v4279 = vsel %vm4278, %v4198, %v4262
        %v4280 = vsel %vm4278, %v4200, %v4263
        %v4281 = vsel %vm4278, %v4202, %v4264
        %v4282 = vsel %vm4278, %v4204, %v4265
        %v4283 = vsel %vm4278, %v4206, %v4266
        %v4284 = vsel %vm4278, %v4208, %v4267
        %v4285 = vsel %vm4278, %v4210, %v4268
        %v4286 = vsel %vm4278, %v4212, %v4269
        %v4287 = vsel %vm4278, %v4262, %v4198
        %v4288 = vrot.slane %v4287, 4
        %v4289 = vsel %vm4278, %v4263, %v4200
        %v4290 = vrot.slane %v4289, 4
        %v4291 = vsel %vm4278, %v4264, %v4202
        %v4292 = vrot.slane %v4291, 4
        %v4293 = vsel %vm4278, %v4265, %v4204
        %v4294 = vrot.slane %v4293, 4
        %v4295 = vsel %vm4278, %v4266, %v4206
        %v4296 = vrot.slane %v4295, 4
        %v4297 = vsel %vm4278, %v4267, %v4208
        %v4298 = vrot.slane %v4297, 4
        %v4299 = vsel %vm4278, %v4268, %v4210
        %v4300 = vrot.slane %v4299, 4
        %v4301 = vsel %vm4278, %v4269, %v4212
        %v4302 = vrot.slane %v4301, 4
        %v4303 = vsel %vm4278, %v4214, %v4270
        %v4304 = vsel %vm4278, %v4216, %v4271
        %v4305 = vsel %vm4278, %v4218, %v4272
        %v4306 = vsel %vm4278, %v4220, %v4273
        %v4307 = vsel %vm4278, %v4222, %v4274
        %v4308 = vsel %vm4278, %v4224, %v4275
        %v4309 = vsel %vm4278, %v4226, %v4276
        %v4310 = vsel %vm4278, %v4228, %v4277
        %v4311 = vsel %vm4278, %v4270, %v4214
        %v4312 = vrot.slane %v4311, 4
        %v4313 = vsel %vm4278, %v4271, %v4216
        %v4314 = vrot.slane %v4313, 4
        %v4315 = vsel %vm4278, %v4272, %v4218
        %v4316 = vrot.slane %v4315, 4
        %v4317 = vsel %vm4278, %v4273, %v4220
        %v4318 = vrot.slane %v4317, 4
        %v4319 = vsel %vm4278, %v4274, %v4222
        %v4320 = vrot.slane %v4319, 4
        %v4321 = vsel %vm4278, %v4275, %v4224
        %v4322 = vrot.slane %v4321, 4
        %v4323 = vsel %vm4278, %v4276, %v4226
        %v4324 = vrot.slane %v4323, 4
        %v4325 = vsel %vm4278, %v4277, %v4228
        %v4326 = vrot.slane %v4325, 4
        %4327 = vst [vmem:[#allocation1] ss:$2 sm:$0xff] %v4279
        %s4328 = scalar_lea.vmem [#allocation1], 16
        %4329 = vst [vmem:[%s4328] ss:$2 sm:$0xff] %v4280
        %s4330 = scalar_lea.vmem [#allocation1], 32
        %4331 = vst [vmem:[%s4330] ss:$2 sm:$0xff] %v4281
        %s4332 = scalar_lea.vmem [#allocation1], 48
        %4333 = vst [vmem:[%s4332] ss:$2 sm:$0xff] %v4282
        %v4334 = vld.sshfl [vmem:[#allocation1] sm:$0xff pattern:$0x75316420]
        %v4335 = vld.sshfl [vmem:[#allocation1 + $0x8] sm:$0xff pattern:$0x75316420]
        %v4336 = vld.sshfl [vmem:[#allocation1 + $0x10] sm:$0xff pattern:$0x75316420]
        %v4337 = vld.sshfl [vmem:[#allocation1 + $0x18] sm:$0xff pattern:$0x75316420]
        %v4338 = vld.sshfl [vmem:[#allocation1 + $0x20] sm:$0xff pattern:$0x75316420]
        %v4339 = vld.sshfl [vmem:[#allocation1 + $0x28] sm:$0xff pattern:$0x75316420]
        %v4340 = vld.sshfl [vmem:[#allocation1 + $0x30] sm:$0xff pattern:$0x75316420]
        %v4341 = vld.sshfl [vmem:[#allocation1 + $0x38] sm:$0xff pattern:$0x75316420]
        %4342 = vst [vmem:[#allocation1] ss:$2 sm:$0xff] %v4283
        %4343 = vst [vmem:[%s4328] ss:$2 sm:$0xff] %v4284
        %4344 = vst [vmem:[%s4330] ss:$2 sm:$0xff] %v4285
        %4345 = vst [vmem:[%s4332] ss:$2 sm:$0xff] %v4286
        %v4346 = vld.sshfl [vmem:[#allocation1] sm:$0xff pattern:$0x75316420]
        %v4347 = vld.sshfl [vmem:[#allocation1 + $0x8] sm:$0xff pattern:$0x75316420]
        %v4348 = vld.sshfl [vmem:[#allocation1 + $0x10] sm:$0xff pattern:$0x75316420]
        %v4349 = vld.sshfl [vmem:[#allocation1 + $0x18] sm:$0xff pattern:$0x75316420]
        %v4350 = vld.sshfl [vmem:[#allocation1 + $0x20] sm:$0xff pattern:$0x75316420]
        %v4351 = vld.sshfl [vmem:[#allocation1 + $0x28] sm:$0xff pattern:$0x75316420]
        %v4352 = vld.sshfl [vmem:[#allocation1 + $0x30] sm:$0xff pattern:$0x75316420]
        %v4353 = vld.sshfl [vmem:[#allocation1 + $0x38] sm:$0xff pattern:$0x75316420]
        %4354 = vst [vmem:[#allocation1] ss:$2 sm:$0xff] %v4288
        %4355 = vst [vmem:[%s4328] ss:$2 sm:$0xff] %v4290
        %4356 = vst [vmem:[%s4330] ss:$2 sm:$0xff] %v4292
        %4357 = vst [vmem:[%s4332] ss:$2 sm:$0xff] %v4294
        %v4358 = vld.sshfl [vmem:[#allocation1] sm:$0xff pattern:$0x75316420]
        %v4359 = vld.sshfl [vmem:[#allocation1 + $0x8] sm:$0xff pattern:$0x75316420]
        %v4360 = vld.sshfl [vmem:[#allocation1 + $0x10] sm:$0xff pattern:$0x75316420]
        %v4361 = vld.sshfl [vmem:[#allocation1 + $0x18] sm:$0xff pattern:$0x75316420]
        %v4362 = vld.sshfl [vmem:[#allocation1 + $0x20] sm:$0xff pattern:$0x75316420]
        %v4363 = vld.sshfl [vmem:[#allocation1 + $0x28] sm:$0xff pattern:$0x75316420]
        %v4364 = vld.sshfl [vmem:[#allocation1 + $0x30] sm:$0xff pattern:$0x75316420]
        %v4365 = vld.sshfl [vmem:[#allocation1 + $0x38] sm:$0xff pattern:$0x75316420]
        %4366 = vst [vmem:[#allocation1] ss:$2 sm:$0xff] %v4296
        %4367 = vst [vmem:[%s4328] ss:$2 sm:$0xff] %v4298
        %4368 = vst [vmem:[%s4330] ss:$2 sm:$0xff] %v4300
        %4369 = vst [vmem:[%s4332] ss:$2 sm:$0xff] %v4302
        %v4370 = vld.sshfl [vmem:[#allocation1] sm:$0xff pattern:$0x75316420]
        %v4371 = vld.sshfl [vmem:[#allocation1 + $0x8] sm:$0xff pattern:$0x75316420]
        %v4372 = vld.sshfl [vmem:[#allocation1 + $0x10] sm:$0xff pattern:$0x75316420]
        %v4373 = vld.sshfl [vmem:[#allocation1 + $0x18] sm:$0xff pattern:$0x75316420]
        %v4374 = vld.sshfl [vmem:[#allocation1 + $0x20] sm:$0xff pattern:$0x75316420]
        %v4375 = vld.sshfl [vmem:[#allocation1 + $0x28] sm:$0xff pattern:$0x75316420]
        %v4376 = vld.sshfl [vmem:[#allocation1 + $0x30] sm:$0xff pattern:$0x75316420]
        %v4377 = vld.sshfl [vmem:[#allocation1 + $0x38] sm:$0xff pattern:$0x75316420]
        %4378 = vst [vmem:[#allocation1] ss:$2 sm:$0xff] %v4303
        %4379 = vst [vmem:[%s4328] ss:$2 sm:$0xff] %v4304
        %4380 = vst [vmem:[%s4330] ss:$2 sm:$0xff] %v4305
        %4381 = vst [vmem:[%s4332] ss:$2 sm:$0xff] %v4306
        %v4382 = vld.sshfl [vmem:[#allocation1] sm:$0xff pattern:$0x75316420]
        %v4383 = vld.sshfl [vmem:[#allocation1 + $0x8] sm:$0xff pattern:$0x75316420]
        %v4384 = vld.sshfl [vmem:[#allocation1 + $0x10] sm:$0xff pattern:$0x75316420]
        %v4385 = vld.sshfl [vmem:[#allocation1 + $0x18] sm:$0xff pattern:$0x75316420]
        %v4386 = vld.sshfl [vmem:[#allocation1 + $0x20] sm:$0xff pattern:$0x75316420]
        %v4387 = vld.sshfl [vmem:[#allocation1 + $0x28] sm:$0xff pattern:$0x75316420]
        %v4388 = vld.sshfl [vmem:[#allocation1 + $0x30] sm:$0xff pattern:$0x75316420]
        %v4389 = vld.sshfl [vmem:[#allocation1 + $0x38] sm:$0xff pattern:$0x75316420]
        %4390 = vst [vmem:[#allocation1] ss:$2 sm:$0xff] %v4307
        %4391 = vst [vmem:[%s4328] ss:$2 sm:$0xff] %v4308
        %4392 = vst [vmem:[%s4330] ss:$2 sm:$0xff] %v4309
        %4393 = vst [vmem:[%s4332] ss:$2 sm:$0xff] %v4310
        %v4394 = vld.sshfl [vmem:[#allocation1] sm:$0xff pattern:$0x75316420]
        %v4395 = vld.sshfl [vmem:[#allocation1 + $0x8] sm:$0xff pattern:$0x75316420]
        %v4396 = vld.sshfl [vmem:[#allocation1 + $0x10] sm:$0xff pattern:$0x75316420]
        %v4397 = vld.sshfl [vmem:[#allocation1 + $0x18] sm:$0xff pattern:$0x75316420]
        %v4398 = vld.sshfl [vmem:[#allocation1 + $0x20] sm:$0xff pattern:$0x75316420]
        %v4399 = vld.sshfl [vmem:[#allocation1 + $0x28] sm:$0xff pattern:$0x75316420]
        %v4400 = vld.sshfl [vmem:[#allocation1 + $0x30] sm:$0xff pattern:$0x75316420]
        %v4401 = vld.sshfl [vmem:[#allocation1 + $0x38] sm:$0xff pattern:$0x75316420]
        %4402 = vst [vmem:[#allocation1] ss:$2 sm:$0xff] %v4312
        %4403 = vst [vmem:[%s4328] ss:$2 sm:$0xff] %v4314
        %4404 = vst [vmem:[%s4330] ss:$2 sm:$0xff] %v4316
        %4405 = vst [vmem:[%s4332] ss:$2 sm:$0xff] %v4318
        %v4406 = vld.sshfl [vmem:[#allocation1] sm:$0xff pattern:$0x75316420]
        %v4407 = vld.sshfl [vmem:[#allocation1 + $0x8] sm:$0xff pattern:$0x75316420]
        %v4408 = vld.sshfl [vmem:[#allocation1 + $0x10] sm:$0xff pattern:$0x75316420]
        %v4409 = vld.sshfl [vmem:[#allocation1 + $0x18] sm:$0xff pattern:$0x75316420]
        %v4410 = vld.sshfl [vmem:[#allocation1 + $0x20] sm:$0xff pattern:$0x75316420]
        %v4411 = vld.sshfl [vmem:[#allocation1 + $0x28] sm:$0xff pattern:$0x75316420]
        %v4412 = vld.sshfl [vmem:[#allocation1 + $0x30] sm:$0xff pattern:$0x75316420]
        %v4413 = vld.sshfl [vmem:[#allocation1 + $0x38] sm:$0xff pattern:$0x75316420]
        %4414 = vst [vmem:[#allocation1] ss:$2 sm:$0xff] %v4320
        %4415 = vst [vmem:[%s4328] ss:$2 sm:$0xff] %v4322
        %4416 = vst [vmem:[%s4330] ss:$2 sm:$0xff] %v4324
        %4417 = vst [vmem:[%s4332] ss:$2 sm:$0xff] %v4326
        %v4418 = vld.sshfl [vmem:[#allocation1] sm:$0xff pattern:$0x75316420]
        %v4419 = vld.sshfl [vmem:[#allocation1 + $0x8] sm:$0xff pattern:$0x75316420]
        %v4420 = vld.sshfl [vmem:[#allocation1 + $0x10] sm:$0xff pattern:$0x75316420]
        %v4421 = vld.sshfl [vmem:[#allocation1 + $0x18] sm:$0xff pattern:$0x75316420]
        %v4422 = vld.sshfl [vmem:[#allocation1 + $0x20] sm:$0xff pattern:$0x75316420]
        %v4423 = vld.sshfl [vmem:[#allocation1 + $0x28] sm:$0xff pattern:$0x75316420]
        %v4424 = vld.sshfl [vmem:[#allocation1 + $0x30] sm:$0xff pattern:$0x75316420]
        %v4425 = vld.sshfl [vmem:[#allocation1 + $0x38] sm:$0xff pattern:$0x75316420]
        %v4490 = vsel %vm4278, %v4334, -inf
        %v4491 = vrot.slane %v4490, 4
        %v4492 = vmax.f32 %v4490, %v4491
        %v4493 = vrot.slane %v4492, 2
        %v4494 = vmax.f32 %v4492, %v4493
        %v4495 = vrot.slane %v4494, 1
        %v4496 = vmax.f32 %v4494, %v4495
        %v4497 = vsel %vm4278, %v4335, -inf
        %v4498 = vrot.slane %v4497, 4
        %v4499 = vmax.f32 %v4497, %v4498
        %v4500 = vrot.slane %v4499, 2
        %v4501 = vmax.f32 %v4499, %v4500
        %v4502 = vrot.slane %v4501, 1
        %v4503 = vmax.f32 %v4501, %v4502
        %v4504 = vsel %vm4278, %v4336, -inf
        %v4505 = vrot.slane %v4504, 4
        %v4506 = vmax.f32 %v4504, %v4505
        %v4507 = vrot.slane %v4506, 2
        %v4508 = vmax.f32 %v4506, %v4507
        %v4509 = vrot.slane %v4508, 1
        %v4510 = vmax.f32 %v4508, %v4509
        %v4511 = vsel %vm4278, %v4337, -inf
        %v4512 = vrot.slane %v4511, 4
        %v4513 = vmax.f32 %v4511, %v4512
        %v4514 = vrot.slane %v4513, 2
        %v4515 = vmax.f32 %v4513, %v4514
        %v4516 = vrot.slane %v4515, 1
        %v4517 = vmax.f32 %v4515, %v4516
        %v4518 = vsel %vm4278, %v4338, -inf
        %v4519 = vrot.slane %v4518, 4
        %v4520 = vmax.f32 %v4518, %v4519
        %v4521 = vrot.slane %v4520, 2
        %v4522 = vmax.f32 %v4520, %v4521
        %v4523 = vrot.slane %v4522, 1
        %v4524 = vmax.f32 %v4522, %v4523
        %v4525 = vsel %vm4278, %v4339, -inf
        %v4526 = vrot.slane %v4525, 4
        %v4527 = vmax.f32 %v4525, %v4526
        %v4528 = vrot.slane %v4527, 2
        %v4529 = vmax.f32 %v4527, %v4528
        %v4530 = vrot.slane %v4529, 1
        %v4531 = vmax.f32 %v4529, %v4530
        %v4532 = vsel %vm4278, %v4340, -inf
        %v4533 = vrot.slane %v4532, 4
        %v4534 = vmax.f32 %v4532, %v4533
        %v4535 = vrot.slane %v4534, 2
        %v4536 = vmax.f32 %v4534, %v4535
        %v4537 = vrot.slane %v4536, 1
        %v4538 = vmax.f32 %v4536, %v4537
        %v4539 = vsel %vm4278, %v4341, -inf
        %v4540 = vrot.slane %v4539, 4
        %v4541 = vmax.f32 %v4539, %v4540
        %v4542 = vrot.slane %v4541, 2
        %v4543 = vmax.f32 %v4541, %v4542
        %v4544 = vrot.slane %v4543, 1
        %v4545 = vmax.f32 %v4543, %v4544
        %v4546 = vsel %vm4278, %v4346, -inf
        %v4547 = vrot.slane %v4546, 4
        %v4548 = vmax.f32 %v4546, %v4547
        %v4549 = vrot.slane %v4548, 2
        %v4550 = vmax.f32 %v4548, %v4549
        %v4551 = vrot.slane %v4550, 1
        %v4552 = vmax.f32 %v4550, %v4551
        %v4553 = vsel %vm4278, %v4347, -inf
        %v4554 = vrot.slane %v4553, 4
        %v4555 = vmax.f32 %v4553, %v4554
        %v4556 = vrot.slane %v4555, 2
        %v4557 = vmax.f32 %v4555, %v4556
        %v4558 = vrot.slane %v4557, 1
        %v4559 = vmax.f32 %v4557, %v4558
        %v4560 = vsel %vm4278, %v4348, -inf
        %v4561 = vrot.slane %v4560, 4
        %v4562 = vmax.f32 %v4560, %v4561
        %v4563 = vrot.slane %v4562, 2
        %v4564 = vmax.f32 %v4562, %v4563
        %v4565 = vrot.slane %v4564, 1
        %v4566 = vmax.f32 %v4564, %v4565
        %v4567 = vsel %vm4278, %v4349, -inf
        %v4568 = vrot.slane %v4567, 4
        %v4569 = vmax.f32 %v4567, %v4568
        %v4570 = vrot.slane %v4569, 2
        %v4571 = vmax.f32 %v4569, %v4570
        %v4572 = vrot.slane %v4571, 1
        %v4573 = vmax.f32 %v4571, %v4572
        %v4574 = vsel %vm4278, %v4350, -inf
        %v4575 = vrot.slane %v4574, 4
        %v4576 = vmax.f32 %v4574, %v4575
        %v4577 = vrot.slane %v4576, 2
        %v4578 = vmax.f32 %v4576, %v4577
        %v4579 = vrot.slane %v4578, 1
        %v4580 = vmax.f32 %v4578, %v4579
        %v4581 = vsel %vm4278, %v4351, -inf
        %v4582 = vrot.slane %v4581, 4
        %v4583 = vmax.f32 %v4581, %v4582
        %v4584 = vrot.slane %v4583, 2
        %v4585 = vmax.f32 %v4583, %v4584
        %v4586 = vrot.slane %v4585, 1
        %v4587 = vmax.f32 %v4585, %v4586
        %v4588 = vsel %vm4278, %v4352, -inf
        %v4589 = vrot.slane %v4588, 4
        %v4590 = vmax.f32 %v4588, %v4589
        %v4591 = vrot.slane %v4590, 2
        %v4592 = vmax.f32 %v4590, %v4591
        %v4593 = vrot.slane %v4592, 1
        %v4594 = vmax.f32 %v4592, %v4593
        %v4595 = vsel %vm4278, %v4353, -inf
        %v4596 = vrot.slane %v4595, 4
        %v4597 = vmax.f32 %v4595, %v4596
        %v4598 = vrot.slane %v4597, 2
        %v4599 = vmax.f32 %v4597, %v4598
        %v4600 = vrot.slane %v4599, 1
        %v4601 = vmax.f32 %v4599, %v4600
        %v4602 = vsel %vm4278, %v4358, -inf
        %v4603 = vrot.slane %v4602, 4
        %v4604 = vmax.f32 %v4602, %v4603
        %v4605 = vrot.slane %v4604, 2
        %v4606 = vmax.f32 %v4604, %v4605
        %v4607 = vrot.slane %v4606, 1
        %v4608 = vmax.f32 %v4606, %v4607
        %v4609 = vsel %vm4278, %v4359, -inf
        %v4610 = vrot.slane %v4609, 4
        %v4611 = vmax.f32 %v4609, %v4610
        %v4612 = vrot.slane %v4611, 2
        %v4613 = vmax.f32 %v4611, %v4612
        %v4614 = vrot.slane %v4613, 1
        %v4615 = vmax.f32 %v4613, %v4614
        %v4616 = vsel %vm4278, %v4360, -inf
        %v4617 = vrot.slane %v4616, 4
        %v4618 = vmax.f32 %v4616, %v4617
        %v4619 = vrot.slane %v4618, 2
        %v4620 = vmax.f32 %v4618, %v4619
        %v4621 = vrot.slane %v4620, 1
        %v4622 = vmax.f32 %v4620, %v4621
        %v4623 = vsel %vm4278, %v4361, -inf
        %v4624 = vrot.slane %v4623, 4
        %v4625 = vmax.f32 %v4623, %v4624
        %v4626 = vrot.slane %v4625, 2
        %v4627 = vmax.f32 %v4625, %v4626
        %v4628 = vrot.slane %v4627, 1
        %v4629 = vmax.f32 %v4627, %v4628
        %v4630 = vsel %vm4278, %v4362, -inf
        %v4631 = vrot.slane %v4630, 4
        %v4632 = vmax.f32 %v4630, %v4631
        %v4633 = vrot.slane %v4632, 2
        %v4634 = vmax.f32 %v4632, %v4633
        %v4635 = vrot.slane %v4634, 1
        %v4636 = vmax.f32 %v4634, %v4635
        %v4637 = vsel %vm4278, %v4363, -inf
        %v4638 = vrot.slane %v4637, 4
        %v4639 = vmax.f32 %v4637, %v4638
        %v4640 = vrot.slane %v4639, 2
        %v4641 = vmax.f32 %v4639, %v4640
        %v4642 = vrot.slane %v4641, 1
        %v4643 = vmax.f32 %v4641, %v4642
        %v4644 = vsel %vm4278, %v4364, -inf
        %v4645 = vrot.slane %v4644, 4
        %v4646 = vmax.f32 %v4644, %v4645
        %v4647 = vrot.slane %v4646, 2
        %v4648 = vmax.f32 %v4646, %v4647
        %v4649 = vrot.slane %v4648, 1
        %v4650 = vmax.f32 %v4648, %v4649
        %v4651 = vsel %vm4278, %v4365, -inf
        %v4652 = vrot.slane %v4651, 4
        %v4653 = vmax.f32 %v4651, %v4652
        %v4654 = vrot.slane %v4653, 2
        %v4655 = vmax.f32 %v4653, %v4654
        %v4656 = vrot.slane %v4655, 1
        %v4657 = vmax.f32 %v4655, %v4656
        %v4658 = vsel %vm4278, %v4370, -inf
        %v4659 = vrot.slane %v4658, 4
        %v4660 = vmax.f32 %v4658, %v4659
        %v4661 = vrot.slane %v4660, 2
        %v4662 = vmax.f32 %v4660, %v4661
        %v4663 = vrot.slane %v4662, 1
        %v4664 = vmax.f32 %v4662, %v4663
        %v4665 = vsel %vm4278, %v4371, -inf
        %v4666 = vrot.slane %v4665, 4
        %v4667 = vmax.f32 %v4665, %v4666
        %v4668 = vrot.slane %v4667, 2
        %v4669 = vmax.f32 %v4667, %v4668
        %v4670 = vrot.slane %v4669, 1
        %v4671 = vmax.f32 %v4669, %v4670
        %v4672 = vsel %vm4278, %v4372, -inf
        %v4673 = vrot.slane %v4672, 4
        %v4674 = vmax.f32 %v4672, %v4673
        %v4675 = vrot.slane %v4674, 2
        %v4676 = vmax.f32 %v4674, %v4675
        %v4677 = vrot.slane %v4676, 1
        %v4678 = vmax.f32 %v4676, %v4677
        %v4679 = vsel %vm4278, %v4373, -inf
        %v4680 = vrot.slane %v4679, 4
        %v4681 = vmax.f32 %v4679, %v4680
        %v4682 = vrot.slane %v4681, 2
        %v4683 = vmax.f32 %v4681, %v4682
        %v4684 = vrot.slane %v4683, 1
        %v4685 = vmax.f32 %v4683, %v4684
        %v4686 = vsel %vm4278, %v4374, -inf
        %v4687 = vrot.slane %v4686, 4
        %v4688 = vmax.f32 %v4686, %v4687
        %v4689 = vrot.slane %v4688, 2
        %v4690 = vmax.f32 %v4688, %v4689
        %v4691 = vrot.slane %v4690, 1
        %v4692 = vmax.f32 %v4690, %v4691
        %v4693 = vsel %vm4278, %v4375, -inf
        %v4694 = vrot.slane %v4693, 4
        %v4695 = vmax.f32 %v4693, %v4694
        %v4696 = vrot.slane %v4695, 2
        %v4697 = vmax.f32 %v4695, %v4696
        %v4698 = vrot.slane %v4697, 1
        %v4699 = vmax.f32 %v4697, %v4698
        %v4700 = vsel %vm4278, %v4376, -inf
        %v4701 = vrot.slane %v4700, 4
        %v4702 = vmax.f32 %v4700, %v4701
        %v4703 = vrot.slane %v4702, 2
        %v4704 = vmax.f32 %v4702, %v4703
        %v4705 = vrot.slane %v4704, 1
        %v4706 = vmax.f32 %v4704, %v4705
        %v4707 = vsel %vm4278, %v4377, -inf
        %v4708 = vrot.slane %v4707, 4
        %v4709 = vmax.f32 %v4707, %v4708
        %v4710 = vrot.slane %v4709, 2
        %v4711 = vmax.f32 %v4709, %v4710
        %v4712 = vrot.slane %v4711, 1
        %v4713 = vmax.f32 %v4711, %v4712
        %v4714 = vsel %vm4278, %v4382, -inf
        %v4715 = vrot.slane %v4714, 4
        %v4716 = vmax.f32 %v4714, %v4715
        %v4717 = vrot.slane %v4716, 2
        %v4718 = vmax.f32 %v4716, %v4717
        %v4719 = vrot.slane %v4718, 1
        %v4720 = vmax.f32 %v4718, %v4719
        %v4721 = vsel %vm4278, %v4383, -inf
        %v4722 = vrot.slane %v4721, 4
        %v4723 = vmax.f32 %v4721, %v4722
        %v4724 = vrot.slane %v4723, 2
        %v4725 = vmax.f32 %v4723, %v4724
        %v4726 = vrot.slane %v4725, 1
        %v4727 = vmax.f32 %v4725, %v4726
        %v4728 = vsel %vm4278, %v4384, -inf
        %v4729 = vrot.slane %v4728, 4
        %v4730 = vmax.f32 %v4728, %v4729
        %v4731 = vrot.slane %v4730, 2
        %v4732 = vmax.f32 %v4730, %v4731
        %v4733 = vrot.slane %v4732, 1
        %v4734 = vmax.f32 %v4732, %v4733
        %v4735 = vsel %vm4278, %v4385, -inf
        %v4736 = vrot.slane %v4735, 4
        %v4737 = vmax.f32 %v4735, %v4736
        %v4738 = vrot.slane %v4737, 2
        %v4739 = vmax.f32 %v4737, %v4738
        %v4740 = vrot.slane %v4739, 1
        %v4741 = vmax.f32 %v4739, %v4740
        %v4742 = vsel %vm4278, %v4386, -inf
        %v4743 = vrot.slane %v4742, 4
        %v4744 = vmax.f32 %v4742, %v4743
        %v4745 = vrot.slane %v4744, 2
        %v4746 = vmax.f32 %v4744, %v4745
        %v4747 = vrot.slane %v4746, 1
        %v4748 = vmax.f32 %v4746, %v4747
        %v4749 = vsel %vm4278, %v4387, -inf
        %v4750 = vrot.slane %v4749, 4
        %v4751 = vmax.f32 %v4749, %v4750
        %v4752 = vrot.slane %v4751, 2
        %v4753 = vmax.f32 %v4751, %v4752
        %v4754 = vrot.slane %v4753, 1
        %v4755 = vmax.f32 %v4753, %v4754
        %v4756 = vsel %vm4278, %v4388, -inf
        %v4757 = vrot.slane %v4756, 4
        %v4758 = vmax.f32 %v4756, %v4757
        %v4759 = vrot.slane %v4758, 2
        %v4760 = vmax.f32 %v4758, %v4759
        %v4761 = vrot.slane %v4760, 1
        %v4762 = vmax.f32 %v4760, %v4761
        %v4763 = vsel %vm4278, %v4389, -inf
        %v4764 = vrot.slane %v4763, 4
        %v4765 = vmax.f32 %v4763, %v4764
        %v4766 = vrot.slane %v4765, 2
        %v4767 = vmax.f32 %v4765, %v4766
        %v4768 = vrot.slane %v4767, 1
        %v4769 = vmax.f32 %v4767, %v4768
        %v4770 = vsel %vm4278, %v4394, -inf
        %v4771 = vrot.slane %v4770, 4
        %v4772 = vmax.f32 %v4770, %v4771
        %v4773 = vrot.slane %v4772, 2
        %v4774 = vmax.f32 %v4772, %v4773
        %v4775 = vrot.slane %v4774, 1
        %v4776 = vmax.f32 %v4774, %v4775
        %v4777 = vsel %vm4278, %v4395, -inf
        %v4778 = vrot.slane %v4777, 4
        %v4779 = vmax.f32 %v4777, %v4778
        %v4780 = vrot.slane %v4779, 2
        %v4781 = vmax.f32 %v4779, %v4780
        %v4782 = vrot.slane %v4781, 1
        %v4783 = vmax.f32 %v4781, %v4782
        %v4784 = vsel %vm4278, %v4396, -inf
        %v4785 = vrot.slane %v4784, 4
        %v4786 = vmax.f32 %v4784, %v4785
        %v4787 = vrot.slane %v4786, 2
        %v4788 = vmax.f32 %v4786, %v4787
        %v4789 = vrot.slane %v4788, 1
        %v4790 = vmax.f32 %v4788, %v4789
        %v4791 = vsel %vm4278, %v4397, -inf
        %v4792 = vrot.slane %v4791, 4
        %v4793 = vmax.f32 %v4791, %v4792
        %v4794 = vrot.slane %v4793, 2
        %v4795 = vmax.f32 %v4793, %v4794
        %v4796 = vrot.slane %v4795, 1
        %v4797 = vmax.f32 %v4795, %v4796
        %v4798 = vsel %vm4278, %v4398, -inf
        %v4799 = vrot.slane %v4798, 4
        %v4800 = vmax.f32 %v4798, %v4799
        %v4801 = vrot.slane %v4800, 2
        %v4802 = vmax.f32 %v4800, %v4801
        %v4803 = vrot.slane %v4802, 1
        %v4804 = vmax.f32 %v4802, %v4803
        %v4805 = vsel %vm4278, %v4399, -inf
        %v4806 = vrot.slane %v4805, 4
        %v4807 = vmax.f32 %v4805, %v4806
        %v4808 = vrot.slane %v4807, 2
        %v4809 = vmax.f32 %v4807, %v4808
        %v4810 = vrot.slane %v4809, 1
        %v4811 = vmax.f32 %v4809, %v4810
        %v4812 = vsel %vm4278, %v4400, -inf
        %v4813 = vrot.slane %v4812, 4
        %v4814 = vmax.f32 %v4812, %v4813
        %v4815 = vrot.slane %v4814, 2
        %v4816 = vmax.f32 %v4814, %v4815
        %v4817 = vrot.slane %v4816, 1
        %v4818 = vmax.f32 %v4816, %v4817
        %v4819 = vsel %vm4278, %v4401, -inf
        %v4820 = vrot.slane %v4819, 4
        %v4821 = vmax.f32 %v4819, %v4820
        %v4822 = vrot.slane %v4821, 2
        %v4823 = vmax.f32 %v4821, %v4822
        %v4824 = vrot.slane %v4823, 1
        %v4825 = vmax.f32 %v4823, %v4824
        %v4826 = vsel %vm4278, %v4406, -inf
        %v4827 = vrot.slane %v4826, 4
        %v4828 = vmax.f32 %v4826, %v4827
        %v4829 = vrot.slane %v4828, 2
        %v4830 = vmax.f32 %v4828, %v4829
        %v4831 = vrot.slane %v4830, 1
        %v4832 = vmax.f32 %v4830, %v4831
        %v4833 = vsel %vm4278, %v4407, -inf
        %v4834 = vrot.slane %v4833, 4
        %v4835 = vmax.f32 %v4833, %v4834
        %v4836 = vrot.slane %v4835, 2
        %v4837 = vmax.f32 %v4835, %v4836
        %v4838 = vrot.slane %v4837, 1
        %v4839 = vmax.f32 %v4837, %v4838
        %v4840 = vsel %vm4278, %v4408, -inf
        %v4841 = vrot.slane %v4840, 4
        %v4842 = vmax.f32 %v4840, %v4841
        %v4843 = vrot.slane %v4842, 2
        %v4844 = vmax.f32 %v4842, %v4843
        %v4845 = vrot.slane %v4844, 1
        %v4846 = vmax.f32 %v4844, %v4845
        %v4847 = vsel %vm4278, %v4409, -inf
        %v4848 = vrot.slane %v4847, 4
        %v4849 = vmax.f32 %v4847, %v4848
        %v4850 = vrot.slane %v4849, 2
        %v4851 = vmax.f32 %v4849, %v4850
        %v4852 = vrot.slane %v4851, 1
        %v4853 = vmax.f32 %v4851, %v4852
        %v4854 = vsel %vm4278, %v4410, -inf
        %v4855 = vrot.slane %v4854, 4
        %v4856 = vmax.f32 %v4854, %v4855
        %v4857 = vrot.slane %v4856, 2
        %v4858 = vmax.f32 %v4856, %v4857
        %v4859 = vrot.slane %v4858, 1
        %v4860 = vmax.f32 %v4858, %v4859
        %v4861 = vsel %vm4278, %v4411, -inf
        %v4862 = vrot.slane %v4861, 4
        %v4863 = vmax.f32 %v4861, %v4862
        %v4864 = vrot.slane %v4863, 2
        %v4865 = vmax.f32 %v4863, %v4864
        %v4866 = vrot.slane %v4865, 1
        %v4867 = vmax.f32 %v4865, %v4866
        %v4868 = vsel %vm4278, %v4412, -inf
        %v4869 = vrot.slane %v4868, 4
        %v4870 = vmax.f32 %v4868, %v4869
        %v4871 = vrot.slane %v4870, 2
        %v4872 = vmax.f32 %v4870, %v4871
        %v4873 = vrot.slane %v4872, 1
        %v4874 = vmax.f32 %v4872, %v4873
        %v4875 = vsel %vm4278, %v4413, -inf
        %v4876 = vrot.slane %v4875, 4
        %v4877 = vmax.f32 %v4875, %v4876
        %v4878 = vrot.slane %v4877, 2
        %v4879 = vmax.f32 %v4877, %v4878
        %v4880 = vrot.slane %v4879, 1
        %v4881 = vmax.f32 %v4879, %v4880
        %v4882 = vsel %vm4278, %v4418, -inf
        %v4883 = vrot.slane %v4882, 4
        %v4884 = vmax.f32 %v4882, %v4883
        %v4885 = vrot.slane %v4884, 2
        %v4886 = vmax.f32 %v4884, %v4885
        %v4887 = vrot.slane %v4886, 1
        %v4888 = vmax.f32 %v4886, %v4887
        %v4889 = vsel %vm4278, %v4419, -inf
        %v4890 = vrot.slane %v4889, 4
        %v4891 = vmax.f32 %v4889, %v4890
        %v4892 = vrot.slane %v4891, 2
        %v4893 = vmax.f32 %v4891, %v4892
        %v4894 = vrot.slane %v4893, 1
        %v4895 = vmax.f32 %v4893, %v4894
        %v4896 = vsel %vm4278, %v4420, -inf
        %v4897 = vrot.slane %v4896, 4
        %v4898 = vmax.f32 %v4896, %v4897
        %v4899 = vrot.slane %v4898, 2
        %v4900 = vmax.f32 %v4898, %v4899
        %v4901 = vrot.slane %v4900, 1
        %v4902 = vmax.f32 %v4900, %v4901
        %v4903 = vsel %vm4278, %v4421, -inf
        %v4904 = vrot.slane %v4903, 4
        %v4905 = vmax.f32 %v4903, %v4904
        %v4906 = vrot.slane %v4905, 2
        %v4907 = vmax.f32 %v4905, %v4906
        %v4908 = vrot.slane %v4907, 1
        %v4909 = vmax.f32 %v4907, %v4908
        %v4910 = vsel %vm4278, %v4422, -inf
        %v4911 = vrot.slane %v4910, 4
        %v4912 = vmax.f32 %v4910, %v4911
        %v4913 = vrot.slane %v4912, 2
        %v4914 = vmax.f32 %v4912, %v4913
        %v4915 = vrot.slane %v4914, 1
        %v4916 = vmax.f32 %v4914, %v4915
        %v4917 = vsel %vm4278, %v4423, -inf
        %v4918 = vrot.slane %v4917, 4
        %v4919 = vmax.f32 %v4917, %v4918
        %v4920 = vrot.slane %v4919, 2
        %v4921 = vmax.f32 %v4919, %v4920
        %v4922 = vrot.slane %v4921, 1
        %v4923 = vmax.f32 %v4921, %v4922
        %v4924 = vsel %vm4278, %v4424, -inf
        %v4925 = vrot.slane %v4924, 4
        %v4926 = vmax.f32 %v4924, %v4925
        %v4927 = vrot.slane %v4926, 2
        %v4928 = vmax.f32 %v4926, %v4927
        %v4929 = vrot.slane %v4928, 1
        %v4930 = vmax.f32 %v4928, %v4929
        %v4931 = vsel %vm4278, %v4425, -inf
        %v4932 = vrot.slane %v4931, 4
        %v4933 = vmax.f32 %v4931, %v4932
        %v4934 = vrot.slane %v4933, 2
        %v4935 = vmax.f32 %v4933, %v4934
        %v4936 = vrot.slane %v4935, 1
        %v4937 = vmax.f32 %v4935, %v4936
        %v4938 = vmul.f32 %v4496, %v4496
        %v4939 = vmul.f32 %v4503, %v4503
        %v4940 = vmul.f32 %v4510, %v4510
        %v4941 = vmul.f32 %v4517, %v4517
        %v4942 = vmul.f32 %v4524, %v4524
        %v4943 = vmul.f32 %v4531, %v4531
        %v4944 = vmul.f32 %v4538, %v4538
        %v4945 = vmul.f32 %v4545, %v4545
        %v4946 = vmul.f32 %v4552, %v4552
        %v4947 = vmul.f32 %v4559, %v4559
        %v4948 = vmul.f32 %v4566, %v4566
        %v4949 = vmul.f32 %v4573, %v4573
        %v4950 = vmul.f32 %v4580, %v4580
        %v4951 = vmul.f32 %v4587, %v4587
        %v4952 = vmul.f32 %v4594, %v4594
        %v4953 = vmul.f32 %v4601, %v4601
        %v4954 = vmul.f32 %v4608, %v4608
        %v4955 = vmul.f32 %v4615, %v4615
        %v4956 = vmul.f32 %v4622, %v4622
        %v4957 = vmul.f32 %v4629, %v4629
        %v4958 = vmul.f32 %v4636, %v4636
        %v4959 = vmul.f32 %v4643, %v4643
        %v4960 = vmul.f32 %v4650, %v4650
        %v4961 = vmul.f32 %v4657, %v4657
        %v4962 = vmul.f32 %v4664, %v4664
        %v4963 = vmul.f32 %v4671, %v4671
        %v4964 = vmul.f32 %v4678, %v4678
        %v4965 = vmul.f32 %v4685, %v4685
        %v4966 = vmul.f32 %v4692, %v4692
        %v4967 = vmul.f32 %v4699, %v4699
        %v4968 = vmul.f32 %v4706, %v4706
        %v4969 = vmul.f32 %v4713, %v4713
        %v4970 = vmul.f32 %v4720, %v4720
        %v4971 = vmul.f32 %v4727, %v4727
        %v4972 = vmul.f32 %v4734, %v4734
        %v4973 = vmul.f32 %v4741, %v4741
        %v4974 = vmul.f32 %v4748, %v4748
        %v4975 = vmul.f32 %v4755, %v4755
        %v4976 = vmul.f32 %v4762, %v4762
        %v4977 = vmul.f32 %v4769, %v4769
        %v4978 = vmul.f32 %v4776, %v4776
        %v4979 = vmul.f32 %v4783, %v4783
        %v4980 = vmul.f32 %v4790, %v4790
        %v4981 = vmul.f32 %v4797, %v4797
        %v4982 = vmul.f32 %v4804, %v4804
        %v4983 = vmul.f32 %v4811, %v4811
        %v4984 = vmul.f32 %v4818, %v4818
        %v4985 = vmul.f32 %v4825, %v4825
        %v4986 = vmul.f32 %v4832, %v4832
        %v4987 = vmul.f32 %v4839, %v4839
        %v4988 = vmul.f32 %v4846, %v4846
        %v4989 = vmul.f32 %v4853, %v4853
        %v4990 = vmul.f32 %v4860, %v4860
        %v4991 = vmul.f32 %v4867, %v4867
        %v4992 = vmul.f32 %v4874, %v4874
        %v4993 = vmul.f32 %v4881, %v4881
        %v4994 = vmul.f32 %v4888, %v4888
        %v4995 = vmul.f32 %v4895, %v4895
        %v4996 = vmul.f32 %v4902, %v4902
        %v4997 = vmul.f32 %v4909, %v4909
        %v4998 = vmul.f32 %v4916, %v4916
        %v4999 = vmul.f32 %v4923, %v4923
        %v5000 = vmul.f32 %v4930, %v4930
        %v5001 = vmul.f32 %v4937, %v4937
        %vm5066 = vcmask 1041409
        %v5067 = vsel %vm5066, %v4954, %v4938
        %vm5068 = vcmask 1042434
        %v5069 = vsel %vm5068, %v4970, %v5067
        %vm5070 = vcmask 1043459
        %v5071 = vsel %vm5070, %v4986, %v5069
        %v5072 = vsel %vm5066, %v4955, %v4939
        %v5073 = vsel %vm5068, %v4971, %v5072
        %v5074 = vsel %vm5070, %v4987, %v5073
        %v5075 = vsel %vm5066, %v4956, %v4940
        %v5076 = vsel %vm5068, %v4972, %v5075
        %v5077 = vsel %vm5070, %v4988, %v5076
        %v5078 = vsel %vm5066, %v4957, %v4941
        %v5079 = vsel %vm5068, %v4973, %v5078
        %v5080 = vsel %vm5070, %v4989, %v5079
        %v5081 = vsel %vm5066, %v4958, %v4942
        %v5082 = vsel %vm5068, %v4974, %v5081
        %v5083 = vsel %vm5070, %v4990, %v5082
        %v5084 = vsel %vm5066, %v4959, %v4943
        %v5085 = vsel %vm5068, %v4975, %v5084
        %v5086 = vsel %vm5070, %v4991, %v5085
        %v5087 = vsel %vm5066, %v4960, %v4944
        %v5088 = vsel %vm5068, %v4976, %v5087
        %v5089 = vsel %vm5070, %v4992, %v5088
        %v5090 = vsel %vm5066, %v4961, %v4945
        %v5091 = vsel %vm5068, %v4977, %v5090
        %v5092 = vsel %vm5070, %v4993, %v5091
        %v5093 = vsel %vm5066, %v4962, %v4946
        %v5094 = vsel %vm5068, %v4978, %v5093
        %v5095 = vsel %vm5070, %v4994, %v5094
        %v5096 = vsel %vm5066, %v4963, %v4947
        %v5097 = vsel %vm5068, %v4979, %v5096
        %v5098 = vsel %vm5070, %v4995, %v5097
        %v5099 = vsel %vm5066, %v4964, %v4948
        %v5100 = vsel %vm5068, %v4980, %v5099
        %v5101 = vsel %vm5070, %v4996, %v5100
        %v5102 = vsel %vm5066, %v4965, %v4949
        %v5103 = vsel %vm5068, %v4981, %v5102
        %v5104 = vsel %vm5070, %v4997, %v5103
        %v5105 = vsel %vm5066, %v4966, %v4950
        %v5106 = vsel %vm5068, %v4982, %v5105
        %v5107 = vsel %vm5070, %v4998, %v5106
        %v5108 = vsel %vm5066, %v4967, %v4951
        %v5109 = vsel %vm5068, %v4983, %v5108
        %v5110 = vsel %vm5070, %v4999, %v5109
        %v5111 = vsel %vm5066, %v4968, %v4952
        %v5112 = vsel %vm5068, %v4984, %v5111
        %v5113 = vsel %vm5070, %v5000, %v5112
        %v5114 = vsel %vm5066, %v4969, %v4953
        %v5115 = vsel %vm5068, %v4985, %v5114
        %v5116 = vsel %vm5070, %v5001, %v5115
        %v5133 = vsel %vm4278, %v5071, 0.0
        %v5134 = vsel %vm4278, %v5074, 0.0
        %v5135 = vadd.f32 %v5133, %v5134
        %v5136 = vsel %vm4278, %v5077, 0.0
        %v5137 = vadd.f32 %v5135, %v5136
        %v5138 = vsel %vm4278, %v5080, 0.0
        %v5139 = vadd.f32 %v5137, %v5138
        %v5140 = vsel %vm4278, %v5083, 0.0
        %v5141 = vadd.f32 %v5139, %v5140
        %v5142 = vsel %vm4278, %v5086, 0.0
        %v5143 = vadd.f32 %v5141, %v5142
        %v5144 = vsel %vm4278, %v5089, 0.0
        %v5145 = vadd.f32 %v5143, %v5144
        %v5146 = vsel %vm4278, %v5092, 0.0
        %v5147 = vadd.f32 %v5145, %v5146
        %v5148 = vsel %vm4278, %v5095, 0.0
        %v5149 = vadd.f32 %v5147, %v5148
        %v5150 = vsel %vm4278, %v5098, 0.0
        %v5151 = vadd.f32 %v5149, %v5150
        %v5152 = vsel %vm4278, %v5101, 0.0
        %v5153 = vadd.f32 %v5151, %v5152
        %v5154 = vsel %vm4278, %v5104, 0.0
        %v5155 = vadd.f32 %v5153, %v5154
        %v5156 = vsel %vm4278, %v5107, 0.0
        %v5157 = vadd.f32 %v5155, %v5156
        %v5158 = vsel %vm4278, %v5110, 0.0
        %v5159 = vadd.f32 %v5157, %v5158
        %v5160 = vsel %vm4278, %v5113, 0.0
        %v5161 = vadd.f32 %v5159, %v5160
        %v5162 = vsel %vm4278, %v5116, 0.0
        %v5163 = vadd.f32 %v5161, %v5162
        %5164 = vadd.xlane.f32.xlu0 %v5163
        %v5165 = vpop.xlane.xlu0 %5164
        %v5166 = vmax.f32 %v5165, 1e-12
        %v5167 = vrsqrt.pop %v5166
        %v5168 = vmul.f32 %v5167, %v5166
        %v5169 = vmul.f32 %v5168, %v5167
        %v5170 = vmul.f32 0.5, %v5169
        %v5171 = vsub.f32 1.5, %v5170
        %v5172 = vmul.f32 %v5167, %v5171
        %vm5173 = vweird.f32 %v5166
        %vm5174 = vweird.f32 %v5167
        %vm5175 = vmor %vm5173, %vm5174
        %v5176 = vsel %vm5175, %v5167, %v5172
        %v5178 = vrot.slane %v5176, 1
        %v5179 = vrot.slane %v5176, 2
        %v5180 = vrot.slane %v5176, 3
        %v5185 = vmul.f32 %v4496, %v5176
        %v5186 = vmul.f32 %v4503, %v5176
        %v5187 = vmul.f32 %v4510, %v5176
        %v5188 = vmul.f32 %v4517, %v5176
        %v5189 = vmul.f32 %v4524, %v5176
        %v5190 = vmul.f32 %v4531, %v5176
        %v5191 = vmul.f32 %v4538, %v5176
        %v5192 = vmul.f32 %v4545, %v5176
        %v5193 = vmul.f32 %v4552, %v5176
        %v5194 = vmul.f32 %v4559, %v5176
        %v5195 = vmul.f32 %v4566, %v5176
        %v5196 = vmul.f32 %v4573, %v5176
        %v5197 = vmul.f32 %v4580, %v5176
        %v5198 = vmul.f32 %v4587, %v5176
        %v5199 = vmul.f32 %v4594, %v5176
        %v5200 = vmul.f32 %v4601, %v5176
        %v5201 = vmul.f32 %v4608, %v5178
        %v5202 = vmul.f32 %v4615, %v5178
        %v5203 = vmul.f32 %v4622, %v5178
        %v5204 = vmul.f32 %v4629, %v5178
        %v5205 = vmul.f32 %v4636, %v5178
        %v5206 = vmul.f32 %v4643, %v5178
        %v5207 = vmul.f32 %v4650, %v5178
        %v5208 = vmul.f32 %v4657, %v5178
        %v5209 = vmul.f32 %v4664, %v5178
        %v5210 = vmul.f32 %v4671, %v5178
        %v5211 = vmul.f32 %v4678, %v5178
        %v5212 = vmul.f32 %v4685, %v5178
        %v5213 = vmul.f32 %v4692, %v5178
        %v5214 = vmul.f32 %v4699, %v5178
        %v5215 = vmul.f32 %v4706, %v5178
        %v5216 = vmul.f32 %v4713, %v5178
        %v5217 = vmul.f32 %v4720, %v5179
        %v5218 = vmul.f32 %v4727, %v5179
        %v5219 = vmul.f32 %v4734, %v5179
        %v5220 = vmul.f32 %v4741, %v5179
        %v5221 = vmul.f32 %v4748, %v5179
        %v5222 = vmul.f32 %v4755, %v5179
        %v5223 = vmul.f32 %v4762, %v5179
        %v5224 = vmul.f32 %v4769, %v5179
        %v5225 = vmul.f32 %v4776, %v5179
        %v5226 = vmul.f32 %v4783, %v5179
        %v5227 = vmul.f32 %v4790, %v5179
        %v5228 = vmul.f32 %v4797, %v5179
        %v5229 = vmul.f32 %v4804, %v5179
        %v5230 = vmul.f32 %v4811, %v5179
        %v5231 = vmul.f32 %v4818, %v5179
        %v5232 = vmul.f32 %v4825, %v5179
        %v5233 = vmul.f32 %v4832, %v5180
        %v5234 = vmul.f32 %v4839, %v5180
        %v5235 = vmul.f32 %v4846, %v5180
        %v5236 = vmul.f32 %v4853, %v5180
        %v5237 = vmul.f32 %v4860, %v5180
        %v5238 = vmul.f32 %v4867, %v5180
        %v5239 = vmul.f32 %v4874, %v5180
        %v5240 = vmul.f32 %v4881, %v5180
        %v5241 = vmul.f32 %v4888, %v5180
        %v5242 = vmul.f32 %v4895, %v5180
        %v5243 = vmul.f32 %v4902, %v5180
        %v5244 = vmul.f32 %v4909, %v5180
        %v5245 = vmul.f32 %v4916, %v5180
        %v5246 = vmul.f32 %v4923, %v5180
        %v5247 = vmul.f32 %v4930, %v5180
        %v5248 = vmul.f32 %v4937, %v5180
        %v5313 = vrot.slane %v5186, 4
        %v5314 = vrot.slane %v5188, 4
        %v5315 = vrot.slane %v5190, 4
        %v5316 = vrot.slane %v5192, 4
        %v5317 = vrot.slane %v5194, 4
        %v5318 = vrot.slane %v5196, 4
        %v5319 = vrot.slane %v5198, 4
        %v5320 = vrot.slane %v5200, 4
        %v5321 = vrot.slane %v5202, 4
        %v5322 = vrot.slane %v5204, 4
        %v5323 = vrot.slane %v5206, 4
        %v5324 = vrot.slane %v5208, 4
        %v5325 = vrot.slane %v5210, 4
        %v5326 = vrot.slane %v5212, 4
        %v5327 = vrot.slane %v5214, 4
        %v5328 = vrot.slane %v5216, 4
        %v5329 = vrot.slane %v5218, 4
        %v5330 = vrot.slane %v5220, 4
        %v5331 = vrot.slane %v5222, 4
        %v5332 = vrot.slane %v5224, 4
        %v5333 = vrot.slane %v5226, 4
        %v5334 = vrot.slane %v5228, 4
        %v5335 = vrot.slane %v5230, 4
        %v5336 = vrot.slane %v5232, 4
        %v5337 = vrot.slane %v5234, 4
        %v5338 = vrot.slane %v5236, 4
        %v5339 = vrot.slane %v5238, 4
        %v5340 = vrot.slane %v5240, 4
        %v5341 = vrot.slane %v5242, 4
        %v5342 = vrot.slane %v5244, 4
        %v5343 = vrot.slane %v5246, 4
        %v5344 = vrot.slane %v5248, 4
        %v5345 = vsel %vm4278, %v5185, %v5313
        %v5346 = vsel %vm4278, %v5187, %v5314
        %v5347 = vsel %vm4278, %v5189, %v5315
        %v5348 = vsel %vm4278, %v5191, %v5316
        %v5349 = vsel %vm4278, %v5193, %v5317
        %v5350 = vsel %vm4278, %v5195, %v5318
        %v5351 = vsel %vm4278, %v5197, %v5319
        %v5352 = vsel %vm4278, %v5199, %v5320
        %v5353 = vsel %vm4278, %v5201, %v5321
        %v5354 = vsel %vm4278, %v5203, %v5322
        %v5355 = vsel %vm4278, %v5205, %v5323
        %v5356 = vsel %vm4278, %v5207, %v5324
        %v5357 = vsel %vm4278, %v5209, %v5325
        %v5358 = vsel %vm4278, %v5211, %v5326
        %v5359 = vsel %vm4278, %v5213, %v5327
        %v5360 = vsel %vm4278, %v5215, %v5328
        %v5361 = vsel %vm4278, %v5217, %v5329
        %v5362 = vsel %vm4278, %v5219, %v5330
        %v5363 = vsel %vm4278, %v5221, %v5331
        %v5364 = vsel %vm4278, %v5223, %v5332
        %v5365 = vsel %vm4278, %v5225, %v5333
        %v5366 = vsel %vm4278, %v5227, %v5334
        %v5367 = vsel %vm4278, %v5229, %v5335
        %v5368 = vsel %vm4278, %v5231, %v5336
        %v5369 = vsel %vm4278, %v5233, %v5337
        %v5370 = vsel %vm4278, %v5235, %v5338
        %v5371 = vsel %vm4278, %v5237, %v5339
        %v5372 = vsel %vm4278, %v5239, %v5340
        %v5373 = vsel %vm4278, %v5241, %v5341
        %v5374 = vsel %vm4278, %v5243, %v5342
        %v5375 = vsel %vm4278, %v5245, %v5343
        %v5376 = vsel %vm4278, %v5247, %v5344
        %vm5377 = vcmask 1044484
        %v5378 = vrot.slane %v5353, 7
        %v5379 = vsel %vm5066, %v5378, %v5345
        %vm5380 = vcmask 1045509
        %v5381 = vsel %vm5380, %v5378, %v5379
        %v5382 = vrot.slane %v5361, 6
        %v5383 = vsel %vm5068, %v5382, %v5381
        %vm5384 = vcmask 1046534
        %v5385 = vsel %vm5384, %v5382, %v5383
        %v5386 = vrot.slane %v5369, 5
        %v5387 = vsel %vm5070, %v5386, %v5385
        %vm5388 = vcmask 1047559
        %v5389 = vsel %vm5388, %v5386, %v5387
        %v5390 = vrot.slane %v5354, 7
        %v5391 = vsel %vm5066, %v5390, %v5346
        %v5392 = vsel %vm5380, %v5390, %v5391
        %v5393 = vrot.slane %v5362, 6
        %v5394 = vsel %vm5068, %v5393, %v5392
        %v5395 = vsel %vm5384, %v5393, %v5394
        %v5396 = vrot.slane %v5370, 5
        %v5397 = vsel %vm5070, %v5396, %v5395
        %v5398 = vsel %vm5388, %v5396, %v5397
        %v5399 = vrot.slane %v5355, 7
        %v5400 = vsel %vm5066, %v5399, %v5347
        %v5401 = vsel %vm5380, %v5399, %v5400
        %v5402 = vrot.slane %v5363, 6
        %v5403 = vsel %vm5068, %v5402, %v5401
        %v5404 = vsel %vm5384, %v5402, %v5403
        %v5405 = vrot.slane %v5371, 5
        %v5406 = vsel %vm5070, %v5405, %v5404
        %v5407 = vsel %vm5388, %v5405, %v5406
        %v5408 = vrot.slane %v5356, 7
        %v5409 = vsel %vm5066, %v5408, %v5348
        %v5410 = vsel %vm5380, %v5408, %v5409
        %v5411 = vrot.slane %v5364, 6
        %v5412 = vsel %vm5068, %v5411, %v5410
        %v5413 = vsel %vm5384, %v5411, %v5412
        %v5414 = vrot.slane %v5372, 5
        %v5415 = vsel %vm5070, %v5414, %v5413
        %v5416 = vsel %vm5388, %v5414, %v5415
        %v5417 = vrot.slane %v5357, 7
        %v5418 = vsel %vm5066, %v5417, %v5349
        %v5419 = vsel %vm5380, %v5417, %v5418
        %v5420 = vrot.slane %v5365, 6
        %v5421 = vsel %vm5068, %v5420, %v5419
        %v5422 = vsel %vm5384, %v5420, %v5421
        %v5423 = vrot.slane %v5373, 5
        %v5424 = vsel %vm5070, %v5423, %v5422
        %v5425 = vsel %vm5388, %v5423, %v5424
        %v5426 = vrot.slane %v5358, 7
        %v5427 = vsel %vm5066, %v5426, %v5350
        %v5428 = vsel %vm5380, %v5426, %v5427
        %v5429 = vrot.slane %v5366, 6
        %v5430 = vsel %vm5068, %v5429, %v5428
        %v5431 = vsel %vm5384, %v5429, %v5430
        %v5432 = vrot.slane %v5374, 5
        %v5433 = vsel %vm5070, %v5432, %v5431
        %v5434 = vsel %vm5388, %v5432, %v5433
        %v5435 = vrot.slane %v5359, 7
        %v5436 = vsel %vm5066, %v5435, %v5351
        %v5437 = vsel %vm5380, %v5435, %v5436
        %v5438 = vrot.slane %v5367, 6
        %v5439 = vsel %vm5068, %v5438, %v5437
        %v5440 = vsel %vm5384, %v5438, %v5439
        %v5441 = vrot.slane %v5375, 5
        %v5442 = vsel %vm5070, %v5441, %v5440
        %v5443 = vsel %vm5388, %v5441, %v5442
        %v5444 = vrot.slane %v5360, 7
        %v5445 = vsel %vm5066, %v5444, %v5352
        %v5446 = vsel %vm5380, %v5444, %v5445
        %v5447 = vrot.slane %v5368, 6
        %v5448 = vsel %vm5068, %v5447, %v5446
        %v5449 = vsel %vm5384, %v5447, %v5448
        %v5450 = vrot.slane %v5376, 5
        %v5451 = vsel %vm5070, %v5450, %v5449
        %v5452 = vsel %vm5388, %v5450, %v5451
        %5461 = vst [vmem:[%s192] sm:$0xff] %v5389
        %5462 = vst [vmem:[%s192 + $0x8] sm:$0xff] %v5398
        %5463 = vst [vmem:[%s192 + $0x10] sm:$0xff] %v5407
        %5464 = vst [vmem:[%s192 + $0x18] sm:$0xff] %v5416
        %5465 = vst [vmem:[%s192 + $0x20] sm:$0xff] %v5425
        %5466 = vst [vmem:[%s192 + $0x28] sm:$0xff] %v5434
        %5467 = vst [vmem:[%s192 + $0x30] sm:$0xff] %v5443
        %5468 = vst [vmem:[%s192 + $0x38] sm:$0xff] %v5452
        %p5469 = scmp.eq.s32.totalorder %s23, 0
        // Predicated region
        $region29: #{mask_aligned_reid_forward.3} parent=27 // pred_check
          %p5470 = pneg %p5469
        $region30: #{mask_aligned_reid_forward.3} parent=27 // pred_check_branch
          %5472 = sbr.rel (%p5470) target = $region32
        $region31: #{mask_aligned_reid_forward.3} parent=27 // pred_region
          %5473 = vst [vmem:[%s205] sm:$0xff] 0.0
          %5474 = vst [vmem:[%s205 + $0x8] sm:$0xff] 0.0
        $region32: #{mask_aligned_reid_forward.3} parent=27 // pred_fallthru
          _
        %v5475 = vld [vmem:[%s205] sm:$0xff]
        %v5476 = vld [vmem:[%s205 + $0x8] sm:$0xff]
        %v5477 = vadd.f32 %v4198, %v4214
        %v5478 = vrot.slane %v5477, 4
        %v5479 = vadd.f32 %v5477, %v5478
        %v5480 = vrot.slane %v5479, 2
        %v5481 = vadd.f32 %v5479, %v5480
        %v5482 = vrot.slane %v5481, 1
        %v5483 = vadd.f32 %v5481, %v5482
        %v5484 = vadd.f32 %v4199, %v4215
        %v5485 = vrot.slane %v5484, 4
        %v5486 = vadd.f32 %v5484, %v5485
        %v5487 = vrot.slane %v5486, 2
        %v5488 = vadd.f32 %v5486, %v5487
        %v5489 = vrot.slane %v5488, 1
        %v5490 = vadd.f32 %v5488, %v5489
        %v5491 = vadd.f32 %v4200, %v4216
        %v5492 = vrot.slane %v5491, 4
        %v5493 = vadd.f32 %v5491, %v5492
        %v5494 = vrot.slane %v5493, 2
        %v5495 = vadd.f32 %v5493, %v5494
        %v5496 = vrot.slane %v5495, 1
        %v5497 = vadd.f32 %v5495, %v5496
        %v5498 = vadd.f32 %v4201, %v4217
        %v5499 = vrot.slane %v5498, 4
        %v5500 = vadd.f32 %v5498, %v5499
        %v5501 = vrot.slane %v5500, 2
        %v5502 = vadd.f32 %v5500, %v5501
        %v5503 = vrot.slane %v5502, 1
        %v5504 = vadd.f32 %v5502, %v5503
        %v5505 = vadd.f32 %v4202, %v4218
        %v5506 = vrot.slane %v5505, 4
        %v5507 = vadd.f32 %v5505, %v5506
        %v5508 = vrot.slane %v5507, 2
        %v5509 = vadd.f32 %v5507, %v5508
        %v5510 = vrot.slane %v5509, 1
        %v5511 = vadd.f32 %v5509, %v5510
        %v5512 = vadd.f32 %v4203, %v4219
        %v5513 = vrot.slane %v5512, 4
        %v5514 = vadd.f32 %v5512, %v5513
        %v5515 = vrot.slane %v5514, 2
        %v5516 = vadd.f32 %v5514, %v5515
        %v5517 = vrot.slane %v5516, 1
        %v5518 = vadd.f32 %v5516, %v5517
        %v5519 = vadd.f32 %v4204, %v4220
        %v5520 = vrot.slane %v5519, 4
        %v5521 = vadd.f32 %v5519, %v5520
        %v5522 = vrot.slane %v5521, 2
        %v5523 = vadd.f32 %v5521, %v5522
        %v5524 = vrot.slane %v5523, 1
        %v5525 = vadd.f32 %v5523, %v5524
        %v5526 = vadd.f32 %v4205, %v4221
        %v5527 = vrot.slane %v5526, 4
        %v5528 = vadd.f32 %v5526, %v5527
        %v5529 = vrot.slane %v5528, 2
        %v5530 = vadd.f32 %v5528, %v5529
        %v5531 = vrot.slane %v5530, 1
        %v5532 = vadd.f32 %v5530, %v5531
        %v5533 = vadd.f32 %v4206, %v4222
        %v5534 = vrot.slane %v5533, 4
        %v5535 = vadd.f32 %v5533, %v5534
        %v5536 = vrot.slane %v5535, 2
        %v5537 = vadd.f32 %v5535, %v5536
        %v5538 = vrot.slane %v5537, 1
        %v5539 = vadd.f32 %v5537, %v5538
        %v5540 = vadd.f32 %v4207, %v4223
        %v5541 = vrot.slane %v5540, 4
        %v5542 = vadd.f32 %v5540, %v5541
        %v5543 = vrot.slane %v5542, 2
        %v5544 = vadd.f32 %v5542, %v5543
        %v5545 = vrot.slane %v5544, 1
        %v5546 = vadd.f32 %v5544, %v5545
        %v5547 = vadd.f32 %v4208, %v4224
        %v5548 = vrot.slane %v5547, 4
        %v5549 = vadd.f32 %v5547, %v5548
        %v5550 = vrot.slane %v5549, 2
        %v5551 = vadd.f32 %v5549, %v5550
        %v5552 = vrot.slane %v5551, 1
        %v5553 = vadd.f32 %v5551, %v5552
        %v5554 = vadd.f32 %v4209, %v4225
        %v5555 = vrot.slane %v5554, 4
        %v5556 = vadd.f32 %v5554, %v5555
        %v5557 = vrot.slane %v5556, 2
        %v5558 = vadd.f32 %v5556, %v5557
        %v5559 = vrot.slane %v5558, 1
        %v5560 = vadd.f32 %v5558, %v5559
        %v5561 = vadd.f32 %v4210, %v4226
        %v5562 = vrot.slane %v5561, 4
        %v5563 = vadd.f32 %v5561, %v5562
        %v5564 = vrot.slane %v5563, 2
        %v5565 = vadd.f32 %v5563, %v5564
        %v5566 = vrot.slane %v5565, 1
        %v5567 = vadd.f32 %v5565, %v5566
        %v5568 = vadd.f32 %v4211, %v4227
        %v5569 = vrot.slane %v5568, 4
        %v5570 = vadd.f32 %v5568, %v5569
        %v5571 = vrot.slane %v5570, 2
        %v5572 = vadd.f32 %v5570, %v5571
        %v5573 = vrot.slane %v5572, 1
        %v5574 = vadd.f32 %v5572, %v5573
        %v5575 = vadd.f32 %v4212, %v4228
        %v5576 = vrot.slane %v5575, 4
        %v5577 = vadd.f32 %v5575, %v5576
        %v5578 = vrot.slane %v5577, 2
        %v5579 = vadd.f32 %v5577, %v5578
        %v5580 = vrot.slane %v5579, 1
        %v5581 = vadd.f32 %v5579, %v5580
        %v5582 = vadd.f32 %v4213, %v4229
        %v5583 = vrot.slane %v5582, 4
        %v5584 = vadd.f32 %v5582, %v5583
        %v5585 = vrot.slane %v5584, 2
        %v5586 = vadd.f32 %v5584, %v5585
        %v5587 = vrot.slane %v5586, 1
        %v5588 = vadd.f32 %v5586, %v5587
        %v5605 = vrot.slane %v5490, 7
        %v5606 = vrot.slane %v5497, 6
        %v5607 = vrot.slane %v5504, 5
        %v5608 = vrot.slane %v5511, 4
        %v5609 = vrot.slane %v5518, 3
        %v5610 = vrot.slane %v5525, 2
        %v5611 = vrot.slane %v5532, 1
        %v5612 = vrot.slane %v5546, 7
        %v5613 = vrot.slane %v5553, 6
        %v5614 = vrot.slane %v5560, 5
        %v5615 = vrot.slane %v5567, 4
        %v5616 = vrot.slane %v5574, 3
        %v5617 = vrot.slane %v5581, 2
        %v5618 = vrot.slane %v5588, 1
        %vm5619 = vcmask 1040384
        %v5620 = vsel %vm5619, %v5483, %v5605
        %v5621 = vsel %vm5068, %v5606, %v5607
        %vm5622 = vcmask 1041408
        %v5623 = vsel %vm5622, %v5620, %v5621
        %v5624 = vsel %vm5377, %v5608, %v5609
        %v5625 = vsel %vm5384, %v5610, %v5611
        %vm5626 = vcmask 1045508
        %v5627 = vsel %vm5626, %v5624, %v5625
        %v5628 = vsel %vm4278, %v5623, %v5627
        %v5629 = vsel %vm5619, %v5539, %v5612
        %v5630 = vsel %vm5068, %v5613, %v5614
        %v5631 = vsel %vm5622, %v5629, %v5630
        %v5632 = vsel %vm5377, %v5615, %v5616
        %v5633 = vsel %vm5384, %v5617, %v5618
        %v5634 = vsel %vm5626, %v5632, %v5633
        %v5635 = vsel %vm4278, %v5631, %v5634
        %v5638 = vadd.f32 %v5475, %v5628
        %v5639 = vadd.f32 %v5476, %v5635
        %5640 = vst [vmem:[%s205] sm:$0xff] %v5638
        %5641 = vst [vmem:[%s205 + $0x8] sm:$0xff] %v5639
        // Predicated region
        $region33: #{mask_aligned_reid_forward.3} parent=27 // pred_check
          %p5642 = pneg %p5469
        $region34: #{mask_aligned_reid_forward.3} parent=27 // pred_check_branch
          %5644 = sbr.rel (%p5642) target = $region36
        $region35: #{mask_aligned_reid_forward.3} parent=27 // pred_region
          %v5645 = vld [vmem:[%s205] sm:$0xff]
          %v5646 = vld [vmem:[%s205 + $0x8] sm:$0xff]
          %v5647 = vmul.f32 %v5645, 0.0625
          %v5648 = vmul.f32 %v5646, 0.0625
          %5649 = vst [vmem:[%s205] sm:$0xff] %v5647
          %5650 = vst [vmem:[%s205 + $0x8] sm:$0xff] %v5648
        $region36: #{mask_aligned_reid_forward.3} parent=27 // pred_fallthru
          _
        %p5651 = scmp.lt.s32.totalorder %s22, 1
        %s5652 = scalar_select %p5651, %s22, 1
        %s5653 = smul.addr %s5652, 16
        %s5654 = scalar_lea.vmem %s2, %s5653
        %s5655 = sand.u32 %s115, 1
        %s5656 = scalar_lea.sflag [#allocation3], %s5655
        %s5657 = sand.u32 %s115, 1
        %s5658 = smul.addr %s5657, 64
        %s5659 = scalar_lea.vmem [#allocation2], %s5658
        // Predicated region
        $region37: #{mask_aligned_reid_forward.3} parent=27 // pred_check
          %p5660 = pneg %p97
        $region38: #{mask_aligned_reid_forward.3} parent=27 // pred_check_branch
          %5662 = sbr.rel (%p5660) target = $region40
        $region39: #{mask_aligned_reid_forward.3} parent=27 // pred_region
          _
        $region40: #{mask_aligned_reid_forward.3} parent=27 // pred_fallthru
          _
        // Predicated region
        $region41: #{mask_aligned_reid_forward.3} parent=27 // pred_check
          %p5663 = pneg %p125
        $region42: #{mask_aligned_reid_forward.3} parent=27 // pred_check_branch
          %5665 = sbr.rel (%p5663) target = $region44
        $region43: #{mask_aligned_reid_forward.3} parent=27 // pred_region
          %5667 = vsyncadd %s5656, 0
          %s5668 = smul.addr %s23, 16
          %s5669 = smul.addr %s22, 16
          %s5670 = sadd.s32 %s5668, %s5669
          %s5671 = smul.addr %s5670, 4
          %s5672 = scalar_lea.hbm %s3, %s5671
          %s5674 = sshll.u32 %s5659, 4
          %s5675 = int_to_ptr.vmem [resolvable:$true] %s5674
          %s5676 = sshll.u32 %s5672, 4
          %s5677 = int_to_ptr.hbm [resolvable:$true] %s5676
          %5679 = dma.vmem_to_hbm [thread:$0]  %s5675, 1024, %s5677, %s5656
        $region44: #{mask_aligned_reid_forward.3} parent=27 // pred_fallthru
          _
      $region28: #{mask_aligned_reid_forward.3} parent=5 // pred_fallthru
        _
      %p5680 = scmp.le.s32.totalorder 2, %s13
      // Predicated region
      $region45: #{mask_aligned_reid_forward.3} parent=5 // pred_check
        %p5681 = pneg %p5680
      $region46: #{mask_aligned_reid_forward.3} parent=5 // pred_check_branch
        %5683 = sbr.rel (%p5681) target = $region48
      $region47: #{mask_aligned_reid_forward.3} parent=5 // pred_region
        %s5684 = ssub.s32 %s13, 2
        // Predicated region
        $region49: #{mask_aligned_reid_forward.3} parent=47 // pred_check
          %p5685 = pneg %p103
        $region50: #{mask_aligned_reid_forward.3} parent=47 // pred_check_branch
          %5687 = sbr.rel (%p5685) target = $region52
        $region51: #{mask_aligned_reid_forward.3} parent=47 // pred_region
          %p5688 = scmp.lt.s32.totalorder %s24, 1
          %s5689 = scalar_select %p5688, %s24, 1
          %s5690 = smul.addr %s5689, 16
          %s5691 = scalar_lea.vmem %s2, %s5690
        $region52: #{mask_aligned_reid_forward.3} parent=47 // pred_fallthru
          _
        // Predicated region
        $region53: #{mask_aligned_reid_forward.3} parent=47 // pred_check
          %p5692 = pneg %p131
        $region54: #{mask_aligned_reid_forward.3} parent=47 // pred_check_branch
          %5694 = sbr.rel (%p5692) target = $region56
        $region55: #{mask_aligned_reid_forward.3} parent=47 // pred_region
          %s5695 = sand.u32 %s116, 1
          %s5696 = scalar_lea.sflag [#allocation3], %s5695
          %s5697 = sand.u32 %s116, 1
          %s5698 = smul.addr %s5697, 64
          %s5699 = scalar_lea.vmem [#allocation2], %s5698
          %5701 = dma.done %s5696, 1024
        $region56: #{mask_aligned_reid_forward.3} parent=47 // pred_fallthru
          _
      $region48: #{mask_aligned_reid_forward.3} parent=5 // pred_fallthru
        _
    $region6: #{mask_aligned_reid_forward.3} parent=1 // loop_footer
      %s17 = sadd.s32 1, %s13
    $region7: #{mask_aligned_reid_forward.3} parent=1 // loop_footer_branch
      %12 = sbr.rel target = $region3
    $region8: #{mask_aligned_reid_forward.3} parent=1 // loop_exit
      _
    %5702 = vsyncpa [#allocation3], 1
    %s5703 = scalar_lea.sflag [#allocation3], 1
    %5704 = vsyncpa %s5703, 1

</llo_original>
